<compile_context>
chip_gen: v7x
topology: tpu7x:2x2x1
jax: 0.10.0
libtpu: 0.0.40
codegen_flags: <defaults>
</compile_context>

<pallas_src>
import functools

import jax
import jax.numpy as jnp
from jax.experimental import pallas as pl
from jax.experimental.pallas import tpu as pltpu


# ----------------------------------------------------------------------------
# Hardware-aware helpers
# ----------------------------------------------------------------------------
def _pick_tile(n, cap, ok):
    """Largest divisor of n that is <= cap and satisfies ok(); falls back to n."""
    for t in range(min(n, cap), 0, -1):
        if n % t == 0 and ok(t):
            return t
    return n


def _tpu_vmem_bytes(default=64 * 1024 * 1024):
    """Physical per-core VMEM; conservative 64 MiB (v7x-like) if unknown."""
    try:
        cap = getattr(pltpu.get_tpu_info(), "vmem_capacity_bytes", None)
        if cap:
            return int(cap)
    except Exception:
        pass
    return default


def _elementwise_dtype():
    """bf16 element-wise stages only where the VPU has bf16 ALUs (v6e / v7x)."""
    try:
        kind = jax.devices()[0].device_kind.lower()
    except Exception:
        kind = ""
    return jnp.bfloat16 if ("v6" in kind or "v7" in kind) else jnp.float32


# ----------------------------------------------------------------------------
# Kernel 1: fused kNN — streaming Gram-matrix scores + running top-k in VMEM.
#   score[b, i, j] = 0.5*||p_j||^2 - <p_i, p_j>
# has the same per-row ordering as ||p_i - p_j||^2, so a running k-smallest
# over j-blocks yields the k nearest neighbours without ever writing the
# (B, N, N) distance matrix to HBM.
# ----------------------------------------------------------------------------
def _knn_kernel(pi_ref, pj_ref, hn_ref, idx_ref, vals_sc, idxf_sc, *, k, tj):
    j = pl.program_id(2)
    INF = float("inf")
    BIG = 1e9                       # index sentinel (indices carried as f32)

    @pl.when(j == 0)
    def _():
        vals_sc[...] = jnp.full_like(vals_sc, INF)
        idxf_sc[...] = jnp.full_like(idxf_sc, BIG)

    pi = pi_ref[0]                   # (ti, Dp) f32
    pj = pj_ref[0]                   # (tj, Dp) f32
    hn = hn_ref[0]                   # (1, tj)  f32 : 0.5*||p_j||^2

    g = jax.lax.dot_general(pi, pj, (((1,), (1,)), ((), ())),
                            preferred_element_type=jnp.float32)     # (ti, tj)
    scores = hn - g
    col = (jax.lax.broadcasted_iota(jnp.int32, scores.shape, 1)
           + j * tj).astype(jnp.float32)                            # global idx

    run_v = vals_sc[...]             # running top-k from previous j-blocks
    run_i = idxf_sc[...]

    # k-step selection over {running top-k} U {this block}.  Indices are kept
    # as exact-integer f32 so every cross-lane reduce is an f32 min; ties break
    # toward the smallest index, and running/block index ranges are disjoint.
    for s in range(k):
        m = jnp.minimum(jnp.min(run_v, axis=1, keepdims=True),
                        jnp.min(scores, axis=1, keepdims=True))
        sel = jnp.minimum(
            jnp.min(jnp.where(run_v == m, run_i, BIG), axis=1, keepdims=True),
            jnp.min(jnp.where(scores == m, col, BIG), axis=1, keepdims=True))
        vals_sc[:, s:s + 1] = m
        idxf_sc[:, s:s + 1] = sel
        run_v = jnp.where((run_v == m) & (run_i == sel), INF, run_v)
        scores = jnp.where((scores == m) & (col == sel), INF, scores)

    @pl.when(j == pl.num_programs(2) - 1)
    def _():
        idx_ref[0] = idxf_sc[...].astype(jnp.int32)


def knn_indices(pos, k, ti=None, tj=None):
    """k-nearest-neighbour indices (self included), returned as (B, N, k) int32."""
    B, N, D = pos.shape
    assert N >= k, "need at least k points"
    assert N < 2 ** 24, "indices are carried as exact-integer f32 in-kernel"
    Dp = max(8, -(-D // 8) * 8)                 # pad coord dim to 8 sublanes
    pos_p = jnp.pad(pos.astype(jnp.float32), ((0, 0), (0, 0), (0, Dp - D)))
    half_sq = 0.5 * jnp.sum(pos_p * pos_p, axis=-1)[:, None, :]     # (B, 1, N)

    if ti is None:
        ti = _pick_tile(N, 256, lambda t: t % 8 == 0 or t == N)
    if tj is None:
        tj = _pick_tile(N, 512, lambda t: t % 128 == 0 or t == N)
    assert N % ti == 0 and N % tj == 0, "N must be divisible by the kNN tiles"

    kernel = functools.partial(_knn_kernel, k=k, tj=tj)
    return pl.pallas_call(
        kernel,
        out_shape=jax.ShapeDtypeStruct((B, N, k), jnp.int32),
        grid=(B, N // ti, N // tj),
        in_specs=[pl.BlockSpec((1, ti, Dp), lambda b, i, j: (b, i, 0)),
                  pl.BlockSpec((1, tj, Dp), lambda b, i, j: (b, j, 0)),
                  pl.BlockSpec((1, 1, tj), lambda b, i, j: (b, 0, j))],
        out_specs=pl.BlockSpec((1, ti, k), lambda b, i, j: (b, i, 0)),
        scratch_shapes=[pltpu.VMEM((ti, k), jnp.float32),
                        pltpu.VMEM((ti, k), jnp.float32)],
        compiler_params=pltpu.CompilerParams(
            dimension_semantics=("parallel", "parallel", "arbitrary")),
    )(pos_p, pos_p, half_sq)


# ----------------------------------------------------------------------------
# Kernel 2: fused PointNet-style MLP / max-pool pipeline (bf16 MXU, f32 acc)
#   local MLP -> max over k -> glb MLP (layer 2 folded) -> combined MLP
#   -> max over k -> final glb MLP
# ----------------------------------------------------------------------------
def _pn_mlp_kernel(gx_ref,
                   wl1, bl1, wl2, bl2,        # local_feat_transformation
                   wg1, bg1,                  # glb_feat_transformation (layer 1)
                   wc1_loc, w_gc, b_gc,       # combined layer 1 (glb layer 2 folded)
                   wc2, bc2,                  # combined layer 2
                   wf1, bf1, wf2, bf2,        # combined_glb_feat_transformation
                   out_ref, *, tn, k, ew, pack_out):
    f32, bf16 = jnp.float32, jnp.bfloat16
    gx = gx_ref[0]                                       # (tn*k, Cin) bf16
    C = wl2.shape[1]                                     # cn_feat_dim

    def dense(h, W, b, relu):
        acc = jnp.dot(h.astype(bf16), W[...], preferred_element_type=f32)
        y = acc.astype(ew) + b[...]                      # bias kept in `ew`
        return jnp.maximum(y, 0) if relu else y

    # ---- local feature transformation (Conv1x1+ReLU, Conv1x1) ----
    h1 = dense(gx, wl1, bl1, relu=True)
    loc = dense(h1, wl2, bl2, relu=False)                # (tn*k, C)

    # ---- per-point max pool over the k neighbours ----
    glb = jnp.max(loc.reshape(tn, k, C), axis=1)         # (tn, C)

    # ---- glb transformation layer 1 (layer 2 is folded into w_gc / b_gc) ----
    g1 = dense(glb, wg1, bg1, relu=True)                 # (tn, 2C)

    # ---- combined layer 1: concat([loc, glb]) @ wc1, realized as split matmul
    part_loc = jnp.dot(loc.astype(bf16), wc1_loc[...],
                       preferred_element_type=f32).astype(ew)        # (tn*k, C)
    part_glb = jnp.dot(g1.astype(bf16), w_gc[...],
                       preferred_element_type=f32).astype(ew) + b_gc[...]
    c1 = jnp.maximum(part_loc.reshape(tn, k, C) + part_glb[:, None, :], 0)

    # ---- combined layer 2 ----
    c2 = dense(c1.reshape(tn * k, C), wc2, bc2, relu=False)          # (tn*k, C)

    # ---- second max pool over k ----
    cmax = jnp.max(c2.reshape(tn, k, C), axis=1)         # (tn, C)

    # ---- final glb transformation ----
    f1 = dense(cmax, wf1, bf1, relu=True)
    f2 = dense(f1, wf2, bf2, relu=False)                 # (tn, C)

    if pack_out:
        # narrow C: pack into a lane-dense (tn*C//128, 128) slab (unmasked vst)
        out_ref[0] = f2.astype(out_ref.dtype).reshape((tn * C) // 128, 128)
    else:
        # C is already a multiple of 128: write the (tn, C) block directly
        out_ref[0] = f2.astype(out_ref.dtype)


def pn_mlp_pipeline(gathered_x, params, tn=None, tn_cap=None):
    B, N, k, cin = gathered_x.shape
    for name in ("local", "glb", "combined", "final"):
        assert len(params[name]) == 2, "kernel specialized to 2-layer conv blocks"
    (wl1, bl1), (wl2, bl2) = params["local"]
    (wg1, bg1), (wg2, bg2) = params["glb"]
    (wc1, bc1), (wc2, bc2) = params["combined"]
    (wf1, bf1), (wf2, bf2) = params["final"]
    C = wl2.shape[1]

    # Generation-aware tiling / VMEM budget and element-wise precision.
    vmem_cap = _tpu_vmem_bytes()
    if tn_cap is None:
        tn_cap = 256 if vmem_cap <= 80 * 1024 * 1024 else 512
    vmem_limit = min(100 * 1024 * 1024,
                     max(32 * 1024 * 1024, (vmem_cap * 5) // 8))
    ew = _elementwise_dtype()          # bf16 element-wise on v6e/v7x, f32 on v5e

    # Fold glb layer 2 (+ biases) into combined layer 1 (no ReLU in between),
    # and pre-split wc1 so the kernel never slices weights in VMEM.
    wc1_loc = wc1[:C, :]
    wc1_glb = wc1[C:, :]
    w_gc = wg2 @ wc1_glb                       # (2C, C)
    b_gc = bg2 @ wc1_glb + bc1                 # (1, C)

    pack_out = (C % 128 != 0)
    if tn is None:
        if pack_out:
            tn = _pick_tile(
                N, tn_cap,
                lambda t: (t * C) % 128 == 0
                and (((t * C) // 128) % 8 == 0 or t == N))
        else:
            tn = _pick_tile(N, tn_cap, lambda t: t % 8 == 0 or t == N)
    assert N % tn == 0, "invalid point tile for this N"
    if pack_out:
        assert (tn * C) % 128 == 0, "invalid point tile for this (N, C)"

    bf16 = jnp.bfloat16
    # bf16 weights (single MXU pass); biases in the element-wise dtype.
    weights = [wl1.astype(bf16), bl1.astype(ew), wl2.astype(bf16), bl2.astype(ew),
               wg1.astype(bf16), bg1.astype(ew),
               wc1_loc.astype(bf16), w_gc.astype(bf16), b_gc.astype(ew),
               wc2.astype(bf16), bc2.astype(ew),
               wf1.astype(bf16), bf1.astype(ew), wf2.astype(bf16), bf2.astype(ew)]

    # Pre-flattened bf16 activations: one (tn*k, Cin) block per grid step.
    gx_flat = gathered_x.reshape(B, N * k, cin).astype(bf16)

    in_specs = [pl.BlockSpec((1, tn * k, cin), lambda b, i: (b, i, 0))]
    for arr in weights:
        in_specs.append(pl.BlockSpec(arr.shape, lambda b, i: (0, 0)))
    # TODO(synk): the 15 constant weight/bias inputs are still double-buffered
    # by the auto-pipeliner; a pre-concatenated slab would trim a bit of VMEM
    # and the grid-start DMA storm.

    if pack_out:
        out_shape = jax.ShapeDtypeStruct((B, (N * C) // 128, 128), jnp.float32)
        out_spec = pl.BlockSpec((1, (tn * C) // 128, 128), lambda b, i: (b, i, 0))
    else:
        out_shape = jax.ShapeDtypeStruct((B, N, C), jnp.float32)
        out_spec = pl.BlockSpec((1, tn, C), lambda b, i: (b, i, 0))

    kernel = functools.partial(_pn_mlp_kernel, tn=tn, k=k, ew=ew,
                               pack_out=pack_out)
    out = pl.pallas_call(
        kernel,
        out_shape=out_shape,
        grid=(B, N // tn),
        in_specs=in_specs,
        out_specs=out_spec,
        compiler_params=pltpu.CompilerParams(
            dimension_semantics=("parallel", "parallel"),
            vmem_limit_bytes=int(vmem_limit)),
    )(gx_flat, *weights)
    # Contiguity-preserving reshape back to (B, N, C) — free in XLA.
    return out.reshape(B, N, C) if pack_out else out


# ----------------------------------------------------------------------------
# Full forward (JAX glue around the two Pallas kernels)
# ----------------------------------------------------------------------------
def local_pn_forward(x, pos, params, k=16, relative_pos=False, tn=None):
    idx = knn_indices(pos, k)                          # (B, N, k) fused Pallas kNN

    # TODO(synk): the neighbour gather (batched_index_select) stays in plain
    # JAX — a data-dependent row gather has no clean BlockSpec expression and
    # would need a manual-DMA gather kernel.
    gather = jax.vmap(lambda v, i: v[i])               # values (N, D), idx (N, k)
    bf16 = jnp.bfloat16
    pos_b = pos.astype(bf16)                           # cast BEFORE the gather
    gathered_pos = gather(pos_b, idx)                  # (B, N, k, 3) bf16
    if relative_pos:
        gathered_pos = gathered_pos - pos_b[:, :, None, :]
    if x is not None:
        gathered_x = jnp.concatenate(
            [gather(x.astype(bf16), idx), gathered_pos], axis=-1)
    else:
        gathered_x = gathered_pos                      # (B, N, k, node_feat_dim)

    return pn_mlp_pipeline(gathered_x, params, tn=tn)  # (B, N, cn_feat_dim)


# ----------------------------------------------------------------------------
# Deterministic parameter init (shapes from the module __init__)
# ----------------------------------------------------------------------------
def init_params(key, node_feat_dim, mlp_dims):
    C = mlp_dims[-1]
    layer_dims = {
        "local": list(zip([node_feat_dim] + mlp_dims[:-1], mlp_dims)),
        "glb": [(C, 2 * C), (2 * C, C)],
        "combined": [(2 * C, C), (C, C)],
        "final": [(C, 2 * C), (2 * C, C)],
    }
    params = {}
    keys = iter(jax.random.split(key, 64))
    for name, dims in layer_dims.items():
        layers = []
        for (cin, cout) in dims:
            W = 0.1 * jax.random.normal(next(keys), (cin, cout), jnp.float32)
            b = 0.1 * jax.random.normal(next(keys), (1, cout), jnp.float32)
            layers.append((W, b))
        params[name] = layers
    return params


# ----------------------------------------------------------------------------
# Pure-JAX f32 reference (mirrors the PyTorch forward) for correctness checks.
# `idx` may be supplied to share the exact kNN selection with the kernel path.
# ----------------------------------------------------------------------------
def reference_forward(x, pos, params, k=16, relative_pos=False, idx=None):
    if idx is None:
        dists = jnp.sum((pos[:, :, None, :] - pos[:, None, :, :]) ** 2, axis=-1)
        _, idx = jax.lax.top_k(-dists, k)
    gather = jax.vmap(lambda v, i: v[i])
    gpos = gather(pos, idx)
    if relative_pos:
        gpos = gpos - pos[:, :, None, :]
    gx = jnp.concatenate([gather(x, idx), gpos], -1) if x is not None else gpos

    def mlp(h, layers):
        for li, (W, b) in enumerate(layers):
            h = h @ W + b
            if li < len(layers) - 1:
                h = jnp.maximum(h, 0.0)
        return h

    loc = mlp(gx, params["local"])                      # (B, N, k, C)
    glb = jnp.max(loc, axis=2, keepdims=True)           # (B, N, 1, C)
    glb = mlp(glb, params["glb"])
    comb = jnp.concatenate([loc, jnp.broadcast_to(glb, loc.shape)], -1)
    comb = mlp(comb, params["combined"])
    cglb = jnp.max(comb, axis=2, keepdims=True)
    cglb = mlp(cglb, params["final"])
    return cglb[:, :, 0, :]                              # squeeze(2)


if __name__ == "__main__":
    key = jax.random.PRNGKey(0)
    kx, kp, kw = jax.random.split(key, 3)

    B, N, x_dim, pos_dim = 2, 64, 5, 3
    k_nn = 16
    mlp_dims = [32, 32]
    node_feat_dim = x_dim + pos_dim                      # 8

    x = jax.random.normal(kx, (B, N, x_dim), jnp.float32)
    pos = jax.random.normal(kp, (B, N, pos_dim), jnp.float32)
    params = init_params(kw, node_feat_dim, mlp_dims)

    out = local_pn_forward(x, pos, params, k=k_nn)
    out = jax.block_until_ready(out)
    assert out.shape == (B, N, mlp_dims[-1])

    # 1) fused kNN kernel vs. the difference-based reference distances: the
    #    selected neighbours must realize the k smallest distances (sorted
    #    comparison is robust to tie / index-order permutations).
    idx = knn_indices(pos, k_nn)
    dists_ref = jnp.sum((pos[:, :, None, :] - pos[:, None, :, :]) ** 2, axis=-1)
    neg_vals, _ = jax.lax.top_k(-dists_ref, k_nn)
    ref_d = jnp.sort(-neg_vals, axis=-1)
    sel_d = jnp.sort(jnp.take_along_axis(dists_ref, idx, axis=-1), axis=-1)
    if not jnp.allclose(sel_d, ref_d, rtol=1e-3, atol=1e-4):
        raise AssertionError(
            f"kNN mismatch: max abs dist diff = "
            f"{float(jnp.max(jnp.abs(sel_d - ref_d)))}")

    # 2) end-to-end vs. the pure-f32 reference using the same kNN indices
    #    (the Pallas path uses bf16 matmul operands and, on v6e/v7x, bf16
    #    element-wise stages, hence the tolerance).
    ref = reference_forward(x, pos, params, k=k_nn, idx=idx)
    if not jnp.allclose(out, ref, rtol=5e-2, atol=2e-2):
        raise AssertionError(
            f"mismatch: max abs diff = {float(jnp.max(jnp.abs(out - ref)))}")

    print("KERNEL_OK")
</pallas_src>

<mosaic_0001>
module attributes {stable_mosaic.version = 11 : i64} {
  func.func @_knn_kernel(%arg0: i32, %arg1: i32, %arg2: i32, %arg3: memref<1x64x8xf32, #tpu.memory_space<vmem>>, %arg4: memref<1x64x8xf32, #tpu.memory_space<vmem>>, %arg5: memref<1x1x64xf32, #tpu.memory_space<vmem>>, %arg6: memref<1x64x16xi32, #tpu.memory_space<vmem>>, %arg7: memref<64x16xf32, #tpu.memory_space<vmem>>, %arg8: memref<64x16xf32, #tpu.memory_space<vmem>>) attributes {dimension_semantics = [#tpu.dimension_semantics<parallel>, #tpu.dimension_semantics<parallel>, #tpu.dimension_semantics<arbitrary>], iteration_bounds = array<i64: 2, 1, 1>, scalar_prefetch = 0 : i64, scratch_operands = 2 : i64, tpu.core_type = #tpu.core_type<tc>, window_params = [{transform_indices = @transform_0, window_bounds = array<i64: 1, 64, 8>}, {transform_indices = @transform_1, window_bounds = array<i64: 1, 64, 8>}, {transform_indices = @transform_2, window_bounds = array<i64: 1, 1, 64>}, {transform_indices = @transform_3, window_bounds = array<i64: 1, 64, 16>}]} {
    %c0_i32 = arith.constant 0 : i32
    %0 = arith.cmpi eq, %arg2, %c0_i32 : i32
    %1 = arith.extui %0 : i1 to i32
    %c0_i32_0 = arith.constant 0 : i32
    %2 = arith.cmpi ne, %1, %c0_i32_0 : i32
    scf.if %2 {
      %cst_190 = arith.constant 0x7F800000 : f32
      %552 = vector.broadcast %cst_190 : f32 to vector<64x16xf32>
      %c0_191 = arith.constant 0 : index
      %c0_192 = arith.constant 0 : index
      %553 = vector.load %arg7[%c0_191, %c0_192] : memref<64x16xf32, #tpu.memory_space<vmem>>, vector<64x16xf32>
      tpu.vector_store %arg7[%c0_191, %c0_192], %552 {strides = array<i32>} : memref<64x16xf32, #tpu.memory_space<vmem>>, vector<64x16xf32>,
      %cst_193 = arith.constant 1.000000e+09 : f32
      %554 = vector.broadcast %cst_193 : f32 to vector<64x16xf32>
      %c0_194 = arith.constant 0 : index
      %c0_195 = arith.constant 0 : index
      %555 = vector.load %arg8[%c0_194, %c0_195] : memref<64x16xf32, #tpu.memory_space<vmem>>, vector<64x16xf32>
      tpu.vector_store %arg8[%c0_194, %c0_195], %554 {strides = array<i32>} : memref<64x16xf32, #tpu.memory_space<vmem>>, vector<64x16xf32>,
    } else {
    }
    %c0 = arith.constant 0 : index
    %c0_1 = arith.constant 0 : index
    %c0_2 = arith.constant 0 : index
    %3 = vector.load %arg3[%c0, %c0_1, %c0_2] : memref<1x64x8xf32, #tpu.memory_space<vmem>>, vector<1x64x8xf32>
    %4 = vector.shape_cast %3 : vector<1x64x8xf32> to vector<64x8xf32>
    %c0_3 = arith.constant 0 : index
    %c0_4 = arith.constant 0 : index
    %c0_5 = arith.constant 0 : index
    %5 = vector.load %arg4[%c0_3, %c0_4, %c0_5] : memref<1x64x8xf32, #tpu.memory_space<vmem>>, vector<1x64x8xf32>
    %6 = vector.shape_cast %5 : vector<1x64x8xf32> to vector<64x8xf32>
    %c0_6 = arith.constant 0 : index
    %c0_7 = arith.constant 0 : index
    %c0_8 = arith.constant 0 : index
    %7 = vector.load %arg5[%c0_6, %c0_7, %c0_8] : memref<1x1x64xf32, #tpu.memory_space<vmem>>, vector<1x1x64xf32>
    %8 = vector.shape_cast %7 : vector<1x1x64xf32> to vector<1x64xf32>
    %cst = arith.constant dense<0.000000e+00> : vector<64x64xf32>
    %9 = tpu.matmul %4, %6, %cst {dimension_numbers = #tpu.dot_dimension_numbers<[1], [1], [0], [0], [0, 0, 1, 0], [], []>} : vector<64x8xf32>, vector<64x8xf32>, vector<64x64xf32> -> vector<64x64xf32>
    %10 = vector.broadcast %8 : vector<1x64xf32> to vector<64x64xf32>
    %11 = arith.subf %10, %9 : vector<64x64xf32>
    %12 = tpu.iota {dimensions = array<i32: 1>} : vector<64x64xi32>
    %c64_i32 = arith.constant 64 : i32
    %13 = arith.muli %arg2, %c64_i32 : i32
    %14 = vector.broadcast %13 : i32 to vector<64x64xi32>
    %15 = arith.addi %12, %14 : vector<64x64xi32>
    %16 = arith.sitofp %15 : vector<64x64xi32> to vector<64x64xf32>
    %c0_9 = arith.constant 0 : index
    %c0_10 = arith.constant 0 : index
    %17 = vector.load %arg7[%c0_9, %c0_10] : memref<64x16xf32, #tpu.memory_space<vmem>>, vector<64x16xf32>
    %c0_11 = arith.constant 0 : index
    %c0_12 = arith.constant 0 : index
    %18 = vector.load %arg8[%c0_11, %c0_12] : memref<64x16xf32, #tpu.memory_space<vmem>>, vector<64x16xf32>
    %cst_13 = arith.constant dense<0x7F800000> : vector<64xf32>
    %19 = vector.multi_reduction <minimumf>, %17, %cst_13 [1] : vector<64x16xf32> to vector<64xf32>
    %20 = vector.shape_cast %19 : vector<64xf32> to vector<64x1xf32>
    %cst_14 = arith.constant dense<0x7F800000> : vector<64xf32>
    %21 = vector.multi_reduction <minimumf>, %11, %cst_14 [1] : vector<64x64xf32> to vector<64xf32>
    %22 = vector.shape_cast %21 : vector<64xf32> to vector<64x1xf32>
    %23 = arith.minimumf %20, %22 : vector<64x1xf32>
    %24 = vector.broadcast %23 : vector<64x1xf32> to vector<64x16xf32>
    %25 = arith.cmpf oeq, %17, %24 : vector<64x16xf32>
    %cst_15 = arith.constant 1.000000e+09 : f32
    %26 = vector.broadcast %cst_15 : f32 to vector<64x16xf32>
    %27 = arith.select %25, %18, %26 : vector<64x16xi1>, vector<64x16xf32>
    %cst_16 = arith.constant dense<0x7F800000> : vector<64xf32>
    %28 = vector.multi_reduction <minimumf>, %27, %cst_16 [1] : vector<64x16xf32> to vector<64xf32>
    %29 = vector.shape_cast %28 : vector<64xf32> to vector<64x1xf32>
    %30 = vector.broadcast %23 : vector<64x1xf32> to vector<64x64xf32>
    %31 = arith.cmpf oeq, %11, %30 : vector<64x64xf32>
    %cst_17 = arith.constant 1.000000e+09 : f32
    %32 = vector.broadcast %cst_17 : f32 to vector<64x64xf32>
    %33 = arith.select %31, %16, %32 : vector<64x64xi1>, vector<64x64xf32>
    %cst_18 = arith.constant dense<0x7F800000> : vector<64xf32>
    %34 = vector.multi_reduction <minimumf>, %33, %cst_18 [1] : vector<64x64xf32> to vector<64xf32>
    %35 = vector.shape_cast %34 : vector<64xf32> to vector<64x1xf32>
    %36 = arith.minimumf %29, %35 : vector<64x1xf32>
    %c0_19 = arith.constant 0 : index
    %c0_20 = arith.constant 0 : index
    %37 = vector.load %arg7[%c0_19, %c0_20] : memref<64x16xf32, #tpu.memory_space<vmem>>, vector<64x1xf32>
    tpu.vector_store %arg7[%c0_19, %c0_20], %23 {strides = array<i32>} : memref<64x16xf32, #tpu.memory_space<vmem>>, vector<64x1xf32>,
    %c0_21 = arith.constant 0 : index
    %c0_22 = arith.constant 0 : index
    %38 = vector.load %arg8[%c0_21, %c0_22] : memref<64x16xf32, #tpu.memory_space<vmem>>, vector<64x1xf32>
    tpu.vector_store %arg8[%c0_21, %c0_22], %36 {strides = array<i32>} : memref<64x16xf32, #tpu.memory_space<vmem>>, vector<64x1xf32>,
    %39 = vector.broadcast %23 : vector<64x1xf32> to vector<64x16xf32>
    %40 = arith.cmpf oeq, %17, %39 : vector<64x16xf32>
    %41 = vector.broadcast %36 : vector<64x1xf32> to vector<64x16xf32>
    %42 = arith.cmpf oeq, %18, %41 : vector<64x16xf32>
    %43 = arith.andi %40, %42 : vector<64x16xi1>
    %cst_23 = arith.constant 0x7F800000 : f32
    %44 = vector.broadcast %cst_23 : f32 to vector<64x16xf32>
    %45 = arith.select %43, %44, %17 : vector<64x16xi1>, vector<64x16xf32>
    %46 = vector.broadcast %23 : vector<64x1xf32> to vector<64x64xf32>
    %47 = arith.cmpf oeq, %11, %46 : vector<64x64xf32>
    %48 = vector.broadcast %36 : vector<64x1xf32> to vector<64x64xf32>
    %49 = arith.cmpf oeq, %16, %48 : vector<64x64xf32>
    %50 = arith.andi %47, %49 : vector<64x64xi1>
    %cst_24 = arith.constant 0x7F800000 : f32
    %51 = vector.broadcast %cst_24 : f32 to vector<64x64xf32>
    %52 = arith.select %50, %51, %11 : vector<64x64xi1>, vector<64x64xf32>
    %cst_25 = arith.constant dense<0x7F800000> : vector<64xf32>
    %53 = vector.multi_reduction <minimumf>, %45, %cst_25 [1] : vector<64x16xf32> to vector<64xf32>
    %54 = vector.shape_cast %53 : vector<64xf32> to vector<64x1xf32>
    %cst_26 = arith.constant dense<0x7F800000> : vector<64xf32>
    %55 = vector.multi_reduction <minimumf>, %52, %cst_26 [1] : vector<64x64xf32> to vector<64xf32>
    %56 = vector.shape_cast %55 : vector<64xf32> to vector<64x1xf32>
    %57 = arith.minimumf %54, %56 : vector<64x1xf32>
    %58 = vector.broadcast %57 : vector<64x1xf32> to vector<64x16xf32>
    %59 = arith.cmpf oeq, %45, %58 : vector<64x16xf32>
    %cst_27 = arith.constant 1.000000e+09 : f32
    %60 = vector.broadcast %cst_27 : f32 to vector<64x16xf32>
    %61 = arith.select %59, %18, %60 : vector<64x16xi1>, vector<64x16xf32>
    %cst_28 = arith.constant dense<0x7F800000> : vector<64xf32>
    %62 = vector.multi_reduction <minimumf>, %61, %cst_28 [1] : vector<64x16xf32> to vector<64xf32>
    %63 = vector.shape_cast %62 : vector<64xf32> to vector<64x1xf32>
    %64 = vector.broadcast %57 : vector<64x1xf32> to vector<64x64xf32>
    %65 = arith.cmpf oeq, %52, %64 : vector<64x64xf32>
    %cst_29 = arith.constant 1.000000e+09 : f32
    %66 = vector.broadcast %cst_29 : f32 to vector<64x64xf32>
    %67 = arith.select %65, %16, %66 : vector<64x64xi1>, vector<64x64xf32>
    %cst_30 = arith.constant dense<0x7F800000> : vector<64xf32>
    %68 = vector.multi_reduction <minimumf>, %67, %cst_30 [1] : vector<64x64xf32> to vector<64xf32>
    %69 = vector.shape_cast %68 : vector<64xf32> to vector<64x1xf32>
    %70 = arith.minimumf %63, %69 : vector<64x1xf32>
    %c0_31 = arith.constant 0 : index
    %c1 = arith.constant 1 : index
    %71 = vector.load %arg7[%c0_31, %c1] : memref<64x16xf32, #tpu.memory_space<vmem>>, vector<64x1xf32>
    tpu.vector_store %arg7[%c0_31, %c1], %57 {strides = array<i32>} : memref<64x16xf32, #tpu.memory_space<vmem>>, vector<64x1xf32>,
    %c0_32 = arith.constant 0 : index
    %c1_33 = arith.constant 1 : index
    %72 = vector.load %arg8[%c0_32, %c1_33] : memref<64x16xf32, #tpu.memory_space<vmem>>, vector<64x1xf32>
    tpu.vector_store %arg8[%c0_32, %c1_33], %70 {strides = array<i32>} : memref<64x16xf32, #tpu.memory_space<vmem>>, vector<64x1xf32>,
    %73 = vector.broadcast %57 : vector<64x1xf32> to vector<64x16xf32>
    %74 = arith.cmpf oeq, %45, %73 : vector<64x16xf32>
    %75 = vector.broadcast %70 : vector<64x1xf32> to vector<64x16xf32>
    %76 = arith.cmpf oeq, %18, %75 : vector<64x16xf32>
    %77 = arith.andi %74, %76 : vector<64x16xi1>
    %cst_34 = arith.constant 0x7F800000 : f32
    %78 = vector.broadcast %cst_34 : f32 to vector<64x16xf32>
    %79 = arith.select %77, %78, %45 : vector<64x16xi1>, vector<64x16xf32>
    %80 = vector.broadcast %57 : vector<64x1xf32> to vector<64x64xf32>
    %81 = arith.cmpf oeq, %52, %80 : vector<64x64xf32>
    %82 = vector.broadcast %70 : vector<64x1xf32> to vector<64x64xf32>
    %83 = arith.cmpf oeq, %16, %82 : vector<64x64xf32>
    %84 = arith.andi %81, %83 : vector<64x64xi1>
    %cst_35 = arith.constant 0x7F800000 : f32
    %85 = vector.broadcast %cst_35 : f32 to vector<64x64xf32>
    %86 = arith.select %84, %85, %52 : vector<64x64xi1>, vector<64x64xf32>
    %cst_36 = arith.constant dense<0x7F800000> : vector<64xf32>
    %87 = vector.multi_reduction <minimumf>, %79, %cst_36 [1] : vector<64x16xf32> to vector<64xf32>
    %88 = vector.shape_cast %87 : vector<64xf32> to vector<64x1xf32>
    %cst_37 = arith.constant dense<0x7F800000> : vector<64xf32>
    %89 = vector.multi_reduction <minimumf>, %86, %cst_37 [1] : vector<64x64xf32> to vector<64xf32>
    %90 = vector.shape_cast %89 : vector<64xf32> to vector<64x1xf32>
    %91 = arith.minimumf %88, %90 : vector<64x1xf32>
    %92 = vector.broadcast %91 : vector<64x1xf32> to vector<64x16xf32>
    %93 = arith.cmpf oeq, %79, %92 : vector<64x16xf32>
    %cst_38 = arith.constant 1.000000e+09 : f32
    %94 = vector.broadcast %cst_38 : f32 to vector<64x16xf32>
    %95 = arith.select %93, %18, %94 : vector<64x16xi1>, vector<64x16xf32>
    %cst_39 = arith.constant dense<0x7F800000> : vector<64xf32>
    %96 = vector.multi_reduction <minimumf>, %95, %cst_39 [1] : vector<64x16xf32> to vector<64xf32>
    %97 = vector.shape_cast %96 : vector<64xf32> to vector<64x1xf32>
    %98 = vector.broadcast %91 : vector<64x1xf32> to vector<64x64xf32>
    %99 = arith.cmpf oeq, %86, %98 : vector<64x64xf32>
    %cst_40 = arith.constant 1.000000e+09 : f32
    %100 = vector.broadcast %cst_40 : f32 to vector<64x64xf32>
    %101 = arith.select %99, %16, %100 : vector<64x64xi1>, vector<64x64xf32>
    %cst_41 = arith.constant dense<0x7F800000> : vector<64xf32>
    %102 = vector.multi_reduction <minimumf>, %101, %cst_41 [1] : vector<64x64xf32> to vector<64xf32>
    %103 = vector.shape_cast %102 : vector<64xf32> to vector<64x1xf32>
    %104 = arith.minimumf %97, %103 : vector<64x1xf32>
    %c0_42 = arith.constant 0 : index
    %c2 = arith.constant 2 : index
    %105 = vector.load %arg7[%c0_42, %c2] : memref<64x16xf32, #tpu.memory_space<vmem>>, vector<64x1xf32>
    tpu.vector_store %arg7[%c0_42, %c2], %91 {strides = array<i32>} : memref<64x16xf32, #tpu.memory_space<vmem>>, vector<64x1xf32>,
    %c0_43 = arith.constant 0 : index
    %c2_44 = arith.constant 2 : index
    %106 = vector.load %arg8[%c0_43, %c2_44] : memref<64x16xf32, #tpu.memory_space<vmem>>, vector<64x1xf32>
    tpu.vector_store %arg8[%c0_43, %c2_44], %104 {strides = array<i32>} : memref<64x16xf32, #tpu.memory_space<vmem>>, vector<64x1xf32>,
    %107 = vector.broadcast %91 : vector<64x1xf32> to vector<64x16xf32>
    %108 = arith.cmpf oeq, %79, %107 : vector<64x16xf32>
    %109 = vector.broadcast %104 : vector<64x1xf32> to vector<64x16xf32>
    %110 = arith.cmpf oeq, %18, %109 : vector<64x16xf32>
    %111 = arith.andi %108, %110 : vector<64x16xi1>
    %cst_45 = arith.constant 0x7F800000 : f32
    %112 = vector.broadcast %cst_45 : f32 to vector<64x16xf32>
    %113 = arith.select %111, %112, %79 : vector<64x16xi1>, vector<64x16xf32>
    %114 = vector.broadcast %91 : vector<64x1xf32> to vector<64x64xf32>
    %115 = arith.cmpf oeq, %86, %114 : vector<64x64xf32>
    %116 = vector.broadcast %104 : vector<64x1xf32> to vector<64x64xf32>
    %117 = arith.cmpf oeq, %16, %116 : vector<64x64xf32>
    %118 = arith.andi %115, %117 : vector<64x64xi1>
    %cst_46 = arith.constant 0x7F800000 : f32
    %119 = vector.broadcast %cst_46 : f32 to vector<64x64xf32>
    %120 = arith.select %118, %119, %86 : vector<64x64xi1>, vector<64x64xf32>
    %cst_47 = arith.constant dense<0x7F800000> : vector<64xf32>
    %121 = vector.multi_reduction <minimumf>, %113, %cst_47 [1] : vector<64x16xf32> to vector<64xf32>
    %122 = vector.shape_cast %121 : vector<64xf32> to vector<64x1xf32>
    %cst_48 = arith.constant dense<0x7F800000> : vector<64xf32>
    %123 = vector.multi_reduction <minimumf>, %120, %cst_48 [1] : vector<64x64xf32> to vector<64xf32>
    %124 = vector.shape_cast %123 : vector<64xf32> to vector<64x1xf32>
    %125 = arith.minimumf %122, %124 : vector<64x1xf32>
    %126 = vector.broadcast %125 : vector<64x1xf32> to vector<64x16xf32>
    %127 = arith.cmpf oeq, %113, %126 : vector<64x16xf32>
    %cst_49 = arith.constant 1.000000e+09 : f32
    %128 = vector.broadcast %cst_49 : f32 to vector<64x16xf32>
    %129 = arith.select %127, %18, %128 : vector<64x16xi1>, vector<64x16xf32>
    %cst_50 = arith.constant dense<0x7F800000> : vector<64xf32>
    %130 = vector.multi_reduction <minimumf>, %129, %cst_50 [1] : vector<64x16xf32> to vector<64xf32>
    %131 = vector.shape_cast %130 : vector<64xf32> to vector<64x1xf32>
    %132 = vector.broadcast %125 : vector<64x1xf32> to vector<64x64xf32>
    %133 = arith.cmpf oeq, %120, %132 : vector<64x64xf32>
    %cst_51 = arith.constant 1.000000e+09 : f32
    %134 = vector.broadcast %cst_51 : f32 to vector<64x64xf32>
    %135 = arith.select %133, %16, %134 : vector<64x64xi1>, vector<64x64xf32>
    %cst_52 = arith.constant dense<0x7F800000> : vector<64xf32>
    %136 = vector.multi_reduction <minimumf>, %135, %cst_52 [1] : vector<64x64xf32> to vector<64xf32>
    %137 = vector.shape_cast %136 : vector<64xf32> to vector<64x1xf32>
    %138 = arith.minimumf %131, %137 : vector<64x1xf32>
    %c0_53 = arith.constant 0 : index
    %c3 = arith.constant 3 : index
    %139 = vector.load %arg7[%c0_53, %c3] : memref<64x16xf32, #tpu.memory_space<vmem>>, vector<64x1xf32>
    tpu.vector_store %arg7[%c0_53, %c3], %125 {strides = array<i32>} : memref<64x16xf32, #tpu.memory_space<vmem>>, vector<64x1xf32>,
    %c0_54 = arith.constant 0 : index
    %c3_55 = arith.constant 3 : index
    %140 = vector.load %arg8[%c0_54, %c3_55] : memref<64x16xf32, #tpu.memory_space<vmem>>, vector<64x1xf32>
    tpu.vector_store %arg8[%c0_54, %c3_55], %138 {strides = array<i32>} : memref<64x16xf32, #tpu.memory_space<vmem>>, vector<64x1xf32>,
    %141 = vector.broadcast %125 : vector<64x1xf32> to vector<64x16xf32>
    %142 = arith.cmpf oeq, %113, %141 : vector<64x16xf32>
    %143 = vector.broadcast %138 : vector<64x1xf32> to vector<64x16xf32>
    %144 = arith.cmpf oeq, %18, %143 : vector<64x16xf32>
    %145 = arith.andi %142, %144 : vector<64x16xi1>
    %cst_56 = arith.constant 0x7F800000 : f32
    %146 = vector.broadcast %cst_56 : f32 to vector<64x16xf32>
    %147 = arith.select %145, %146, %113 : vector<64x16xi1>, vector<64x16xf32>
    %148 = vector.broadcast %125 : vector<64x1xf32> to vector<64x64xf32>
    %149 = arith.cmpf oeq, %120, %148 : vector<64x64xf32>
    %150 = vector.broadcast %138 : vector<64x1xf32> to vector<64x64xf32>
    %151 = arith.cmpf oeq, %16, %150 : vector<64x64xf32>
    %152 = arith.andi %149, %151 : vector<64x64xi1>
    %cst_57 = arith.constant 0x7F800000 : f32
    %153 = vector.broadcast %cst_57 : f32 to vector<64x64xf32>
    %154 = arith.select %152, %153, %120 : vector<64x64xi1>, vector<64x64xf32>
    %cst_58 = arith.constant dense<0x7F800000> : vector<64xf32>
    %155 = vector.multi_reduction <minimumf>, %147, %cst_58 [1] : vector<64x16xf32> to vector<64xf32>
    %156 = vector.shape_cast %155 : vector<64xf32> to vector<64x1xf32>
    %cst_59 = arith.constant dense<0x7F800000> : vector<64xf32>
    %157 = vector.multi_reduction <minimumf>, %154, %cst_59 [1] : vector<64x64xf32> to vector<64xf32>
    %158 = vector.shape_cast %157 : vector<64xf32> to vector<64x1xf32>
    %159 = arith.minimumf %156, %158 : vector<64x1xf32>
    %160 = vector.broadcast %159 : vector<64x1xf32> to vector<64x16xf32>
    %161 = arith.cmpf oeq, %147, %160 : vector<64x16xf32>
    %cst_60 = arith.constant 1.000000e+09 : f32
    %162 = vector.broadcast %cst_60 : f32 to vector<64x16xf32>
    %163 = arith.select %161, %18, %162 : vector<64x16xi1>, vector<64x16xf32>
    %cst_61 = arith.constant dense<0x7F800000> : vector<64xf32>
    %164 = vector.multi_reduction <minimumf>, %163, %cst_61 [1] : vector<64x16xf32> to vector<64xf32>
    %165 = vector.shape_cast %164 : vector<64xf32> to vector<64x1xf32>
    %166 = vector.broadcast %159 : vector<64x1xf32> to vector<64x64xf32>
    %167 = arith.cmpf oeq, %154, %166 : vector<64x64xf32>
    %cst_62 = arith.constant 1.000000e+09 : f32
    %168 = vector.broadcast %cst_62 : f32 to vector<64x64xf32>
    %169 = arith.select %167, %16, %168 : vector<64x64xi1>, vector<64x64xf32>
    %cst_63 = arith.constant dense<0x7F800000> : vector<64xf32>
    %170 = vector.multi_reduction <minimumf>, %169, %cst_63 [1] : vector<64x64xf32> to vector<64xf32>
    %171 = vector.shape_cast %170 : vector<64xf32> to vector<64x1xf32>
    %172 = arith.minimumf %165, %171 : vector<64x1xf32>
    %c0_64 = arith.constant 0 : index
    %c4 = arith.constant 4 : index
    %173 = vector.load %arg7[%c0_64, %c4] : memref<64x16xf32, #tpu.memory_space<vmem>>, vector<64x1xf32>
    tpu.vector_store %arg7[%c0_64, %c4], %159 {strides = array<i32>} : memref<64x16xf32, #tpu.memory_space<vmem>>, vector<64x1xf32>,
    %c0_65 = arith.constant 0 : index
    %c4_66 = arith.constant 4 : index
    %174 = vector.load %arg8[%c0_65, %c4_66] : memref<64x16xf32, #tpu.memory_space<vmem>>, vector<64x1xf32>
    tpu.vector_store %arg8[%c0_65, %c4_66], %172 {strides = array<i32>} : memref<64x16xf32, #tpu.memory_space<vmem>>, vector<64x1xf32>,
    %175 = vector.broadcast %159 : vector<64x1xf32> to vector<64x16xf32>
    %176 = arith.cmpf oeq, %147, %175 : vector<64x16xf32>
    %177 = vector.broadcast %172 : vector<64x1xf32> to vector<64x16xf32>
    %178 = arith.cmpf oeq, %18, %177 : vector<64x16xf32>
    %179 = arith.andi %176, %178 : vector<64x16xi1>
    %cst_67 = arith.constant 0x7F800000 : f32
    %180 = vector.broadcast %cst_67 : f32 to vector<64x16xf32>
    %181 = arith.select %179, %180, %147 : vector<64x16xi1>, vector<64x16xf32>
    %182 = vector.broadcast %159 : vector<64x1xf32> to vector<64x64xf32>
    %183 = arith.cmpf oeq, %154, %182 : vector<64x64xf32>
    %184 = vector.broadcast %172 : vector<64x1xf32> to vector<64x64xf32>
    %185 = arith.cmpf oeq, %16, %184 : vector<64x64xf32>
    %186 = arith.andi %183, %185 : vector<64x64xi1>
    %cst_68 = arith.constant 0x7F800000 : f32
    %187 = vector.broadcast %cst_68 : f32 to vector<64x64xf32>
    %188 = arith.select %186, %187, %154 : vector<64x64xi1>, vector<64x64xf32>
    %cst_69 = arith.constant dense<0x7F800000> : vector<64xf32>
    %189 = vector.multi_reduction <minimumf>, %181, %cst_69 [1] : vector<64x16xf32> to vector<64xf32>
    %190 = vector.shape_cast %189 : vector<64xf32> to vector<64x1xf32>
    %cst_70 = arith.constant dense<0x7F800000> : vector<64xf32>
    %191 = vector.multi_reduction <minimumf>, %188, %cst_70 [1] : vector<64x64xf32> to vector<64xf32>
    %192 = vector.shape_cast %191 : vector<64xf32> to vector<64x1xf32>
    %193 = arith.minimumf %190, %192 : vector<64x1xf32>
    %194 = vector.broadcast %193 : vector<64x1xf32> to vector<64x16xf32>
    %195 = arith.cmpf oeq, %181, %194 : vector<64x16xf32>
    %cst_71 = arith.constant 1.000000e+09 : f32
    %196 = vector.broadcast %cst_71 : f32 to vector<64x16xf32>
    %197 = arith.select %195, %18, %196 : vector<64x16xi1>, vector<64x16xf32>
    %cst_72 = arith.constant dense<0x7F800000> : vector<64xf32>
    %198 = vector.multi_reduction <minimumf>, %197, %cst_72 [1] : vector<64x16xf32> to vector<64xf32>
    %199 = vector.shape_cast %198 : vector<64xf32> to vector<64x1xf32>
    %200 = vector.broadcast %193 : vector<64x1xf32> to vector<64x64xf32>
    %201 = arith.cmpf oeq, %188, %200 : vector<64x64xf32>
    %cst_73 = arith.constant 1.000000e+09 : f32
    %202 = vector.broadcast %cst_73 : f32 to vector<64x64xf32>
    %203 = arith.select %201, %16, %202 : vector<64x64xi1>, vector<64x64xf32>
    %cst_74 = arith.constant dense<0x7F800000> : vector<64xf32>
    %204 = vector.multi_reduction <minimumf>, %203, %cst_74 [1] : vector<64x64xf32> to vector<64xf32>
    %205 = vector.shape_cast %204 : vector<64xf32> to vector<64x1xf32>
    %206 = arith.minimumf %199, %205 : vector<64x1xf32>
    %c0_75 = arith.constant 0 : index
    %c5 = arith.constant 5 : index
    %207 = vector.load %arg7[%c0_75, %c5] : memref<64x16xf32, #tpu.memory_space<vmem>>, vector<64x1xf32>
    tpu.vector_store %arg7[%c0_75, %c5], %193 {strides = array<i32>} : memref<64x16xf32, #tpu.memory_space<vmem>>, vector<64x1xf32>,
    %c0_76 = arith.constant 0 : index
    %c5_77 = arith.constant 5 : index
    %208 = vector.load %arg8[%c0_76, %c5_77] : memref<64x16xf32, #tpu.memory_space<vmem>>, vector<64x1xf32>
    tpu.vector_store %arg8[%c0_76, %c5_77], %206 {strides = array<i32>} : memref<64x16xf32, #tpu.memory_space<vmem>>, vector<64x1xf32>,
    %209 = vector.broadcast %193 : vector<64x1xf32> to vector<64x16xf32>
    %210 = arith.cmpf oeq, %181, %209 : vector<64x16xf32>
    %211 = vector.broadcast %206 : vector<64x1xf32> to vector<64x16xf32>
    %212 = arith.cmpf oeq, %18, %211 : vector<64x16xf32>
    %213 = arith.andi %210, %212 : vector<64x16xi1>
    %cst_78 = arith.constant 0x7F800000 : f32
    %214 = vector.broadcast %cst_78 : f32 to vector<64x16xf32>
    %215 = arith.select %213, %214, %181 : vector<64x16xi1>, vector<64x16xf32>
    %216 = vector.broadcast %193 : vector<64x1xf32> to vector<64x64xf32>
    %217 = arith.cmpf oeq, %188, %216 : vector<64x64xf32>
    %218 = vector.broadcast %206 : vector<64x1xf32> to vector<64x64xf32>
    %219 = arith.cmpf oeq, %16, %218 : vector<64x64xf32>
    %220 = arith.andi %217, %219 : vector<64x64xi1>
    %cst_79 = arith.constant 0x7F800000 : f32
    %221 = vector.broadcast %cst_79 : f32 to vector<64x64xf32>
    %222 = arith.select %220, %221, %188 : vector<64x64xi1>, vector<64x64xf32>
    %cst_80 = arith.constant dense<0x7F800000> : vector<64xf32>
    %223 = vector.multi_reduction <minimumf>, %215, %cst_80 [1] : vector<64x16xf32> to vector<64xf32>
    %224 = vector.shape_cast %223 : vector<64xf32> to vector<64x1xf32>
    %cst_81 = arith.constant dense<0x7F800000> : vector<64xf32>
    %225 = vector.multi_reduction <minimumf>, %222, %cst_81 [1] : vector<64x64xf32> to vector<64xf32>
    %226 = vector.shape_cast %225 : vector<64xf32> to vector<64x1xf32>
    %227 = arith.minimumf %224, %226 : vector<64x1xf32>
    %228 = vector.broadcast %227 : vector<64x1xf32> to vector<64x16xf32>
    %229 = arith.cmpf oeq, %215, %228 : vector<64x16xf32>
    %cst_82 = arith.constant 1.000000e+09 : f32
    %230 = vector.broadcast %cst_82 : f32 to vector<64x16xf32>
    %231 = arith.select %229, %18, %230 : vector<64x16xi1>, vector<64x16xf32>
    %cst_83 = arith.constant dense<0x7F800000> : vector<64xf32>
    %232 = vector.multi_reduction <minimumf>, %231, %cst_83 [1] : vector<64x16xf32> to vector<64xf32>
    %233 = vector.shape_cast %232 : vector<64xf32> to vector<64x1xf32>
    %234 = vector.broadcast %227 : vector<64x1xf32> to vector<64x64xf32>
    %235 = arith.cmpf oeq, %222, %234 : vector<64x64xf32>
    %cst_84 = arith.constant 1.000000e+09 : f32
    %236 = vector.broadcast %cst_84 : f32 to vector<64x64xf32>
    %237 = arith.select %235, %16, %236 : vector<64x64xi1>, vector<64x64xf32>
    %cst_85 = arith.constant dense<0x7F800000> : vector<64xf32>
    %238 = vector.multi_reduction <minimumf>, %237, %cst_85 [1] : vector<64x64xf32> to vector<64xf32>
    %239 = vector.shape_cast %238 : vector<64xf32> to vector<64x1xf32>
    %240 = arith.minimumf %233, %239 : vector<64x1xf32>
    %c0_86 = arith.constant 0 : index
    %c6 = arith.constant 6 : index
    %241 = vector.load %arg7[%c0_86, %c6] : memref<64x16xf32, #tpu.memory_space<vmem>>, vector<64x1xf32>
    tpu.vector_store %arg7[%c0_86, %c6], %227 {strides = array<i32>} : memref<64x16xf32, #tpu.memory_space<vmem>>, vector<64x1xf32>,
    %c0_87 = arith.constant 0 : index
    %c6_88 = arith.constant 6 : index
    %242 = vector.load %arg8[%c0_87, %c6_88] : memref<64x16xf32, #tpu.memory_space<vmem>>, vector<64x1xf32>
    tpu.vector_store %arg8[%c0_87, %c6_88], %240 {strides = array<i32>} : memref<64x16xf32, #tpu.memory_space<vmem>>, vector<64x1xf32>,
    %243 = vector.broadcast %227 : vector<64x1xf32> to vector<64x16xf32>
    %244 = arith.cmpf oeq, %215, %243 : vector<64x16xf32>
    %245 = vector.broadcast %240 : vector<64x1xf32> to vector<64x16xf32>
    %246 = arith.cmpf oeq, %18, %245 : vector<64x16xf32>
    %247 = arith.andi %244, %246 : vector<64x16xi1>
    %cst_89 = arith.constant 0x7F800000 : f32
    %248 = vector.broadcast %cst_89 : f32 to vector<64x16xf32>
    %249 = arith.select %247, %248, %215 : vector<64x16xi1>, vector<64x16xf32>
    %250 = vector.broadcast %227 : vector<64x1xf32> to vector<64x64xf32>
    %251 = arith.cmpf oeq, %222, %250 : vector<64x64xf32>
    %252 = vector.broadcast %240 : vector<64x1xf32> to vector<64x64xf32>
    %253 = arith.cmpf oeq, %16, %252 : vector<64x64xf32>
    %254 = arith.andi %251, %253 : vector<64x64xi1>
    %cst_90 = arith.constant 0x7F800000 : f32
    %255 = vector.broadcast %cst_90 : f32 to vector<64x64xf32>
    %256 = arith.select %254, %255, %222 : vector<64x64xi1>, vector<64x64xf32>
    %cst_91 = arith.constant dense<0x7F800000> : vector<64xf32>
    %257 = vector.multi_reduction <minimumf>, %249, %cst_91 [1] : vector<64x16xf32> to vector<64xf32>
    %258 = vector.shape_cast %257 : vector<64xf32> to vector<64x1xf32>
    %cst_92 = arith.constant dense<0x7F800000> : vector<64xf32>
    %259 = vector.multi_reduction <minimumf>, %256, %cst_92 [1] : vector<64x64xf32> to vector<64xf32>
    %260 = vector.shape_cast %259 : vector<64xf32> to vector<64x1xf32>
    %261 = arith.minimumf %258, %260 : vector<64x1xf32>
    %262 = vector.broadcast %261 : vector<64x1xf32> to vector<64x16xf32>
    %263 = arith.cmpf oeq, %249, %262 : vector<64x16xf32>
    %cst_93 = arith.constant 1.000000e+09 : f32
    %264 = vector.broadcast %cst_93 : f32 to vector<64x16xf32>
    %265 = arith.select %263, %18, %264 : vector<64x16xi1>, vector<64x16xf32>
    %cst_94 = arith.constant dense<0x7F800000> : vector<64xf32>
    %266 = vector.multi_reduction <minimumf>, %265, %cst_94 [1] : vector<64x16xf32> to vector<64xf32>
    %267 = vector.shape_cast %266 : vector<64xf32> to vector<64x1xf32>
    %268 = vector.broadcast %261 : vector<64x1xf32> to vector<64x64xf32>
    %269 = arith.cmpf oeq, %256, %268 : vector<64x64xf32>
    %cst_95 = arith.constant 1.000000e+09 : f32
    %270 = vector.broadcast %cst_95 : f32 to vector<64x64xf32>
    %271 = arith.select %269, %16, %270 : vector<64x64xi1>, vector<64x64xf32>
    %cst_96 = arith.constant dense<0x7F800000> : vector<64xf32>
    %272 = vector.multi_reduction <minimumf>, %271, %cst_96 [1] : vector<64x64xf32> to vector<64xf32>
    %273 = vector.shape_cast %272 : vector<64xf32> to vector<64x1xf32>
    %274 = arith.minimumf %267, %273 : vector<64x1xf32>
    %c0_97 = arith.constant 0 : index
    %c7 = arith.constant 7 : index
    %275 = vector.load %arg7[%c0_97, %c7] : memref<64x16xf32, #tpu.memory_space<vmem>>, vector<64x1xf32>
    tpu.vector_store %arg7[%c0_97, %c7], %261 {strides = array<i32>} : memref<64x16xf32, #tpu.memory_space<vmem>>, vector<64x1xf32>,
    %c0_98 = arith.constant 0 : index
    %c7_99 = arith.constant 7 : index
    %276 = vector.load %arg8[%c0_98, %c7_99] : memref<64x16xf32, #tpu.memory_space<vmem>>, vector<64x1xf32>
    tpu.vector_store %arg8[%c0_98, %c7_99], %274 {strides = array<i32>} : memref<64x16xf32, #tpu.memory_space<vmem>>, vector<64x1xf32>,
    %277 = vector.broadcast %261 : vector<64x1xf32> to vector<64x16xf32>
    %278 = arith.cmpf oeq, %249, %277 : vector<64x16xf32>
    %279 = vector.broadcast %274 : vector<64x1xf32> to vector<64x16xf32>
    %280 = arith.cmpf oeq, %18, %279 : vector<64x16xf32>
    %281 = arith.andi %278, %280 : vector<64x16xi1>
    %cst_100 = arith.constant 0x7F800000 : f32
    %282 = vector.broadcast %cst_100 : f32 to vector<64x16xf32>
    %283 = arith.select %281, %282, %249 : vector<64x16xi1>, vector<64x16xf32>
    %284 = vector.broadcast %261 : vector<64x1xf32> to vector<64x64xf32>
    %285 = arith.cmpf oeq, %256, %284 : vector<64x64xf32>
    %286 = vector.broadcast %274 : vector<64x1xf32> to vector<64x64xf32>
    %287 = arith.cmpf oeq, %16, %286 : vector<64x64xf32>
    %288 = arith.andi %285, %287 : vector<64x64xi1>
    %cst_101 = arith.constant 0x7F800000 : f32
    %289 = vector.broadcast %cst_101 : f32 to vector<64x64xf32>
    %290 = arith.select %288, %289, %256 : vector<64x64xi1>, vector<64x64xf32>
    %cst_102 = arith.constant dense<0x7F800000> : vector<64xf32>
    %291 = vector.multi_reduction <minimumf>, %283, %cst_102 [1] : vector<64x16xf32> to vector<64xf32>
    %292 = vector.shape_cast %291 : vector<64xf32> to vector<64x1xf32>
    %cst_103 = arith.constant dense<0x7F800000> : vector<64xf32>
    %293 = vector.multi_reduction <minimumf>, %290, %cst_103 [1] : vector<64x64xf32> to vector<64xf32>
    %294 = vector.shape_cast %293 : vector<64xf32> to vector<64x1xf32>
    %295 = arith.minimumf %292, %294 : vector<64x1xf32>
    %296 = vector.broadcast %295 : vector<64x1xf32> to vector<64x16xf32>
    %297 = arith.cmpf oeq, %283, %296 : vector<64x16xf32>
    %cst_104 = arith.constant 1.000000e+09 : f32
    %298 = vector.broadcast %cst_104 : f32 to vector<64x16xf32>
    %299 = arith.select %297, %18, %298 : vector<64x16xi1>, vector<64x16xf32>
    %cst_105 = arith.constant dense<0x7F800000> : vector<64xf32>
    %300 = vector.multi_reduction <minimumf>, %299, %cst_105 [1] : vector<64x16xf32> to vector<64xf32>
    %301 = vector.shape_cast %300 : vector<64xf32> to vector<64x1xf32>
    %302 = vector.broadcast %295 : vector<64x1xf32> to vector<64x64xf32>
    %303 = arith.cmpf oeq, %290, %302 : vector<64x64xf32>
    %cst_106 = arith.constant 1.000000e+09 : f32
    %304 = vector.broadcast %cst_106 : f32 to vector<64x64xf32>
    %305 = arith.select %303, %16, %304 : vector<64x64xi1>, vector<64x64xf32>
    %cst_107 = arith.constant dense<0x7F800000> : vector<64xf32>
    %306 = vector.multi_reduction <minimumf>, %305, %cst_107 [1] : vector<64x64xf32> to vector<64xf32>
    %307 = vector.shape_cast %306 : vector<64xf32> to vector<64x1xf32>
    %308 = arith.minimumf %301, %307 : vector<64x1xf32>
    %c0_108 = arith.constant 0 : index
    %c8 = arith.constant 8 : index
    %309 = vector.load %arg7[%c0_108, %c8] : memref<64x16xf32, #tpu.memory_space<vmem>>, vector<64x1xf32>
    tpu.vector_store %arg7[%c0_108, %c8], %295 {strides = array<i32>} : memref<64x16xf32, #tpu.memory_space<vmem>>, vector<64x1xf32>,
    %c0_109 = arith.constant 0 : index
    %c8_110 = arith.constant 8 : index
    %310 = vector.load %arg8[%c0_109, %c8_110] : memref<64x16xf32, #tpu.memory_space<vmem>>, vector<64x1xf32>
    tpu.vector_store %arg8[%c0_109, %c8_110], %308 {strides = array<i32>} : memref<64x16xf32, #tpu.memory_space<vmem>>, vector<64x1xf32>,
    %311 = vector.broadcast %295 : vector<64x1xf32> to vector<64x16xf32>
    %312 = arith.cmpf oeq, %283, %311 : vector<64x16xf32>
    %313 = vector.broadcast %308 : vector<64x1xf32> to vector<64x16xf32>
    %314 = arith.cmpf oeq, %18, %313 : vector<64x16xf32>
    %315 = arith.andi %312, %314 : vector<64x16xi1>
    %cst_111 = arith.constant 0x7F800000 : f32
    %316 = vector.broadcast %cst_111 : f32 to vector<64x16xf32>
    %317 = arith.select %315, %316, %283 : vector<64x16xi1>, vector<64x16xf32>
    %318 = vector.broadcast %295 : vector<64x1xf32> to vector<64x64xf32>
    %319 = arith.cmpf oeq, %290, %318 : vector<64x64xf32>
    %320 = vector.broadcast %308 : vector<64x1xf32> to vector<64x64xf32>
    %321 = arith.cmpf oeq, %16, %320 : vector<64x64xf32>
    %322 = arith.andi %319, %321 : vector<64x64xi1>
    %cst_112 = arith.constant 0x7F800000 : f32
    %323 = vector.broadcast %cst_112 : f32 to vector<64x64xf32>
    %324 = arith.select %322, %323, %290 : vector<64x64xi1>, vector<64x64xf32>
    %cst_113 = arith.constant dense<0x7F800000> : vector<64xf32>
    %325 = vector.multi_reduction <minimumf>, %317, %cst_113 [1] : vector<64x16xf32> to vector<64xf32>
    %326 = vector.shape_cast %325 : vector<64xf32> to vector<64x1xf32>
    %cst_114 = arith.constant dense<0x7F800000> : vector<64xf32>
    %327 = vector.multi_reduction <minimumf>, %324, %cst_114 [1] : vector<64x64xf32> to vector<64xf32>
    %328 = vector.shape_cast %327 : vector<64xf32> to vector<64x1xf32>
    %329 = arith.minimumf %326, %328 : vector<64x1xf32>
    %330 = vector.broadcast %329 : vector<64x1xf32> to vector<64x16xf32>
    %331 = arith.cmpf oeq, %317, %330 : vector<64x16xf32>
    %cst_115 = arith.constant 1.000000e+09 : f32
    %332 = vector.broadcast %cst_115 : f32 to vector<64x16xf32>
    %333 = arith.select %331, %18, %332 : vector<64x16xi1>, vector<64x16xf32>
    %cst_116 = arith.constant dense<0x7F800000> : vector<64xf32>
    %334 = vector.multi_reduction <minimumf>, %333, %cst_116 [1] : vector<64x16xf32> to vector<64xf32>
    %335 = vector.shape_cast %334 : vector<64xf32> to vector<64x1xf32>
    %336 = vector.broadcast %329 : vector<64x1xf32> to vector<64x64xf32>
    %337 = arith.cmpf oeq, %324, %336 : vector<64x64xf32>
    %cst_117 = arith.constant 1.000000e+09 : f32
    %338 = vector.broadcast %cst_117 : f32 to vector<64x64xf32>
    %339 = arith.select %337, %16, %338 : vector<64x64xi1>, vector<64x64xf32>
    %cst_118 = arith.constant dense<0x7F800000> : vector<64xf32>
    %340 = vector.multi_reduction <minimumf>, %339, %cst_118 [1] : vector<64x64xf32> to vector<64xf32>
    %341 = vector.shape_cast %340 : vector<64xf32> to vector<64x1xf32>
    %342 = arith.minimumf %335, %341 : vector<64x1xf32>
    %c0_119 = arith.constant 0 : index
    %c9 = arith.constant 9 : index
    %343 = vector.load %arg7[%c0_119, %c9] : memref<64x16xf32, #tpu.memory_space<vmem>>, vector<64x1xf32>
    tpu.vector_store %arg7[%c0_119, %c9], %329 {strides = array<i32>} : memref<64x16xf32, #tpu.memory_space<vmem>>, vector<64x1xf32>,
    %c0_120 = arith.constant 0 : index
    %c9_121 = arith.constant 9 : index
    %344 = vector.load %arg8[%c0_120, %c9_121] : memref<64x16xf32, #tpu.memory_space<vmem>>, vector<64x1xf32>
    tpu.vector_store %arg8[%c0_120, %c9_121], %342 {strides = array<i32>} : memref<64x16xf32, #tpu.memory_space<vmem>>, vector<64x1xf32>,
    %345 = vector.broadcast %329 : vector<64x1xf32> to vector<64x16xf32>
    %346 = arith.cmpf oeq, %317, %345 : vector<64x16xf32>
    %347 = vector.broadcast %342 : vector<64x1xf32> to vector<64x16xf32>
    %348 = arith.cmpf oeq, %18, %347 : vector<64x16xf32>
    %349 = arith.andi %346, %348 : vector<64x16xi1>
    %cst_122 = arith.constant 0x7F800000 : f32
    %350 = vector.broadcast %cst_122 : f32 to vector<64x16xf32>
    %351 = arith.select %349, %350, %317 : vector<64x16xi1>, vector<64x16xf32>
    %352 = vector.broadcast %329 : vector<64x1xf32> to vector<64x64xf32>
    %353 = arith.cmpf oeq, %324, %352 : vector<64x64xf32>
    %354 = vector.broadcast %342 : vector<64x1xf32> to vector<64x64xf32>
    %355 = arith.cmpf oeq, %16, %354 : vector<64x64xf32>
    %356 = arith.andi %353, %355 : vector<64x64xi1>
    %cst_123 = arith.constant 0x7F800000 : f32
    %357 = vector.broadcast %cst_123 : f32 to vector<64x64xf32>
    %358 = arith.select %356, %357, %324 : vector<64x64xi1>, vector<64x64xf32>
    %cst_124 = arith.constant dense<0x7F800000> : vector<64xf32>
    %359 = vector.multi_reduction <minimumf>, %351, %cst_124 [1] : vector<64x16xf32> to vector<64xf32>
    %360 = vector.shape_cast %359 : vector<64xf32> to vector<64x1xf32>
    %cst_125 = arith.constant dense<0x7F800000> : vector<64xf32>
    %361 = vector.multi_reduction <minimumf>, %358, %cst_125 [1] : vector<64x64xf32> to vector<64xf32>
    %362 = vector.shape_cast %361 : vector<64xf32> to vector<64x1xf32>
    %363 = arith.minimumf %360, %362 : vector<64x1xf32>
    %364 = vector.broadcast %363 : vector<64x1xf32> to vector<64x16xf32>
    %365 = arith.cmpf oeq, %351, %364 : vector<64x16xf32>
    %cst_126 = arith.constant 1.000000e+09 : f32
    %366 = vector.broadcast %cst_126 : f32 to vector<64x16xf32>
    %367 = arith.select %365, %18, %366 : vector<64x16xi1>, vector<64x16xf32>
    %cst_127 = arith.constant dense<0x7F800000> : vector<64xf32>
    %368 = vector.multi_reduction <minimumf>, %367, %cst_127 [1] : vector<64x16xf32> to vector<64xf32>
    %369 = vector.shape_cast %368 : vector<64xf32> to vector<64x1xf32>
    %370 = vector.broadcast %363 : vector<64x1xf32> to vector<64x64xf32>
    %371 = arith.cmpf oeq, %358, %370 : vector<64x64xf32>
    %cst_128 = arith.constant 1.000000e+09 : f32
    %372 = vector.broadcast %cst_128 : f32 to vector<64x64xf32>
    %373 = arith.select %371, %16, %372 : vector<64x64xi1>, vector<64x64xf32>
    %cst_129 = arith.constant dense<0x7F800000> : vector<64xf32>
    %374 = vector.multi_reduction <minimumf>, %373, %cst_129 [1] : vector<64x64xf32> to vector<64xf32>
    %375 = vector.shape_cast %374 : vector<64xf32> to vector<64x1xf32>
    %376 = arith.minimumf %369, %375 : vector<64x1xf32>
    %c0_130 = arith.constant 0 : index
    %c10 = arith.constant 10 : index
    %377 = vector.load %arg7[%c0_130, %c10] : memref<64x16xf32, #tpu.memory_space<vmem>>, vector<64x1xf32>
    tpu.vector_store %arg7[%c0_130, %c10], %363 {strides = array<i32>} : memref<64x16xf32, #tpu.memory_space<vmem>>, vector<64x1xf32>,
    %c0_131 = arith.constant 0 : index
    %c10_132 = arith.constant 10 : index
    %378 = vector.load %arg8[%c0_131, %c10_132] : memref<64x16xf32, #tpu.memory_space<vmem>>, vector<64x1xf32>
    tpu.vector_store %arg8[%c0_131, %c10_132], %376 {strides = array<i32>} : memref<64x16xf32, #tpu.memory_space<vmem>>, vector<64x1xf32>,
    %379 = vector.broadcast %363 : vector<64x1xf32> to vector<64x16xf32>
    %380 = arith.cmpf oeq, %351, %379 : vector<64x16xf32>
    %381 = vector.broadcast %376 : vector<64x1xf32> to vector<64x16xf32>
    %382 = arith.cmpf oeq, %18, %381 : vector<64x16xf32>
    %383 = arith.andi %380, %382 : vector<64x16xi1>
    %cst_133 = arith.constant 0x7F800000 : f32
    %384 = vector.broadcast %cst_133 : f32 to vector<64x16xf32>
    %385 = arith.select %383, %384, %351 : vector<64x16xi1>, vector<64x16xf32>
    %386 = vector.broadcast %363 : vector<64x1xf32> to vector<64x64xf32>
    %387 = arith.cmpf oeq, %358, %386 : vector<64x64xf32>
    %388 = vector.broadcast %376 : vector<64x1xf32> to vector<64x64xf32>
    %389 = arith.cmpf oeq, %16, %388 : vector<64x64xf32>
    %390 = arith.andi %387, %389 : vector<64x64xi1>
    %cst_134 = arith.constant 0x7F800000 : f32
    %391 = vector.broadcast %cst_134 : f32 to vector<64x64xf32>
    %392 = arith.select %390, %391, %358 : vector<64x64xi1>, vector<64x64xf32>
    %cst_135 = arith.constant dense<0x7F800000> : vector<64xf32>
    %393 = vector.multi_reduction <minimumf>, %385, %cst_135 [1] : vector<64x16xf32> to vector<64xf32>
    %394 = vector.shape_cast %393 : vector<64xf32> to vector<64x1xf32>
    %cst_136 = arith.constant dense<0x7F800000> : vector<64xf32>
    %395 = vector.multi_reduction <minimumf>, %392, %cst_136 [1] : vector<64x64xf32> to vector<64xf32>
    %396 = vector.shape_cast %395 : vector<64xf32> to vector<64x1xf32>
    %397 = arith.minimumf %394, %396 : vector<64x1xf32>
    %398 = vector.broadcast %397 : vector<64x1xf32> to vector<64x16xf32>
    %399 = arith.cmpf oeq, %385, %398 : vector<64x16xf32>
    %cst_137 = arith.constant 1.000000e+09 : f32
    %400 = vector.broadcast %cst_137 : f32 to vector<64x16xf32>
    %401 = arith.select %399, %18, %400 : vector<64x16xi1>, vector<64x16xf32>
    %cst_138 = arith.constant dense<0x7F800000> : vector<64xf32>
    %402 = vector.multi_reduction <minimumf>, %401, %cst_138 [1] : vector<64x16xf32> to vector<64xf32>
    %403 = vector.shape_cast %402 : vector<64xf32> to vector<64x1xf32>
    %404 = vector.broadcast %397 : vector<64x1xf32> to vector<64x64xf32>
    %405 = arith.cmpf oeq, %392, %404 : vector<64x64xf32>
    %cst_139 = arith.constant 1.000000e+09 : f32
    %406 = vector.broadcast %cst_139 : f32 to vector<64x64xf32>
    %407 = arith.select %405, %16, %406 : vector<64x64xi1>, vector<64x64xf32>
    %cst_140 = arith.constant dense<0x7F800000> : vector<64xf32>
    %408 = vector.multi_reduction <minimumf>, %407, %cst_140 [1] : vector<64x64xf32> to vector<64xf32>
    %409 = vector.shape_cast %408 : vector<64xf32> to vector<64x1xf32>
    %410 = arith.minimumf %403, %409 : vector<64x1xf32>
    %c0_141 = arith.constant 0 : index
    %c11 = arith.constant 11 : index
    %411 = vector.load %arg7[%c0_141, %c11] : memref<64x16xf32, #tpu.memory_space<vmem>>, vector<64x1xf32>
    tpu.vector_store %arg7[%c0_141, %c11], %397 {strides = array<i32>} : memref<64x16xf32, #tpu.memory_space<vmem>>, vector<64x1xf32>,
    %c0_142 = arith.constant 0 : index
    %c11_143 = arith.constant 11 : index
    %412 = vector.load %arg8[%c0_142, %c11_143] : memref<64x16xf32, #tpu.memory_space<vmem>>, vector<64x1xf32>
    tpu.vector_store %arg8[%c0_142, %c11_143], %410 {strides = array<i32>} : memref<64x16xf32, #tpu.memory_space<vmem>>, vector<64x1xf32>,
    %413 = vector.broadcast %397 : vector<64x1xf32> to vector<64x16xf32>
    %414 = arith.cmpf oeq, %385, %413 : vector<64x16xf32>
    %415 = vector.broadcast %410 : vector<64x1xf32> to vector<64x16xf32>
    %416 = arith.cmpf oeq, %18, %415 : vector<64x16xf32>
    %417 = arith.andi %414, %416 : vector<64x16xi1>
    %cst_144 = arith.constant 0x7F800000 : f32
    %418 = vector.broadcast %cst_144 : f32 to vector<64x16xf32>
    %419 = arith.select %417, %418, %385 : vector<64x16xi1>, vector<64x16xf32>
    %420 = vector.broadcast %397 : vector<64x1xf32> to vector<64x64xf32>
    %421 = arith.cmpf oeq, %392, %420 : vector<64x64xf32>
    %422 = vector.broadcast %410 : vector<64x1xf32> to vector<64x64xf32>
    %423 = arith.cmpf oeq, %16, %422 : vector<64x64xf32>
    %424 = arith.andi %421, %423 : vector<64x64xi1>
    %cst_145 = arith.constant 0x7F800000 : f32
    %425 = vector.broadcast %cst_145 : f32 to vector<64x64xf32>
    %426 = arith.select %424, %425, %392 : vector<64x64xi1>, vector<64x64xf32>
    %cst_146 = arith.constant dense<0x7F800000> : vector<64xf32>
    %427 = vector.multi_reduction <minimumf>, %419, %cst_146 [1] : vector<64x16xf32> to vector<64xf32>
    %428 = vector.shape_cast %427 : vector<64xf32> to vector<64x1xf32>
    %cst_147 = arith.constant dense<0x7F800000> : vector<64xf32>
    %429 = vector.multi_reduction <minimumf>, %426, %cst_147 [1] : vector<64x64xf32> to vector<64xf32>
    %430 = vector.shape_cast %429 : vector<64xf32> to vector<64x1xf32>
    %431 = arith.minimumf %428, %430 : vector<64x1xf32>
    %432 = vector.broadcast %431 : vector<64x1xf32> to vector<64x16xf32>
    %433 = arith.cmpf oeq, %419, %432 : vector<64x16xf32>
    %cst_148 = arith.constant 1.000000e+09 : f32
    %434 = vector.broadcast %cst_148 : f32 to vector<64x16xf32>
    %435 = arith.select %433, %18, %434 : vector<64x16xi1>, vector<64x16xf32>
    %cst_149 = arith.constant dense<0x7F800000> : vector<64xf32>
    %436 = vector.multi_reduction <minimumf>, %435, %cst_149 [1] : vector<64x16xf32> to vector<64xf32>
    %437 = vector.shape_cast %436 : vector<64xf32> to vector<64x1xf32>
    %438 = vector.broadcast %431 : vector<64x1xf32> to vector<64x64xf32>
    %439 = arith.cmpf oeq, %426, %438 : vector<64x64xf32>
    %cst_150 = arith.constant 1.000000e+09 : f32
    %440 = vector.broadcast %cst_150 : f32 to vector<64x64xf32>
    %441 = arith.select %439, %16, %440 : vector<64x64xi1>, vector<64x64xf32>
    %cst_151 = arith.constant dense<0x7F800000> : vector<64xf32>
    %442 = vector.multi_reduction <minimumf>, %441, %cst_151 [1] : vector<64x64xf32> to vector<64xf32>
    %443 = vector.shape_cast %442 : vector<64xf32> to vector<64x1xf32>
    %444 = arith.minimumf %437, %443 : vector<64x1xf32>
    %c0_152 = arith.constant 0 : index
    %c12 = arith.constant 12 : index
    %445 = vector.load %arg7[%c0_152, %c12] : memref<64x16xf32, #tpu.memory_space<vmem>>, vector<64x1xf32>
    tpu.vector_store %arg7[%c0_152, %c12], %431 {strides = array<i32>} : memref<64x16xf32, #tpu.memory_space<vmem>>, vector<64x1xf32>,
    %c0_153 = arith.constant 0 : index
    %c12_154 = arith.constant 12 : index
    %446 = vector.load %arg8[%c0_153, %c12_154] : memref<64x16xf32, #tpu.memory_space<vmem>>, vector<64x1xf32>
    tpu.vector_store %arg8[%c0_153, %c12_154], %444 {strides = array<i32>} : memref<64x16xf32, #tpu.memory_space<vmem>>, vector<64x1xf32>,
    %447 = vector.broadcast %431 : vector<64x1xf32> to vector<64x16xf32>
    %448 = arith.cmpf oeq, %419, %447 : vector<64x16xf32>
    %449 = vector.broadcast %444 : vector<64x1xf32> to vector<64x16xf32>
    %450 = arith.cmpf oeq, %18, %449 : vector<64x16xf32>
    %451 = arith.andi %448, %450 : vector<64x16xi1>
    %cst_155 = arith.constant 0x7F800000 : f32
    %452 = vector.broadcast %cst_155 : f32 to vector<64x16xf32>
    %453 = arith.select %451, %452, %419 : vector<64x16xi1>, vector<64x16xf32>
    %454 = vector.broadcast %431 : vector<64x1xf32> to vector<64x64xf32>
    %455 = arith.cmpf oeq, %426, %454 : vector<64x64xf32>
    %456 = vector.broadcast %444 : vector<64x1xf32> to vector<64x64xf32>
    %457 = arith.cmpf oeq, %16, %456 : vector<64x64xf32>
    %458 = arith.andi %455, %457 : vector<64x64xi1>
    %cst_156 = arith.constant 0x7F800000 : f32
    %459 = vector.broadcast %cst_156 : f32 to vector<64x64xf32>
    %460 = arith.select %458, %459, %426 : vector<64x64xi1>, vector<64x64xf32>
    %cst_157 = arith.constant dense<0x7F800000> : vector<64xf32>
    %461 = vector.multi_reduction <minimumf>, %453, %cst_157 [1] : vector<64x16xf32> to vector<64xf32>
    %462 = vector.shape_cast %461 : vector<64xf32> to vector<64x1xf32>
    %cst_158 = arith.constant dense<0x7F800000> : vector<64xf32>
    %463 = vector.multi_reduction <minimumf>, %460, %cst_158 [1] : vector<64x64xf32> to vector<64xf32>
    %464 = vector.shape_cast %463 : vector<64xf32> to vector<64x1xf32>
    %465 = arith.minimumf %462, %464 : vector<64x1xf32>
    %466 = vector.broadcast %465 : vector<64x1xf32> to vector<64x16xf32>
    %467 = arith.cmpf oeq, %453, %466 : vector<64x16xf32>
    %cst_159 = arith.constant 1.000000e+09 : f32
    %468 = vector.broadcast %cst_159 : f32 to vector<64x16xf32>
    %469 = arith.select %467, %18, %468 : vector<64x16xi1>, vector<64x16xf32>
    %cst_160 = arith.constant dense<0x7F800000> : vector<64xf32>
    %470 = vector.multi_reduction <minimumf>, %469, %cst_160 [1] : vector<64x16xf32> to vector<64xf32>
    %471 = vector.shape_cast %470 : vector<64xf32> to vector<64x1xf32>
    %472 = vector.broadcast %465 : vector<64x1xf32> to vector<64x64xf32>
    %473 = arith.cmpf oeq, %460, %472 : vector<64x64xf32>
    %cst_161 = arith.constant 1.000000e+09 : f32
    %474 = vector.broadcast %cst_161 : f32 to vector<64x64xf32>
    %475 = arith.select %473, %16, %474 : vector<64x64xi1>, vector<64x64xf32>
    %cst_162 = arith.constant dense<0x7F800000> : vector<64xf32>
    %476 = vector.multi_reduction <minimumf>, %475, %cst_162 [1] : vector<64x64xf32> to vector<64xf32>
    %477 = vector.shape_cast %476 : vector<64xf32> to vector<64x1xf32>
    %478 = arith.minimumf %471, %477 : vector<64x1xf32>
    %c0_163 = arith.constant 0 : index
    %c13 = arith.constant 13 : index
    %479 = vector.load %arg7[%c0_163, %c13] : memref<64x16xf32, #tpu.memory_space<vmem>>, vector<64x1xf32>
    tpu.vector_store %arg7[%c0_163, %c13], %465 {strides = array<i32>} : memref<64x16xf32, #tpu.memory_space<vmem>>, vector<64x1xf32>,
    %c0_164 = arith.constant 0 : index
    %c13_165 = arith.constant 13 : index
    %480 = vector.load %arg8[%c0_164, %c13_165] : memref<64x16xf32, #tpu.memory_space<vmem>>, vector<64x1xf32>
    tpu.vector_store %arg8[%c0_164, %c13_165], %478 {strides = array<i32>} : memref<64x16xf32, #tpu.memory_space<vmem>>, vector<64x1xf32>,
    %481 = vector.broadcast %465 : vector<64x1xf32> to vector<64x16xf32>
    %482 = arith.cmpf oeq, %453, %481 : vector<64x16xf32>
    %483 = vector.broadcast %478 : vector<64x1xf32> to vector<64x16xf32>
    %484 = arith.cmpf oeq, %18, %483 : vector<64x16xf32>
    %485 = arith.andi %482, %484 : vector<64x16xi1>
    %cst_166 = arith.constant 0x7F800000 : f32
    %486 = vector.broadcast %cst_166 : f32 to vector<64x16xf32>
    %487 = arith.select %485, %486, %453 : vector<64x16xi1>, vector<64x16xf32>
    %488 = vector.broadcast %465 : vector<64x1xf32> to vector<64x64xf32>
    %489 = arith.cmpf oeq, %460, %488 : vector<64x64xf32>
    %490 = vector.broadcast %478 : vector<64x1xf32> to vector<64x64xf32>
    %491 = arith.cmpf oeq, %16, %490 : vector<64x64xf32>
    %492 = arith.andi %489, %491 : vector<64x64xi1>
    %cst_167 = arith.constant 0x7F800000 : f32
    %493 = vector.broadcast %cst_167 : f32 to vector<64x64xf32>
    %494 = arith.select %492, %493, %460 : vector<64x64xi1>, vector<64x64xf32>
    %cst_168 = arith.constant dense<0x7F800000> : vector<64xf32>
    %495 = vector.multi_reduction <minimumf>, %487, %cst_168 [1] : vector<64x16xf32> to vector<64xf32>
    %496 = vector.shape_cast %495 : vector<64xf32> to vector<64x1xf32>
    %cst_169 = arith.constant dense<0x7F800000> : vector<64xf32>
    %497 = vector.multi_reduction <minimumf>, %494, %cst_169 [1] : vector<64x64xf32> to vector<64xf32>
    %498 = vector.shape_cast %497 : vector<64xf32> to vector<64x1xf32>
    %499 = arith.minimumf %496, %498 : vector<64x1xf32>
    %500 = vector.broadcast %499 : vector<64x1xf32> to vector<64x16xf32>
    %501 = arith.cmpf oeq, %487, %500 : vector<64x16xf32>
    %cst_170 = arith.constant 1.000000e+09 : f32
    %502 = vector.broadcast %cst_170 : f32 to vector<64x16xf32>
    %503 = arith.select %501, %18, %502 : vector<64x16xi1>, vector<64x16xf32>
    %cst_171 = arith.constant dense<0x7F800000> : vector<64xf32>
    %504 = vector.multi_reduction <minimumf>, %503, %cst_171 [1] : vector<64x16xf32> to vector<64xf32>
    %505 = vector.shape_cast %504 : vector<64xf32> to vector<64x1xf32>
    %506 = vector.broadcast %499 : vector<64x1xf32> to vector<64x64xf32>
    %507 = arith.cmpf oeq, %494, %506 : vector<64x64xf32>
    %cst_172 = arith.constant 1.000000e+09 : f32
    %508 = vector.broadcast %cst_172 : f32 to vector<64x64xf32>
    %509 = arith.select %507, %16, %508 : vector<64x64xi1>, vector<64x64xf32>
    %cst_173 = arith.constant dense<0x7F800000> : vector<64xf32>
    %510 = vector.multi_reduction <minimumf>, %509, %cst_173 [1] : vector<64x64xf32> to vector<64xf32>
    %511 = vector.shape_cast %510 : vector<64xf32> to vector<64x1xf32>
    %512 = arith.minimumf %505, %511 : vector<64x1xf32>
    %c0_174 = arith.constant 0 : index
    %c14 = arith.constant 14 : index
    %513 = vector.load %arg7[%c0_174, %c14] : memref<64x16xf32, #tpu.memory_space<vmem>>, vector<64x1xf32>
    tpu.vector_store %arg7[%c0_174, %c14], %499 {strides = array<i32>} : memref<64x16xf32, #tpu.memory_space<vmem>>, vector<64x1xf32>,
    %c0_175 = arith.constant 0 : index
    %c14_176 = arith.constant 14 : index
    %514 = vector.load %arg8[%c0_175, %c14_176] : memref<64x16xf32, #tpu.memory_space<vmem>>, vector<64x1xf32>
    tpu.vector_store %arg8[%c0_175, %c14_176], %512 {strides = array<i32>} : memref<64x16xf32, #tpu.memory_space<vmem>>, vector<64x1xf32>,
    %515 = vector.broadcast %499 : vector<64x1xf32> to vector<64x16xf32>
    %516 = arith.cmpf oeq, %487, %515 : vector<64x16xf32>
    %517 = vector.broadcast %512 : vector<64x1xf32> to vector<64x16xf32>
    %518 = arith.cmpf oeq, %18, %517 : vector<64x16xf32>
    %519 = arith.andi %516, %518 : vector<64x16xi1>
    %cst_177 = arith.constant 0x7F800000 : f32
    %520 = vector.broadcast %cst_177 : f32 to vector<64x16xf32>
    %521 = arith.select %519, %520, %487 : vector<64x16xi1>, vector<64x16xf32>
    %522 = vector.broadcast %499 : vector<64x1xf32> to vector<64x64xf32>
    %523 = arith.cmpf oeq, %494, %522 : vector<64x64xf32>
    %524 = vector.broadcast %512 : vector<64x1xf32> to vector<64x64xf32>
    %525 = arith.cmpf oeq, %16, %524 : vector<64x64xf32>
    %526 = arith.andi %523, %525 : vector<64x64xi1>
    %cst_178 = arith.constant 0x7F800000 : f32
    %527 = vector.broadcast %cst_178 : f32 to vector<64x64xf32>
    %528 = arith.select %526, %527, %494 : vector<64x64xi1>, vector<64x64xf32>
    %cst_179 = arith.constant dense<0x7F800000> : vector<64xf32>
    %529 = vector.multi_reduction <minimumf>, %521, %cst_179 [1] : vector<64x16xf32> to vector<64xf32>
    %530 = vector.shape_cast %529 : vector<64xf32> to vector<64x1xf32>
    %cst_180 = arith.constant dense<0x7F800000> : vector<64xf32>
    %531 = vector.multi_reduction <minimumf>, %528, %cst_180 [1] : vector<64x64xf32> to vector<64xf32>
    %532 = vector.shape_cast %531 : vector<64xf32> to vector<64x1xf32>
    %533 = arith.minimumf %530, %532 : vector<64x1xf32>
    %534 = vector.broadcast %533 : vector<64x1xf32> to vector<64x16xf32>
    %535 = arith.cmpf oeq, %521, %534 : vector<64x16xf32>
    %cst_181 = arith.constant 1.000000e+09 : f32
    %536 = vector.broadcast %cst_181 : f32 to vector<64x16xf32>
    %537 = arith.select %535, %18, %536 : vector<64x16xi1>, vector<64x16xf32>
    %cst_182 = arith.constant dense<0x7F800000> : vector<64xf32>
    %538 = vector.multi_reduction <minimumf>, %537, %cst_182 [1] : vector<64x16xf32> to vector<64xf32>
    %539 = vector.shape_cast %538 : vector<64xf32> to vector<64x1xf32>
    %540 = vector.broadcast %533 : vector<64x1xf32> to vector<64x64xf32>
    %541 = arith.cmpf oeq, %528, %540 : vector<64x64xf32>
    %cst_183 = arith.constant 1.000000e+09 : f32
    %542 = vector.broadcast %cst_183 : f32 to vector<64x64xf32>
    %543 = arith.select %541, %16, %542 : vector<64x64xi1>, vector<64x64xf32>
    %cst_184 = arith.constant dense<0x7F800000> : vector<64xf32>
    %544 = vector.multi_reduction <minimumf>, %543, %cst_184 [1] : vector<64x64xf32> to vector<64xf32>
    %545 = vector.shape_cast %544 : vector<64xf32> to vector<64x1xf32>
    %546 = arith.minimumf %539, %545 : vector<64x1xf32>
    %c0_185 = arith.constant 0 : index
    %c15 = arith.constant 15 : index
    %547 = vector.load %arg7[%c0_185, %c15] : memref<64x16xf32, #tpu.memory_space<vmem>>, vector<64x1xf32>
    tpu.vector_store %arg7[%c0_185, %c15], %533 {strides = array<i32>} : memref<64x16xf32, #tpu.memory_space<vmem>>, vector<64x1xf32>,
    %c0_186 = arith.constant 0 : index
    %c15_187 = arith.constant 15 : index
    %548 = vector.load %arg8[%c0_186, %c15_187] : memref<64x16xf32, #tpu.memory_space<vmem>>, vector<64x1xf32>
    tpu.vector_store %arg8[%c0_186, %c15_187], %546 {strides = array<i32>} : memref<64x16xf32, #tpu.memory_space<vmem>>, vector<64x1xf32>,
    %c0_i32_188 = arith.constant 0 : i32
    %549 = arith.cmpi eq, %arg2, %c0_i32_188 : i32
    %550 = arith.extui %549 : i1 to i32
    %c0_i32_189 = arith.constant 0 : i32
    %551 = arith.cmpi ne, %550, %c0_i32_189 : i32
    scf.if %551 {
      %c0_190 = arith.constant 0 : index
      %c0_191 = arith.constant 0 : index
      %552 = vector.load %arg8[%c0_190, %c0_191] : memref<64x16xf32, #tpu.memory_space<vmem>>, vector<64x16xf32>
      %553 = arith.fptosi %552 : vector<64x16xf32> to vector<64x16xi32>
      %c0_192 = arith.constant 0 : index
      %c0_193 = arith.constant 0 : index
      %c0_194 = arith.constant 0 : index
      %554 = vector.load %arg6[%c0_192, %c0_193, %c0_194] : memref<1x64x16xi32, #tpu.memory_space<vmem>>, vector<1x64x16xi32>
      %555 = vector.shape_cast %554 : vector<1x64x16xi32> to vector<64x16xi32>
      %556 = vector.shape_cast %553 : vector<64x16xi32> to vector<1x64x16xi32>
      tpu.vector_store %arg6[%c0_192, %c0_193, %c0_194], %556 {strides = array<i32>} : memref<1x64x16xi32, #tpu.memory_space<vmem>>, vector<1x64x16xi32>,
    } else {
    }
    return
  }
  func.func @transform_0(%arg0: i32, %arg1: i32, %arg2: i32) -> (i32, i32, i32) {
    %c0_i32 = arith.constant 0 : i32
    %c0_i32_0 = arith.constant 0 : i32
    return %arg0, %arg1, %c0_i32 : i32, i32, i32
  }
  func.func @transform_1(%arg0: i32, %arg1: i32, %arg2: i32) -> (i32, i32, i32) {
    %c0_i32 = arith.constant 0 : i32
    %c0_i32_0 = arith.constant 0 : i32
    return %arg0, %arg2, %c0_i32 : i32, i32, i32
  }
  func.func @transform_2(%arg0: i32, %arg1: i32, %arg2: i32) -> (i32, i32, i32) {
    %c0_i32 = arith.constant 0 : i32
    %c0_i32_0 = arith.constant 0 : i32
    return %arg0, %c0_i32, %arg2 : i32, i32, i32
  }
  func.func @transform_3(%arg0: i32, %arg1: i32, %arg2: i32) -> (i32, i32, i32) {
    %c0_i32 = arith.constant 0 : i32
    %c0_i32_0 = arith.constant 0 : i32
    return %arg0, %arg1, %c0_i32 : i32, i32, i32
  }
}

</mosaic_0001>

<llo_original>
// kernel: tpu_custom_call.1
$region0: #{tpu_custom_call.1}
  #allocation0 [shape = 'u32[]', space=smem, size = 0x4, offset = 0x4, fixed_abs, tag = 'smem constant byte address 0x4 - core index']
  #allocation1 [shape = 'u32[144,128]{1,0:T(1,128)}', space=vmem, size = 0x12000, scoped, tag = 'internal scratch']
  #allocation2 [shape = 'f32[64,16]{1,0:T(8,128)}', space=vmem, size = 0x8000, scoped, tag = 'scratch operand']
  #allocation3 [shape = 'f32[64,16]{1,0:T(8,128)}', space=vmem, size = 0x8000, scoped, tag = 'scratch operand']
  %s0 = inlined_call_operand.vmem [shape: f32[2,64,8], index: 0, kind: input, shape index: {}]
  %s1 = inlined_call_operand.vmem [shape: f32[2,64,8], index: 1, kind: input, shape index: {}]
  %s2 = inlined_call_operand.vmem [shape: f32[2,1,64], index: 2, kind: input, shape index: {}]
  %s3 = inlined_call_operand.vmem [shape: s32[2,64,16], index: 3, kind: output, shape index: {}]
  %s4 = sld [smem:[#allocation0]]
  $region53: #{tpu_custom_call.1} parent=0
    _
  %s6 = ssub.s32 1, %s4
  %s7 = scalar_select 0, %s6, %s4
  loop: start=0, step=1, limit=4
  $region2: #{tpu_custom_call.1} parent=0 // loop_pre_header
    _
  $region3: #{tpu_custom_call.1} parent=0 // loop_header
    %s9 = sphi 0, %s13
    %p10 = scmp.ge.s32.totalorder %s9, 4
    %s16 = sphi 0, %s35
    %s17 = sphi 0, %s31
    %s18 = sphi 0, %s27
    %s19 = sphi 0, %s16
    %s20 = sphi 0, %s17
    %s21 = sphi 0, %s18
    %s22 = sphi 0, %s19
    %s23 = sphi 0, %s20
    %s24 = sphi 0, %s21
    %s40 = sphi 0, %s42
    %s43 = sphi 0, %s40
    %s44 = sphi 0, %s43
    %s60 = sphi 0, %s44
    %s68 = sphi 0, %s70
    %s71 = sphi 0, %s68
    %s72 = sphi 0, %s71
    %s88 = sphi 0, %s72
    %s96 = sphi 0, %s98
    %s99 = sphi 0, %s96
    %s100 = sphi 0, %s99
    %s116 = sphi 0, %s100
    %s124 = sphi 0, %s126
    %s127 = sphi 0, %s124
    %s128 = sphi 0, %s127
    %s144 = sphi 0, %s128
  $region4: #{tpu_custom_call.1} parent=0 // loop_header_branch
    %12 = sbr.rel (%p10) target = $region8
  $region5: #{tpu_custom_call.1} parent=0 // loop_body
    %s14 = ssub.s32 %s9, 1
    %s15 = ssub.s32 %s9, 2
    %s25 = sadd.s32 1, %s18
    %p26 = scmp.ge.s32.totalorder %s25, 1
    %s27 = scalar_select %p26, 0, %s25
    %s28 = sadd.s32 1, %s17
    %s29 = scalar_select %p26, %s28, %s17
    %p30 = scmp.ge.s32.totalorder %s29, 1
    %s31 = scalar_select %p30, 0, %s29
    %s32 = sadd.s32 1, %s16
    %s33 = scalar_select %p30, %s32, %s16
    %p34 = scmp.ge.s32.totalorder %s33, 2
    %s35 = scalar_select %p34, 0, %s33
    %s36 = ssub.s32 %s16, %s35
    %s37 = ssub.s32 %s17, %s31
    %s38 = sor.u32 %s36, %s37
    %p39 = scmp.eq.s32.totalorder %s38, 0
    %s41 = sadd.s32 %s40, 1
    %s42 = scalar_select %p39, %s40, %s41
    %p45 = pneg %p39
    %p46 = scmp.eq.s32.totalorder %s9, 1
    %p47 = por %p45, %p46
    %p48 = scmp.ne.s32.totalorder %s40, %s43
    %p49 = scmp.eq.s32.totalorder %s9, 0
    %p50 = por %p48, %p49
    %p51 = scmp.ne.s32.totalorder %s40, %s43
    %p52 = scmp.eq.s32.totalorder %s14, 1
    %p53 = por %p51, %p52
    %p54 = scmp.ne.s32.totalorder %s43, %s44
    %p55 = scmp.eq.s32.totalorder %s14, 0
    %p56 = por %p54, %p55
    %p57 = scmp.ne.s32.totalorder %s43, %s44
    %p58 = scmp.eq.s32.totalorder %s15, 1
    %p59 = por %p57, %p58
    %p61 = scmp.ne.s32.totalorder %s44, %s60
    %p62 = scmp.eq.s32.totalorder %s15, 0
    %p63 = por %p61, %p62
    %s64 = ssub.s32 %s16, %s35
    %s65 = ssub.s32 %s18, %s27
    %s66 = sor.u32 %s64, %s65
    %p67 = scmp.eq.s32.totalorder %s66, 0
    %s69 = sadd.s32 %s68, 1
    %s70 = scalar_select %p67, %s68, %s69
    %p73 = pneg %p67
    %p74 = scmp.eq.s32.totalorder %s9, 1
    %p75 = por %p73, %p74
    %p76 = scmp.ne.s32.totalorder %s68, %s71
    %p77 = scmp.eq.s32.totalorder %s9, 0
    %p78 = por %p76, %p77
    %p79 = scmp.ne.s32.totalorder %s68, %s71
    %p80 = scmp.eq.s32.totalorder %s14, 1
    %p81 = por %p79, %p80
    %p82 = scmp.ne.s32.totalorder %s71, %s72
    %p83 = scmp.eq.s32.totalorder %s14, 0
    %p84 = por %p82, %p83
    %p85 = scmp.ne.s32.totalorder %s71, %s72
    %p86 = scmp.eq.s32.totalorder %s15, 1
    %p87 = por %p85, %p86
    %p89 = scmp.ne.s32.totalorder %s72, %s88
    %p90 = scmp.eq.s32.totalorder %s15, 0
    %p91 = por %p89, %p90
    %s92 = ssub.s32 %s16, %s35
    %s93 = ssub.s32 %s18, %s27
    %s94 = sor.u32 %s92, %s93
    %p95 = scmp.eq.s32.totalorder %s94, 0
    %s97 = sadd.s32 %s96, 1
    %s98 = scalar_select %p95, %s96, %s97
    %p101 = pneg %p95
    %p102 = scmp.eq.s32.totalorder %s9, 1
    %p103 = por %p101, %p102
    %p104 = scmp.ne.s32.totalorder %s96, %s99
    %p105 = scmp.eq.s32.totalorder %s9, 0
    %p106 = por %p104, %p105
    %p107 = scmp.ne.s32.totalorder %s96, %s99
    %p108 = scmp.eq.s32.totalorder %s14, 1
    %p109 = por %p107, %p108
    %p110 = scmp.ne.s32.totalorder %s99, %s100
    %p111 = scmp.eq.s32.totalorder %s14, 0
    %p112 = por %p110, %p111
    %p113 = scmp.ne.s32.totalorder %s99, %s100
    %p114 = scmp.eq.s32.totalorder %s15, 1
    %p115 = por %p113, %p114
    %p117 = scmp.ne.s32.totalorder %s100, %s116
    %p118 = scmp.eq.s32.totalorder %s15, 0
    %p119 = por %p117, %p118
    %s120 = ssub.s32 %s16, %s35
    %s121 = ssub.s32 %s17, %s31
    %s122 = sor.u32 %s120, %s121
    %p123 = scmp.eq.s32.totalorder %s122, 0
    %s125 = sadd.s32 %s124, 1
    %s126 = scalar_select %p123, %s124, %s125
    %p129 = pneg %p123
    %p130 = scmp.eq.s32.totalorder %s9, 1
    %p131 = por %p129, %p130
    %p132 = scmp.ne.s32.totalorder %s124, %s127
    %p133 = scmp.eq.s32.totalorder %s9, 0
    %p134 = por %p132, %p133
    %p135 = scmp.ne.s32.totalorder %s124, %s127
    %p136 = scmp.eq.s32.totalorder %s14, 1
    %p137 = por %p135, %p136
    %p138 = scmp.ne.s32.totalorder %s127, %s128
    %p139 = scmp.eq.s32.totalorder %s14, 0
    %p140 = por %p138, %p139
    %p141 = scmp.ne.s32.totalorder %s127, %s128
    %p142 = scmp.eq.s32.totalorder %s15, 1
    %p143 = por %p141, %p142
    %p145 = scmp.ne.s32.totalorder %s128, %s144
    %p146 = scmp.eq.s32.totalorder %s15, 0
    %p147 = por %p145, %p146
    %p148 = scmp.le.s32.totalorder 1, %s9
    %p149 = scmp.lt.s32.totalorder %s9, 3
    %p150 = pnand %p148, %p149
    %p151 = pneg %p150
    // Predicated region
    $region9: #{tpu_custom_call.1} parent=5 // pred_check
      _
    $region10: #{tpu_custom_call.1} parent=5 // pred_check_branch
      %153 = sbr.rel (%p150) target = $region12
    $region11: #{tpu_custom_call.1} parent=5 // pred_region
      %s154 = ssub.s32 %s9, 1
    $region12: #{tpu_custom_call.1} parent=5 // pred_fallthru
      _
    %p155 = scmp.lt.s32.totalorder %s9, 2
    // Predicated region
    $region13: #{tpu_custom_call.1} parent=5 // pred_check
      %p156 = pneg %p155
    $region14: #{tpu_custom_call.1} parent=5 // pred_check_branch
      %158 = sbr.rel (%p156) target = $region16
    $region15: #{tpu_custom_call.1} parent=5 // pred_region
      // Predicated region
      $region17: #{tpu_custom_call.1} parent=15 // pred_check
        %p159 = pneg %p50
      $region18: #{tpu_custom_call.1} parent=15 // pred_check_branch
        %161 = sbr.rel (%p159) target = $region20
      $region19: #{tpu_custom_call.1} parent=15 // pred_region
        %s162 = smul.u32 8, %s17
        %p163 = scmp.lt.s32.totalorder %s16, 1
        %s164 = scalar_select %p163, %s16, 1
        %p165 = scmp.lt.s32.totalorder %s162, 7
        %s166 = scalar_select %p165, %s162, 7
        %s167 = smul.addr %s164, 8
        %s168 = sadd.s32 %s166, %s167
        %s169 = smul.addr %s168, 8
        %s170 = scalar_lea.vmem %s0, %s169
        %s171 = smul.u32 8, %s17
      $region20: #{tpu_custom_call.1} parent=15 // pred_fallthru
        _
      // Predicated region
      $region21: #{tpu_custom_call.1} parent=15 // pred_check
        %p172 = pneg %p78
      $region22: #{tpu_custom_call.1} parent=15 // pred_check_branch
        %174 = sbr.rel (%p172) target = $region24
      $region23: #{tpu_custom_call.1} parent=15 // pred_region
        %s175 = smul.u32 8, %s18
        %p176 = scmp.lt.s32.totalorder %s16, 1
        %s177 = scalar_select %p176, %s16, 1
        %p178 = scmp.lt.s32.totalorder %s175, 7
        %s179 = scalar_select %p178, %s175, 7
        %s180 = smul.addr %s177, 8
        %s181 = sadd.s32 %s179, %s180
        %s182 = smul.addr %s181, 8
        %s183 = scalar_lea.vmem %s1, %s182
        %s184 = smul.u32 8, %s18
      $region24: #{tpu_custom_call.1} parent=15 // pred_fallthru
        _
      // Predicated region
      $region25: #{tpu_custom_call.1} parent=15 // pred_check
        %p185 = pneg %p106
      $region26: #{tpu_custom_call.1} parent=15 // pred_check_branch
        %187 = sbr.rel (%p185) target = $region28
      $region27: #{tpu_custom_call.1} parent=15 // pred_region
        %p188 = scmp.lt.s32.totalorder %s16, 1
        %s189 = scalar_select %p188, %s16, 1
        %p190 = scmp.lt.s32.totalorder %s18, 0
        %s191 = scalar_select %p190, %s18, 0
        %s192 = sadd.s32 %s191, %s189
        %s193 = scalar_lea.vmem %s2, %s192
      $region28: #{tpu_custom_call.1} parent=15 // pred_fallthru
        _
    $region16: #{tpu_custom_call.1} parent=5 // pred_fallthru
      _
    %p194 = scmp.le.s32.totalorder 1, %s9
    %p195 = scmp.lt.s32.totalorder %s9, 3
    %p196 = pnand %p194, %p195
    %p197 = pneg %p196
    // Predicated region
    $region29: #{tpu_custom_call.1} parent=5 // pred_check
      _
    $region30: #{tpu_custom_call.1} parent=5 // pred_check_branch
      %199 = sbr.rel (%p196) target = $region32
    $region31: #{tpu_custom_call.1} parent=5 // pred_region
      %s200 = ssub.s32 %s9, 1
      %s201 = smul.u32 8, %s20
      %p202 = scmp.lt.s32.totalorder %s19, 1
      %s203 = scalar_select %p202, %s19, 1
      %p204 = scmp.lt.s32.totalorder %s201, 7
      %s205 = scalar_select %p204, %s201, 7
      %s206 = smul.addr %s203, 8
      %s207 = sadd.s32 %s205, %s206
      %s208 = smul.addr %s207, 8
      %s209 = scalar_lea.vmem %s0, %s208
      %p210 = pneg %p56
      %p211 = pneg %p53
      %s212 = smul.u32 8, %s21
      %p213 = scmp.lt.s32.totalorder %s19, 1
      %s214 = scalar_select %p213, %s19, 1
      %p215 = scmp.lt.s32.totalorder %s212, 7
      %s216 = scalar_select %p215, %s212, 7
      %s217 = smul.addr %s214, 8
      %s218 = sadd.s32 %s216, %s217
      %s219 = smul.addr %s218, 8
      %s220 = scalar_lea.vmem %s1, %s219
      %p221 = pneg %p84
      %p222 = pneg %p81
      %p223 = scmp.lt.s32.totalorder %s19, 1
      %s224 = scalar_select %p223, %s19, 1
      %p225 = scmp.lt.s32.totalorder %s21, 0
      %s226 = scalar_select %p225, %s21, 0
      %s227 = sadd.s32 %s226, %s224
      %s228 = scalar_lea.vmem %s2, %s227
      %p229 = pneg %p112
      %p230 = pneg %p109
      %p231 = pneg %p140
      %p232 = pneg %p137
      %s233 = smul.u32 8, %s20
      %p234 = scmp.lt.s32.totalorder %s19, 1
      %s235 = scalar_select %p234, %s19, 1
      %p236 = scmp.lt.s32.totalorder %s233, 7
      %s237 = scalar_select %p236, %s233, 7
      %s238 = smul.addr %s235, 8
      %s239 = sadd.s32 %s237, %s238
      %s240 = smul.addr %s239, 8
      %s241 = scalar_lea.vmem %s3, %s240
      %s242 = smul.u32 8, %s20
      %p243 = scmp.lt.s32.totalorder %s19, 1
      %s244 = scalar_select %p243, %s19, 1
      %p245 = scmp.lt.s32.totalorder %s242, 7
      %s246 = scalar_select %p245, %s242, 7
      %s247 = smul.addr %s244, 8
      %s248 = sadd.s32 %s246, %s247
      %s249 = smul.addr %s248, 8
      %s250 = scalar_lea.vmem %s0, %s249
      %s251 = smul.u32 8, %s20
      %s252 = smul.u32 8, %s21
      %p253 = scmp.lt.s32.totalorder %s19, 1
      %s254 = scalar_select %p253, %s19, 1
      %p255 = scmp.lt.s32.totalorder %s252, 7
      %s256 = scalar_select %p255, %s252, 7
      %s257 = smul.addr %s254, 8
      %s258 = sadd.s32 %s256, %s257
      %s259 = smul.addr %s258, 8
      %s260 = scalar_lea.vmem %s1, %s259
      %s261 = smul.u32 8, %s21
      %p262 = scmp.lt.s32.totalorder %s19, 1
      %s263 = scalar_select %p262, %s19, 1
      %p264 = scmp.lt.s32.totalorder %s21, 0
      %s265 = scalar_select %p264, %s21, 0
      %s266 = sadd.s32 %s265, %s263
      %s267 = scalar_lea.vmem %s2, %s266
      %s268 = smul.u32 8, %s20
      %p269 = scmp.lt.s32.totalorder %s19, 1
      %s270 = scalar_select %p269, %s19, 1
      %p271 = scmp.lt.s32.totalorder %s268, 7
      %s272 = scalar_select %p271, %s268, 7
      %s273 = smul.addr %s270, 8
      %s274 = sadd.s32 %s272, %s273
      %s275 = smul.addr %s274, 8
      %s276 = scalar_lea.vmem %s3, %s275
      %s277 = smul.u32 8, %s20
      %p278 = scmp.eq.s32.totalorder %s21, 0
      // Predicated region
      $region33: #{tpu_custom_call.1} parent=31 // pred_check
        %p279 = pneg %p278
      $region34: #{tpu_custom_call.1} parent=31 // pred_check_branch
        %281 = sbr.rel (%p279) target = $region36
      $region35: #{tpu_custom_call.1} parent=31 // pred_region
        %vm282 = vcmask 130048
        %283 = vst.msk [vmem:[#allocation2] sm:$0xff] %vm282, inf
        %284 = vst.msk [vmem:[#allocation2 + $0x8] sm:$0xff] %vm282, inf
        %285 = vst.msk [vmem:[#allocation2 + $0x10] sm:$0xff] %vm282, inf
        %286 = vst.msk [vmem:[#allocation2 + $0x18] sm:$0xff] %vm282, inf
        %287 = vst.msk [vmem:[#allocation2 + $0x20] sm:$0xff] %vm282, inf
        %288 = vst.msk [vmem:[#allocation2 + $0x28] sm:$0xff] %vm282, inf
        %289 = vst.msk [vmem:[#allocation2 + $0x30] sm:$0xff] %vm282, inf
        %290 = vst.msk [vmem:[#allocation2 + $0x38] sm:$0xff] %vm282, inf
        %291 = vst.msk [vmem:[#allocation3] sm:$0xff] %vm282, 1e+09
        %292 = vst.msk [vmem:[#allocation3 + $0x8] sm:$0xff] %vm282, 1e+09
        %293 = vst.msk [vmem:[#allocation3 + $0x10] sm:$0xff] %vm282, 1e+09
        %294 = vst.msk [vmem:[#allocation3 + $0x18] sm:$0xff] %vm282, 1e+09
        %295 = vst.msk [vmem:[#allocation3 + $0x20] sm:$0xff] %vm282, 1e+09
        %296 = vst.msk [vmem:[#allocation3 + $0x28] sm:$0xff] %vm282, 1e+09
        %297 = vst.msk [vmem:[#allocation3 + $0x30] sm:$0xff] %vm282, 1e+09
        %298 = vst.msk [vmem:[#allocation3 + $0x38] sm:$0xff] %vm282, 1e+09
      $region36: #{tpu_custom_call.1} parent=31 // pred_fallthru
        _
      %v299 = vld [vmem:[%s250] sm:$0xff]
      %v300 = vld [vmem:[%s250 + $0x8] sm:$0xff]
      %v301 = vld [vmem:[%s250 + $0x10] sm:$0xff]
      %v302 = vld [vmem:[%s250 + $0x18] sm:$0xff]
      %v303 = vld [vmem:[%s250 + $0x20] sm:$0xff]
      %v304 = vld [vmem:[%s250 + $0x28] sm:$0xff]
      %v305 = vld [vmem:[%s250 + $0x30] sm:$0xff]
      %v306 = vld [vmem:[%s250 + $0x38] sm:$0xff]
      %v307 = vld [vmem:[%s260] sm:$0xff]
      %v308 = vld [vmem:[%s260 + $0x8] sm:$0xff]
      %v309 = vld [vmem:[%s260 + $0x10] sm:$0xff]
      %v310 = vld [vmem:[%s260 + $0x18] sm:$0xff]
      %v311 = vld [vmem:[%s260 + $0x20] sm:$0xff]
      %v312 = vld [vmem:[%s260 + $0x28] sm:$0xff]
      %v313 = vld [vmem:[%s260 + $0x30] sm:$0xff]
      %v314 = vld [vmem:[%s260 + $0x38] sm:$0xff]
      %v315 = vld [vmem:[%s267] sm:$0x1]
      %vm316 = vcmask 64512
      %v318 = vsel %vm316, %v299, 0
      %v321 = vsel %vm316, %v300, 0
      %v324 = vsel %vm316, %v301, 0
      %v327 = vsel %vm316, %v302, 0
      %v330 = vsel %vm316, %v303, 0
      %v333 = vsel %vm316, %v304, 0
      %v336 = vsel %vm316, %v305, 0
      %v339 = vsel %vm316, %v306, 0
      %v342 = vsel %vm316, %v307, 0
      %v345 = vsel %vm316, %v308, 0
      %v348 = vsel %vm316, %v309, 0
      %v351 = vsel %vm316, %v310, 0
      %v354 = vsel %vm316, %v311, 0
      %v357 = vsel %vm316, %v312, 0
      %v360 = vsel %vm316, %v313, 0
      %v363 = vsel %vm316, %v314, 0
      %365 = vmatprep.subr.mxu0 0.0
      %366 = vmatpush1.xpose.msra.mxu0 %v342
      %367 = vmatprep.subr.mxu0 0.0
      %368 = vmatpush1.xpose.msra.mxu0 %v345
      %369 = vmatprep.subr.mxu0 0.0
      %370 = vmatpush1.xpose.msra.mxu0 %v348
      %371 = vmatprep.subr.mxu0 0.0
      %372 = vmatpush1.xpose.msra.mxu0 %v351
      %373 = vmatprep.subr.mxu0 0.0
      %374 = vmatpush1.xpose.msra.mxu0 %v354
      %375 = vmatprep.subr.mxu0 0.0
      %376 = vmatpush1.xpose.msra.mxu0 %v357
      %377 = vmatprep.subr.mxu0 0.0
      %378 = vmatpush1.xpose.msra.mxu0 %v360
      %379 = vmatprep.subr.mxu0 0.0
      %380 = vmatpush1.xpose.msra.mxu0 %v363
      %381 = vmatprep.subr.mxu0 0.0
      %382 = vmatpush1.xpose.msra.mxu0 0.0
      %383 = vmatprep.subr.mxu0 0.0
      %384 = vmatpush1.xpose.msra.mxu0 0.0
      %385 = vmatprep.subr.mxu0 0.0
      %386 = vmatpush1.xpose.msra.mxu0 0.0
      %387 = vmatprep.subr.mxu0 0.0
      %388 = vmatpush1.xpose.msra.mxu0 0.0
      %389 = vmatprep.subr.mxu0 0.0
      %390 = vmatpush1.xpose.msra.mxu0 0.0
      %391 = vmatprep.subr.mxu0 0.0
      %392 = vmatpush1.xpose.msra.mxu0 0.0
      %393 = vmatprep.subr.mxu0 0.0
      %394 = vmatpush1.xpose.msra.mxu0 0.0
      %395 = vmatprep.subr.mxu0 0.0
      %396 = vmatpush1.xpose.msra.mxu0 0.0
      %397 = vmatprep.subr.mxu0 0.0
      %398 = vmatpush1.xpose.msra.mxu0 0.0
      %399 = vmatprep.subr.mxu0 0.0
      %400 = vmatpush1.xpose.msra.mxu0 0.0
      %401 = vmatprep.subr.mxu0 0.0
      %402 = vmatpush1.xpose.msra.mxu0 0.0
      %403 = vmatprep.subr.mxu0 0.0
      %404 = vmatpush1.xpose.msra.mxu0 0.0
      %405 = vmatprep.subr.mxu0 0.0
      %406 = vmatpush1.xpose.msra.mxu0 0.0
      %407 = vmatprep.subr.mxu0 0.0
      %408 = vmatpush1.xpose.msra.mxu0 0.0
      %409 = vmatprep.subr.mxu0 0.0
      %410 = vmatpush1.xpose.msra.mxu0 0.0
      %411 = vmatprep.subr.mxu0 0.0
      %412 = vmatpush1.xpose.msra.mxu0 0.0
      %413 = vmatprep.subr.mxu0 0.0
      %414 = vmatpush1.xpose.msra.mxu0 0.0
      %415 = vmatprep.subr.mxu0 0.0
      %416 = vmatpush1.xpose.msra.mxu0 0.0
      %417 = vmatprep.subr.mxu0 0.0
      %418 = vmatpush1.xpose.msra.mxu0 0.0
      %419 = vmatprep.subr.mxu0 0.0
      %420 = vmatpush1.xpose.msra.mxu0 0.0
      %421 = vmatprep.subr.mxu0 0.0
      %422 = vmatpush1.xpose.msra.mxu0 0.0
      %423 = vmatprep.subr.mxu0 0.0
      %424 = vmatpush1.xpose.msra.mxu0 0.0
      %425 = vmatprep.subr.mxu0 0.0
      %426 = vmatpush1.xpose.msra.mxu0 0.0
      %427 = vmatprep.subr.mxu0 0.0
      %428 = vmatpush1.xpose.msra.mxu0 0.0
      %429 = vmatprep.mubr.f32.mxu0 0.0
      %430 = vmatmul.mubr.f32.gmra.mrb[0].mxu0 %v318
      %v431 = vpop.f32.mrb[0].mxu0
      %v432 = vadd.f32 0.0, %v431
      %v433 = vpop.f32.mrb[0].mxu0
      %434 = vmatprep.mubr.f32.mxu0 0.0
      %435 = vmatmul.mubr.f32.gmra.mrb[0].mxu0 %v321
      %v436 = vpop.f32.mrb[0].mxu0
      %v437 = vadd.f32 0.0, %v436
      %v438 = vpop.f32.mrb[0].mxu0
      %439 = vmatprep.mubr.f32.mxu0 0.0
      %440 = vmatmul.mubr.f32.gmra.mrb[0].mxu0 %v324
      %v441 = vpop.f32.mrb[0].mxu0
      %v442 = vadd.f32 0.0, %v441
      %v443 = vpop.f32.mrb[0].mxu0
      %444 = vmatprep.mubr.f32.mxu0 0.0
      %445 = vmatmul.mubr.f32.gmra.mrb[0].mxu0 %v327
      %v446 = vpop.f32.mrb[0].mxu0
      %v447 = vadd.f32 0.0, %v446
      %v448 = vpop.f32.mrb[0].mxu0
      %449 = vmatprep.mubr.f32.mxu0 0.0
      %450 = vmatmul.mubr.f32.gmra.mrb[0].mxu0 %v330
      %v451 = vpop.f32.mrb[0].mxu0
      %v452 = vadd.f32 0.0, %v451
      %v453 = vpop.f32.mrb[0].mxu0
      %454 = vmatprep.mubr.f32.mxu0 0.0
      %455 = vmatmul.mubr.f32.gmra.mrb[0].mxu0 %v333
      %v456 = vpop.f32.mrb[0].mxu0
      %v457 = vadd.f32 0.0, %v456
      %v458 = vpop.f32.mrb[0].mxu0
      %459 = vmatprep.mubr.f32.mxu0 0.0
      %460 = vmatmul.mubr.f32.gmra.mrb[0].mxu0 %v336
      %v461 = vpop.f32.mrb[0].mxu0
      %v462 = vadd.f32 0.0, %v461
      %v463 = vpop.f32.mrb[0].mxu0
      %464 = vmatprep.mubr.f32.mxu0 0.0
      %465 = vmatmul.mubr.f32.gmra.mrb[0].mxu0 %v339
      %v466 = vpop.f32.mrb[0].mxu0
      %v467 = vadd.f32 0.0, %v466
      %v468 = vpop.f32.mrb[0].mxu0
      %469 = vdwg.mxu0
      %v471 = vlaneseq
      %v472 = vshrl.u32 %v471, 7
      %v473 = vsub.s32 0, %v472
      %v474 = vrot.slane %v315, %v473
      %v476 = vsub.f32 %v474, %v432
      %v477 = vsub.f32 %v474, %v437
      %v478 = vsub.f32 %v474, %v442
      %v479 = vsub.f32 %v474, %v447
      %v480 = vsub.f32 %v474, %v452
      %v481 = vsub.f32 %v474, %v457
      %v482 = vsub.f32 %v474, %v462
      %v483 = vsub.f32 %v474, %v467
      %v484 = vlaneseq
      %v485 = vand.u32 %v484, 127
      %s486 = smul.u32 %s21, 64
      %v487 = vstv %s486
      %v488 = vadd.s32 %v485, %v487
      %v489 = vcvt.s32.f32 %v488
      %v490 = vld [vmem:[#allocation2] sm:$0xff]
      %v491 = vld [vmem:[#allocation2 + $0x8] sm:$0xff]
      %v492 = vld [vmem:[#allocation2 + $0x10] sm:$0xff]
      %v493 = vld [vmem:[#allocation2 + $0x18] sm:$0xff]
      %v494 = vld [vmem:[#allocation2 + $0x20] sm:$0xff]
      %v495 = vld [vmem:[#allocation2 + $0x28] sm:$0xff]
      %v496 = vld [vmem:[#allocation2 + $0x30] sm:$0xff]
      %v497 = vld [vmem:[#allocation2 + $0x38] sm:$0xff]
      %v498 = vld [vmem:[#allocation3] sm:$0xff]
      %v499 = vld [vmem:[#allocation3 + $0x8] sm:$0xff]
      %v500 = vld [vmem:[#allocation3 + $0x10] sm:$0xff]
      %v501 = vld [vmem:[#allocation3 + $0x18] sm:$0xff]
      %v502 = vld [vmem:[#allocation3 + $0x20] sm:$0xff]
      %v503 = vld [vmem:[#allocation3 + $0x28] sm:$0xff]
      %v504 = vld [vmem:[#allocation3 + $0x30] sm:$0xff]
      %v505 = vld [vmem:[#allocation3 + $0x38] sm:$0xff]
      %vm506 = vcmask 130048
      %v507 = vsel %vm506, %v490, inf
      %508 = vmin.xlane.f32.xlu0 %v507
      %v509 = vpop.xlane.xlu0 %508
      %v510 = vsel %vm506, %v491, inf
      %511 = vmin.xlane.f32.xlu0 %v510
      %v512 = vpop.xlane.xlu0 %511
      %v513 = vsel %vm506, %v492, inf
      %514 = vmin.xlane.f32.xlu0 %v513
      %v515 = vpop.xlane.xlu0 %514
      %v516 = vsel %vm506, %v493, inf
      %517 = vmin.xlane.f32.xlu0 %v516
      %v518 = vpop.xlane.xlu0 %517
      %v519 = vsel %vm506, %v494, inf
      %520 = vmin.xlane.f32.xlu0 %v519
      %v521 = vpop.xlane.xlu0 %520
      %v522 = vsel %vm506, %v495, inf
      %523 = vmin.xlane.f32.xlu0 %v522
      %v524 = vpop.xlane.xlu0 %523
      %v525 = vsel %vm506, %v496, inf
      %526 = vmin.xlane.f32.xlu0 %v525
      %v527 = vpop.xlane.xlu0 %526
      %v528 = vsel %vm506, %v497, inf
      %529 = vmin.xlane.f32.xlu0 %v528
      %v530 = vpop.xlane.xlu0 %529
      %vm531 = vcmask 523264
      %v532 = vsel %vm531, %v476, inf
      %533 = vmin.xlane.f32.xlu0 %v532
      %v534 = vpop.xlane.xlu0 %533
      %v535 = vsel %vm531, %v477, inf
      %536 = vmin.xlane.f32.xlu0 %v535
      %v537 = vpop.xlane.xlu0 %536
      %v538 = vsel %vm531, %v478, inf
      %539 = vmin.xlane.f32.xlu0 %v538
      %v540 = vpop.xlane.xlu0 %539
      %v541 = vsel %vm531, %v479, inf
      %542 = vmin.xlane.f32.xlu0 %v541
      %v543 = vpop.xlane.xlu0 %542
      %v544 = vsel %vm531, %v480, inf
      %545 = vmin.xlane.f32.xlu0 %v544
      %v546 = vpop.xlane.xlu0 %545
      %v547 = vsel %vm531, %v481, inf
      %548 = vmin.xlane.f32.xlu0 %v547
      %v549 = vpop.xlane.xlu0 %548
      %v550 = vsel %vm531, %v482, inf
      %551 = vmin.xlane.f32.xlu0 %v550
      %v552 = vpop.xlane.xlu0 %551
      %v553 = vsel %vm531, %v483, inf
      %554 = vmin.xlane.f32.xlu0 %v553
      %v555 = vpop.xlane.xlu0 %554
      %v556 = vmin.f32 %v509, %v534
      %v557 = vmin.f32 %v512, %v537
      %v558 = vmin.f32 %v515, %v540
      %v559 = vmin.f32 %v518, %v543
      %v560 = vmin.f32 %v521, %v546
      %v561 = vmin.f32 %v524, %v549
      %v562 = vmin.f32 %v527, %v552
      %v563 = vmin.f32 %v530, %v555
      %vm564 = vcmp.eq.f32.partialorder %v490, %v556
      %vm565 = vcmp.eq.f32.partialorder %v491, %v557
      %vm566 = vcmp.eq.f32.partialorder %v492, %v558
      %vm567 = vcmp.eq.f32.partialorder %v493, %v559
      %vm568 = vcmp.eq.f32.partialorder %v494, %v560
      %vm569 = vcmp.eq.f32.partialorder %v495, %v561
      %vm570 = vcmp.eq.f32.partialorder %v496, %v562
      %vm571 = vcmp.eq.f32.partialorder %v497, %v563
      %v572 = vsel %vm564, %v498, 1e+09
      %v573 = vsel %vm565, %v499, 1e+09
      %v574 = vsel %vm566, %v500, 1e+09
      %v575 = vsel %vm567, %v501, 1e+09
      %v576 = vsel %vm568, %v502, 1e+09
      %v577 = vsel %vm569, %v503, 1e+09
      %v578 = vsel %vm570, %v504, 1e+09
      %v579 = vsel %vm571, %v505, 1e+09
      %v580 = vsel %vm506, %v572, inf
      %581 = vmin.xlane.f32.xlu0 %v580
      %v582 = vpop.xlane.xlu0 %581
      %v583 = vsel %vm506, %v573, inf
      %584 = vmin.xlane.f32.xlu0 %v583
      %v585 = vpop.xlane.xlu0 %584
      %v586 = vsel %vm506, %v574, inf
      %587 = vmin.xlane.f32.xlu0 %v586
      %v588 = vpop.xlane.xlu0 %587
      %v589 = vsel %vm506, %v575, inf
      %590 = vmin.xlane.f32.xlu0 %v589
      %v591 = vpop.xlane.xlu0 %590
      %v592 = vsel %vm506, %v576, inf
      %593 = vmin.xlane.f32.xlu0 %v592
      %v594 = vpop.xlane.xlu0 %593
      %v595 = vsel %vm506, %v577, inf
      %596 = vmin.xlane.f32.xlu0 %v595
      %v597 = vpop.xlane.xlu0 %596
      %v598 = vsel %vm506, %v578, inf
      %599 = vmin.xlane.f32.xlu0 %v598
      %v600 = vpop.xlane.xlu0 %599
      %v601 = vsel %vm506, %v579, inf
      %602 = vmin.xlane.f32.xlu0 %v601
      %v603 = vpop.xlane.xlu0 %602
      %vm604 = vcmp.eq.f32.partialorder %v476, %v556
      %vm605 = vcmp.eq.f32.partialorder %v477, %v557
      %vm606 = vcmp.eq.f32.partialorder %v478, %v558
      %vm607 = vcmp.eq.f32.partialorder %v479, %v559
      %vm608 = vcmp.eq.f32.partialorder %v480, %v560
      %vm609 = vcmp.eq.f32.partialorder %v481, %v561
      %vm610 = vcmp.eq.f32.partialorder %v482, %v562
      %vm611 = vcmp.eq.f32.partialorder %v483, %v563
      %v612 = vsel %vm604, %v489, 1e+09
      %v613 = vsel %vm605, %v489, 1e+09
      %v614 = vsel %vm606, %v489, 1e+09
      %v615 = vsel %vm607, %v489, 1e+09
      %v616 = vsel %vm608, %v489, 1e+09
      %v617 = vsel %vm609, %v489, 1e+09
      %v618 = vsel %vm610, %v489, 1e+09
      %v619 = vsel %vm611, %v489, 1e+09
      %v620 = vsel %vm531, %v612, inf
      %621 = vmin.xlane.f32.xlu0 %v620
      %v622 = vpop.xlane.xlu0 %621
      %v623 = vsel %vm531, %v613, inf
      %624 = vmin.xlane.f32.xlu0 %v623
      %v625 = vpop.xlane.xlu0 %624
      %v626 = vsel %vm531, %v614, inf
      %627 = vmin.xlane.f32.xlu0 %v626
      %v628 = vpop.xlane.xlu0 %627
      %v629 = vsel %vm531, %v615, inf
      %630 = vmin.xlane.f32.xlu0 %v629
      %v631 = vpop.xlane.xlu0 %630
      %v632 = vsel %vm531, %v616, inf
      %633 = vmin.xlane.f32.xlu0 %v632
      %v634 = vpop.xlane.xlu0 %633
      %v635 = vsel %vm531, %v617, inf
      %636 = vmin.xlane.f32.xlu0 %v635
      %v637 = vpop.xlane.xlu0 %636
      %v638 = vsel %vm531, %v618, inf
      %639 = vmin.xlane.f32.xlu0 %v638
      %v640 = vpop.xlane.xlu0 %639
      %v641 = vsel %vm531, %v619, inf
      %642 = vmin.xlane.f32.xlu0 %v641
      %v643 = vpop.xlane.xlu0 %642
      %v644 = vmin.f32 %v582, %v622
      %v645 = vmin.f32 %v585, %v625
      %v646 = vmin.f32 %v588, %v628
      %v647 = vmin.f32 %v591, %v631
      %v648 = vmin.f32 %v594, %v634
      %v649 = vmin.f32 %v597, %v637
      %v650 = vmin.f32 %v600, %v640
      %v651 = vmin.f32 %v603, %v643
      %vm652 = vcmask 7168
      %653 = vst.msk [vmem:[#allocation2] sm:$0xff] %vm652, %v556
      %654 = vst.msk [vmem:[#allocation2 + $0x8] sm:$0xff] %vm652, %v557
      %655 = vst.msk [vmem:[#allocation2 + $0x10] sm:$0xff] %vm652, %v558
      %656 = vst.msk [vmem:[#allocation2 + $0x18] sm:$0xff] %vm652, %v559
      %657 = vst.msk [vmem:[#allocation2 + $0x20] sm:$0xff] %vm652, %v560
      %658 = vst.msk [vmem:[#allocation2 + $0x28] sm:$0xff] %vm652, %v561
      %659 = vst.msk [vmem:[#allocation2 + $0x30] sm:$0xff] %vm652, %v562
      %660 = vst.msk [vmem:[#allocation2 + $0x38] sm:$0xff] %vm652, %v563
      %661 = vst.msk [vmem:[#allocation3] sm:$0xff] %vm652, %v644
      %662 = vst.msk [vmem:[#allocation3 + $0x8] sm:$0xff] %vm652, %v645
      %663 = vst.msk [vmem:[#allocation3 + $0x10] sm:$0xff] %vm652, %v646
      %664 = vst.msk [vmem:[#allocation3 + $0x18] sm:$0xff] %vm652, %v647
      %665 = vst.msk [vmem:[#allocation3 + $0x20] sm:$0xff] %vm652, %v648
      %666 = vst.msk [vmem:[#allocation3 + $0x28] sm:$0xff] %vm652, %v649
      %667 = vst.msk [vmem:[#allocation3 + $0x30] sm:$0xff] %vm652, %v650
      %668 = vst.msk [vmem:[#allocation3 + $0x38] sm:$0xff] %vm652, %v651
      %vm669 = vcmp.eq.f32.partialorder %v498, %v644
      %vm670 = vcmp.eq.f32.partialorder %v499, %v645
      %vm671 = vcmp.eq.f32.partialorder %v500, %v646
      %vm672 = vcmp.eq.f32.partialorder %v501, %v647
      %vm673 = vcmp.eq.f32.partialorder %v502, %v648
      %vm674 = vcmp.eq.f32.partialorder %v503, %v649
      %vm675 = vcmp.eq.f32.partialorder %v504, %v650
      %vm676 = vcmp.eq.f32.partialorder %v505, %v651
      %vm677 = vmand %vm564, %vm669
      %vm678 = vmand %vm565, %vm670
      %vm679 = vmand %vm566, %vm671
      %vm680 = vmand %vm567, %vm672
      %vm681 = vmand %vm568, %vm673
      %vm682 = vmand %vm569, %vm674
      %vm683 = vmand %vm570, %vm675
      %vm684 = vmand %vm571, %vm676
      %v685 = vsel %vm677, inf, %v490
      %v686 = vsel %vm678, inf, %v491
      %v687 = vsel %vm679, inf, %v492
      %v688 = vsel %vm680, inf, %v493
      %v689 = vsel %vm681, inf, %v494
      %v690 = vsel %vm682, inf, %v495
      %v691 = vsel %vm683, inf, %v496
      %v692 = vsel %vm684, inf, %v497
      %vm693 = vcmp.eq.f32.partialorder %v489, %v644
      %vm694 = vcmp.eq.f32.partialorder %v489, %v645
      %vm695 = vcmp.eq.f32.partialorder %v489, %v646
      %vm696 = vcmp.eq.f32.partialorder %v489, %v647
      %vm697 = vcmp.eq.f32.partialorder %v489, %v648
      %vm698 = vcmp.eq.f32.partialorder %v489, %v649
      %vm699 = vcmp.eq.f32.partialorder %v489, %v650
      %vm700 = vcmp.eq.f32.partialorder %v489, %v651
      %vm701 = vmand %vm604, %vm693
      %vm702 = vmand %vm605, %vm694
      %vm703 = vmand %vm606, %vm695
      %vm704 = vmand %vm607, %vm696
      %vm705 = vmand %vm608, %vm697
      %vm706 = vmand %vm609, %vm698
      %vm707 = vmand %vm610, %vm699
      %vm708 = vmand %vm611, %vm700
      %v709 = vsel %vm701, inf, %v476
      %v710 = vsel %vm702, inf, %v477
      %v711 = vsel %vm703, inf, %v478
      %v712 = vsel %vm704, inf, %v479
      %v713 = vsel %vm705, inf, %v480
      %v714 = vsel %vm706, inf, %v481
      %v715 = vsel %vm707, inf, %v482
      %v716 = vsel %vm708, inf, %v483
      %v717 = vsel %vm506, %v685, inf
      %718 = vmin.xlane.f32.xlu0 %v717
      %v719 = vpop.xlane.xlu0 %718
      %v720 = vsel %vm506, %v686, inf
      %721 = vmin.xlane.f32.xlu0 %v720
      %v722 = vpop.xlane.xlu0 %721
      %v723 = vsel %vm506, %v687, inf
      %724 = vmin.xlane.f32.xlu0 %v723
      %v725 = vpop.xlane.xlu0 %724
      %v726 = vsel %vm506, %v688, inf
      %727 = vmin.xlane.f32.xlu0 %v726
      %v728 = vpop.xlane.xlu0 %727
      %v729 = vsel %vm506, %v689, inf
      %730 = vmin.xlane.f32.xlu0 %v729
      %v731 = vpop.xlane.xlu0 %730
      %v732 = vsel %vm506, %v690, inf
      %733 = vmin.xlane.f32.xlu0 %v732
      %v734 = vpop.xlane.xlu0 %733
      %v735 = vsel %vm506, %v691, inf
      %736 = vmin.xlane.f32.xlu0 %v735
      %v737 = vpop.xlane.xlu0 %736
      %v738 = vsel %vm506, %v692, inf
      %739 = vmin.xlane.f32.xlu0 %v738
      %v740 = vpop.xlane.xlu0 %739
      %v741 = vsel %vm531, %v709, inf
      %742 = vmin.xlane.f32.xlu0 %v741
      %v743 = vpop.xlane.xlu0 %742
      %v744 = vsel %vm531, %v710, inf
      %745 = vmin.xlane.f32.xlu0 %v744
      %v746 = vpop.xlane.xlu0 %745
      %v747 = vsel %vm531, %v711, inf
      %748 = vmin.xlane.f32.xlu0 %v747
      %v749 = vpop.xlane.xlu0 %748
      %v750 = vsel %vm531, %v712, inf
      %751 = vmin.xlane.f32.xlu0 %v750
      %v752 = vpop.xlane.xlu0 %751
      %v753 = vsel %vm531, %v713, inf
      %754 = vmin.xlane.f32.xlu0 %v753
      %v755 = vpop.xlane.xlu0 %754
      %v756 = vsel %vm531, %v714, inf
      %757 = vmin.xlane.f32.xlu0 %v756
      %v758 = vpop.xlane.xlu0 %757
      %v759 = vsel %vm531, %v715, inf
      %760 = vmin.xlane.f32.xlu0 %v759
      %v761 = vpop.xlane.xlu0 %760
      %v762 = vsel %vm531, %v716, inf
      %763 = vmin.xlane.f32.xlu0 %v762
      %v764 = vpop.xlane.xlu0 %763
      %v765 = vmin.f32 %v719, %v743
      %v766 = vmin.f32 %v722, %v746
      %v767 = vmin.f32 %v725, %v749
      %v768 = vmin.f32 %v728, %v752
      %v769 = vmin.f32 %v731, %v755
      %v770 = vmin.f32 %v734, %v758
      %v771 = vmin.f32 %v737, %v761
      %v772 = vmin.f32 %v740, %v764
      %vm773 = vcmp.eq.f32.partialorder %v685, %v765
      %vm774 = vcmp.eq.f32.partialorder %v686, %v766
      %vm775 = vcmp.eq.f32.partialorder %v687, %v767
      %vm776 = vcmp.eq.f32.partialorder %v688, %v768
      %vm777 = vcmp.eq.f32.partialorder %v689, %v769
      %vm778 = vcmp.eq.f32.partialorder %v690, %v770
      %vm779 = vcmp.eq.f32.partialorder %v691, %v771
      %vm780 = vcmp.eq.f32.partialorder %v692, %v772
      %v781 = vsel %vm773, %v498, 1e+09
      %v782 = vsel %vm774, %v499, 1e+09
      %v783 = vsel %vm775, %v500, 1e+09
      %v784 = vsel %vm776, %v501, 1e+09
      %v785 = vsel %vm777, %v502, 1e+09
      %v786 = vsel %vm778, %v503, 1e+09
      %v787 = vsel %vm779, %v504, 1e+09
      %v788 = vsel %vm780, %v505, 1e+09
      %v789 = vsel %vm506, %v781, inf
      %790 = vmin.xlane.f32.xlu0 %v789
      %v791 = vpop.xlane.xlu0 %790
      %v792 = vsel %vm506, %v782, inf
      %793 = vmin.xlane.f32.xlu0 %v792
      %v794 = vpop.xlane.xlu0 %793
      %v795 = vsel %vm506, %v783, inf
      %796 = vmin.xlane.f32.xlu0 %v795
      %v797 = vpop.xlane.xlu0 %796
      %v798 = vsel %vm506, %v784, inf
      %799 = vmin.xlane.f32.xlu0 %v798
      %v800 = vpop.xlane.xlu0 %799
      %v801 = vsel %vm506, %v785, inf
      %802 = vmin.xlane.f32.xlu0 %v801
      %v803 = vpop.xlane.xlu0 %802
      %v804 = vsel %vm506, %v786, inf
      %805 = vmin.xlane.f32.xlu0 %v804
      %v806 = vpop.xlane.xlu0 %805
      %v807 = vsel %vm506, %v787, inf
      %808 = vmin.xlane.f32.xlu0 %v807
      %v809 = vpop.xlane.xlu0 %808
      %v810 = vsel %vm506, %v788, inf
      %811 = vmin.xlane.f32.xlu0 %v810
      %v812 = vpop.xlane.xlu0 %811
      %vm813 = vcmp.eq.f32.partialorder %v709, %v765
      %vm814 = vcmp.eq.f32.partialorder %v710, %v766
      %vm815 = vcmp.eq.f32.partialorder %v711, %v767
      %vm816 = vcmp.eq.f32.partialorder %v712, %v768
      %vm817 = vcmp.eq.f32.partialorder %v713, %v769
      %vm818 = vcmp.eq.f32.partialorder %v714, %v770
      %vm819 = vcmp.eq.f32.partialorder %v715, %v771
      %vm820 = vcmp.eq.f32.partialorder %v716, %v772
      %v821 = vsel %vm813, %v489, 1e+09
      %v822 = vsel %vm814, %v489, 1e+09
      %v823 = vsel %vm815, %v489, 1e+09
      %v824 = vsel %vm816, %v489, 1e+09
      %v825 = vsel %vm817, %v489, 1e+09
      %v826 = vsel %vm818, %v489, 1e+09
      %v827 = vsel %vm819, %v489, 1e+09
      %v828 = vsel %vm820, %v489, 1e+09
      %v829 = vsel %vm531, %v821, inf
      %830 = vmin.xlane.f32.xlu0 %v829
      %v831 = vpop.xlane.xlu0 %830
      %v832 = vsel %vm531, %v822, inf
      %833 = vmin.xlane.f32.xlu0 %v832
      %v834 = vpop.xlane.xlu0 %833
      %v835 = vsel %vm531, %v823, inf
      %836 = vmin.xlane.f32.xlu0 %v835
      %v837 = vpop.xlane.xlu0 %836
      %v838 = vsel %vm531, %v824, inf
      %839 = vmin.xlane.f32.xlu0 %v838
      %v840 = vpop.xlane.xlu0 %839
      %v841 = vsel %vm531, %v825, inf
      %842 = vmin.xlane.f32.xlu0 %v841
      %v843 = vpop.xlane.xlu0 %842
      %v844 = vsel %vm531, %v826, inf
      %845 = vmin.xlane.f32.xlu0 %v844
      %v846 = vpop.xlane.xlu0 %845
      %v847 = vsel %vm531, %v827, inf
      %848 = vmin.xlane.f32.xlu0 %v847
      %v849 = vpop.xlane.xlu0 %848
      %v850 = vsel %vm531, %v828, inf
      %851 = vmin.xlane.f32.xlu0 %v850
      %v852 = vpop.xlane.xlu0 %851
      %v853 = vmin.f32 %v791, %v831
      %v854 = vmin.f32 %v794, %v834
      %v855 = vmin.f32 %v797, %v837
      %v856 = vmin.f32 %v800, %v840
      %v857 = vmin.f32 %v803, %v843
      %v858 = vmin.f32 %v806, %v846
      %v859 = vmin.f32 %v809, %v849
      %v860 = vmin.f32 %v812, %v852
      %vm861 = vcmask 15368
      %862 = vst.msk [vmem:[#allocation2] sm:$0xff] %vm861, %v765
      %863 = vst.msk [vmem:[#allocation2 + $0x8] sm:$0xff] %vm861, %v766
      %864 = vst.msk [vmem:[#allocation2 + $0x10] sm:$0xff] %vm861, %v767
      %865 = vst.msk [vmem:[#allocation2 + $0x18] sm:$0xff] %vm861, %v768
      %866 = vst.msk [vmem:[#allocation2 + $0x20] sm:$0xff] %vm861, %v769
      %867 = vst.msk [vmem:[#allocation2 + $0x28] sm:$0xff] %vm861, %v770
      %868 = vst.msk [vmem:[#allocation2 + $0x30] sm:$0xff] %vm861, %v771
      %869 = vst.msk [vmem:[#allocation2 + $0x38] sm:$0xff] %vm861, %v772
      %870 = vst.msk [vmem:[#allocation3] sm:$0xff] %vm861, %v853
      %871 = vst.msk [vmem:[#allocation3 + $0x8] sm:$0xff] %vm861, %v854
      %872 = vst.msk [vmem:[#allocation3 + $0x10] sm:$0xff] %vm861, %v855
      %873 = vst.msk [vmem:[#allocation3 + $0x18] sm:$0xff] %vm861, %v856
      %874 = vst.msk [vmem:[#allocation3 + $0x20] sm:$0xff] %vm861, %v857
      %875 = vst.msk [vmem:[#allocation3 + $0x28] sm:$0xff] %vm861, %v858
      %876 = vst.msk [vmem:[#allocation3 + $0x30] sm:$0xff] %vm861, %v859
      %877 = vst.msk [vmem:[#allocation3 + $0x38] sm:$0xff] %vm861, %v860
      %vm878 = vcmp.eq.f32.partialorder %v498, %v853
      %vm879 = vcmp.eq.f32.partialorder %v499, %v854
      %vm880 = vcmp.eq.f32.partialorder %v500, %v855
      %vm881 = vcmp.eq.f32.partialorder %v501, %v856
      %vm882 = vcmp.eq.f32.partialorder %v502, %v857
      %vm883 = vcmp.eq.f32.partialorder %v503, %v858
      %vm884 = vcmp.eq.f32.partialorder %v504, %v859
      %vm885 = vcmp.eq.f32.partialorder %v505, %v860
      %vm886 = vmand %vm773, %vm878
      %vm887 = vmand %vm774, %vm879
      %vm888 = vmand %vm775, %vm880
      %vm889 = vmand %vm776, %vm881
      %vm890 = vmand %vm777, %vm882
      %vm891 = vmand %vm778, %vm883
      %vm892 = vmand %vm779, %vm884
      %vm893 = vmand %vm780, %vm885
      %v894 = vsel %vm886, inf, %v685
      %v895 = vsel %vm887, inf, %v686
      %v896 = vsel %vm888, inf, %v687
      %v897 = vsel %vm889, inf, %v688
      %v898 = vsel %vm890, inf, %v689
      %v899 = vsel %vm891, inf, %v690
      %v900 = vsel %vm892, inf, %v691
      %v901 = vsel %vm893, inf, %v692
      %vm902 = vcmp.eq.f32.partialorder %v489, %v853
      %vm903 = vcmp.eq.f32.partialorder %v489, %v854
      %vm904 = vcmp.eq.f32.partialorder %v489, %v855
      %vm905 = vcmp.eq.f32.partialorder %v489, %v856
      %vm906 = vcmp.eq.f32.partialorder %v489, %v857
      %vm907 = vcmp.eq.f32.partialorder %v489, %v858
      %vm908 = vcmp.eq.f32.partialorder %v489, %v859
      %vm909 = vcmp.eq.f32.partialorder %v489, %v860
      %vm910 = vmand %vm813, %vm902
      %vm911 = vmand %vm814, %vm903
      %vm912 = vmand %vm815, %vm904
      %vm913 = vmand %vm816, %vm905
      %vm914 = vmand %vm817, %vm906
      %vm915 = vmand %vm818, %vm907
      %vm916 = vmand %vm819, %vm908
      %vm917 = vmand %vm820, %vm909
      %v918 = vsel %vm910, inf, %v709
      %v919 = vsel %vm911, inf, %v710
      %v920 = vsel %vm912, inf, %v711
      %v921 = vsel %vm913, inf, %v712
      %v922 = vsel %vm914, inf, %v713
      %v923 = vsel %vm915, inf, %v714
      %v924 = vsel %vm916, inf, %v715
      %v925 = vsel %vm917, inf, %v716
      %v926 = vsel %vm506, %v894, inf
      %927 = vmin.xlane.f32.xlu0 %v926
      %v928 = vpop.xlane.xlu0 %927
      %v929 = vsel %vm506, %v895, inf
      %930 = vmin.xlane.f32.xlu0 %v929
      %v931 = vpop.xlane.xlu0 %930
      %v932 = vsel %vm506, %v896, inf
      %933 = vmin.xlane.f32.xlu0 %v932
      %v934 = vpop.xlane.xlu0 %933
      %v935 = vsel %vm506, %v897, inf
      %936 = vmin.xlane.f32.xlu0 %v935
      %v937 = vpop.xlane.xlu0 %936
      %v938 = vsel %vm506, %v898, inf
      %939 = vmin.xlane.f32.xlu0 %v938
      %v940 = vpop.xlane.xlu0 %939
      %v941 = vsel %vm506, %v899, inf
      %942 = vmin.xlane.f32.xlu0 %v941
      %v943 = vpop.xlane.xlu0 %942
      %v944 = vsel %vm506, %v900, inf
      %945 = vmin.xlane.f32.xlu0 %v944
      %v946 = vpop.xlane.xlu0 %945
      %v947 = vsel %vm506, %v901, inf
      %948 = vmin.xlane.f32.xlu0 %v947
      %v949 = vpop.xlane.xlu0 %948
      %v950 = vsel %vm531, %v918, inf
      %951 = vmin.xlane.f32.xlu0 %v950
      %v952 = vpop.xlane.xlu0 %951
      %v953 = vsel %vm531, %v919, inf
      %954 = vmin.xlane.f32.xlu0 %v953
      %v955 = vpop.xlane.xlu0 %954
      %v956 = vsel %vm531, %v920, inf
      %957 = vmin.xlane.f32.xlu0 %v956
      %v958 = vpop.xlane.xlu0 %957
      %v959 = vsel %vm531, %v921, inf
      %960 = vmin.xlane.f32.xlu0 %v959
      %v961 = vpop.xlane.xlu0 %960
      %v962 = vsel %vm531, %v922, inf
      %963 = vmin.xlane.f32.xlu0 %v962
      %v964 = vpop.xlane.xlu0 %963
      %v965 = vsel %vm531, %v923, inf
      %966 = vmin.xlane.f32.xlu0 %v965
      %v967 = vpop.xlane.xlu0 %966
      %v968 = vsel %vm531, %v924, inf
      %969 = vmin.xlane.f32.xlu0 %v968
      %v970 = vpop.xlane.xlu0 %969
      %v971 = vsel %vm531, %v925, inf
      %972 = vmin.xlane.f32.xlu0 %v971
      %v973 = vpop.xlane.xlu0 %972
      %v974 = vmin.f32 %v928, %v952
      %v975 = vmin.f32 %v931, %v955
      %v976 = vmin.f32 %v934, %v958
      %v977 = vmin.f32 %v937, %v961
      %v978 = vmin.f32 %v940, %v964
      %v979 = vmin.f32 %v943, %v967
      %v980 = vmin.f32 %v946, %v970
      %v981 = vmin.f32 %v949, %v973
      %vm982 = vcmp.eq.f32.partialorder %v894, %v974
      %vm983 = vcmp.eq.f32.partialorder %v895, %v975
      %vm984 = vcmp.eq.f32.partialorder %v896, %v976
      %vm985 = vcmp.eq.f32.partialorder %v897, %v977
      %vm986 = vcmp.eq.f32.partialorder %v898, %v978
      %vm987 = vcmp.eq.f32.partialorder %v899, %v979
      %vm988 = vcmp.eq.f32.partialorder %v900, %v980
      %vm989 = vcmp.eq.f32.partialorder %v901, %v981
      %v990 = vsel %vm982, %v498, 1e+09
      %v991 = vsel %vm983, %v499, 1e+09
      %v992 = vsel %vm984, %v500, 1e+09
      %v993 = vsel %vm985, %v501, 1e+09
      %v994 = vsel %vm986, %v502, 1e+09
      %v995 = vsel %vm987, %v503, 1e+09
      %v996 = vsel %vm988, %v504, 1e+09
      %v997 = vsel %vm989, %v505, 1e+09
      %v998 = vsel %vm506, %v990, inf
      %999 = vmin.xlane.f32.xlu0 %v998
      %v1000 = vpop.xlane.xlu0 %999
      %v1001 = vsel %vm506, %v991, inf
      %1002 = vmin.xlane.f32.xlu0 %v1001
      %v1003 = vpop.xlane.xlu0 %1002
      %v1004 = vsel %vm506, %v992, inf
      %1005 = vmin.xlane.f32.xlu0 %v1004
      %v1006 = vpop.xlane.xlu0 %1005
      %v1007 = vsel %vm506, %v993, inf
      %1008 = vmin.xlane.f32.xlu0 %v1007
      %v1009 = vpop.xlane.xlu0 %1008
      %v1010 = vsel %vm506, %v994, inf
      %1011 = vmin.xlane.f32.xlu0 %v1010
      %v1012 = vpop.xlane.xlu0 %1011
      %v1013 = vsel %vm506, %v995, inf
      %1014 = vmin.xlane.f32.xlu0 %v1013
      %v1015 = vpop.xlane.xlu0 %1014
      %v1016 = vsel %vm506, %v996, inf
      %1017 = vmin.xlane.f32.xlu0 %v1016
      %v1018 = vpop.xlane.xlu0 %1017
      %v1019 = vsel %vm506, %v997, inf
      %1020 = vmin.xlane.f32.xlu0 %v1019
      %v1021 = vpop.xlane.xlu0 %1020
      %vm1022 = vcmp.eq.f32.partialorder %v918, %v974
      %vm1023 = vcmp.eq.f32.partialorder %v919, %v975
      %vm1024 = vcmp.eq.f32.partialorder %v920, %v976
      %vm1025 = vcmp.eq.f32.partialorder %v921, %v977
      %vm1026 = vcmp.eq.f32.partialorder %v922, %v978
      %vm1027 = vcmp.eq.f32.partialorder %v923, %v979
      %vm1028 = vcmp.eq.f32.partialorder %v924, %v980
      %vm1029 = vcmp.eq.f32.partialorder %v925, %v981
      %v1030 = vsel %vm1022, %v489, 1e+09
      %v1031 = vsel %vm1023, %v489, 1e+09
      %v1032 = vsel %vm1024, %v489, 1e+09
      %v1033 = vsel %vm1025, %v489, 1e+09
      %v1034 = vsel %vm1026, %v489, 1e+09
      %v1035 = vsel %vm1027, %v489, 1e+09
      %v1036 = vsel %vm1028, %v489, 1e+09
      %v1037 = vsel %vm1029, %v489, 1e+09
      %v1038 = vsel %vm531, %v1030, inf
      %1039 = vmin.xlane.f32.xlu0 %v1038
      %v1040 = vpop.xlane.xlu0 %1039
      %v1041 = vsel %vm531, %v1031, inf
      %1042 = vmin.xlane.f32.xlu0 %v1041
      %v1043 = vpop.xlane.xlu0 %1042
      %v1044 = vsel %vm531, %v1032, inf
      %1045 = vmin.xlane.f32.xlu0 %v1044
      %v1046 = vpop.xlane.xlu0 %1045
      %v1047 = vsel %vm531, %v1033, inf
      %1048 = vmin.xlane.f32.xlu0 %v1047
      %v1049 = vpop.xlane.xlu0 %1048
      %v1050 = vsel %vm531, %v1034, inf
      %1051 = vmin.xlane.f32.xlu0 %v1050
      %v1052 = vpop.xlane.xlu0 %1051
      %v1053 = vsel %vm531, %v1035, inf
      %1054 = vmin.xlane.f32.xlu0 %v1053
      %v1055 = vpop.xlane.xlu0 %1054
      %v1056 = vsel %vm531, %v1036, inf
      %1057 = vmin.xlane.f32.xlu0 %v1056
      %v1058 = vpop.xlane.xlu0 %1057
      %v1059 = vsel %vm531, %v1037, inf
      %1060 = vmin.xlane.f32.xlu0 %v1059
      %v1061 = vpop.xlane.xlu0 %1060
      %v1062 = vmin.f32 %v1000, %v1040
      %v1063 = vmin.f32 %v1003, %v1043
      %v1064 = vmin.f32 %v1006, %v1046
      %v1065 = vmin.f32 %v1009, %v1049
      %v1066 = vmin.f32 %v1012, %v1052
      %v1067 = vmin.f32 %v1015, %v1055
      %v1068 = vmin.f32 %v1018, %v1058
      %v1069 = vmin.f32 %v1021, %v1061
      %vm1070 = vcmask 23568
      %1071 = vst.msk [vmem:[#allocation2] sm:$0xff] %vm1070, %v974
      %1072 = vst.msk [vmem:[#allocation2 + $0x8] sm:$0xff] %vm1070, %v975
      %1073 = vst.msk [vmem:[#allocation2 + $0x10] sm:$0xff] %vm1070, %v976
      %1074 = vst.msk [vmem:[#allocation2 + $0x18] sm:$0xff] %vm1070, %v977
      %1075 = vst.msk [vmem:[#allocation2 + $0x20] sm:$0xff] %vm1070, %v978
      %1076 = vst.msk [vmem:[#allocation2 + $0x28] sm:$0xff] %vm1070, %v979
      %1077 = vst.msk [vmem:[#allocation2 + $0x30] sm:$0xff] %vm1070, %v980
      %1078 = vst.msk [vmem:[#allocation2 + $0x38] sm:$0xff] %vm1070, %v981
      %1079 = vst.msk [vmem:[#allocation3] sm:$0xff] %vm1070, %v1062
      %1080 = vst.msk [vmem:[#allocation3 + $0x8] sm:$0xff] %vm1070, %v1063
      %1081 = vst.msk [vmem:[#allocation3 + $0x10] sm:$0xff] %vm1070, %v1064
      %1082 = vst.msk [vmem:[#allocation3 + $0x18] sm:$0xff] %vm1070, %v1065
      %1083 = vst.msk [vmem:[#allocation3 + $0x20] sm:$0xff] %vm1070, %v1066
      %1084 = vst.msk [vmem:[#allocation3 + $0x28] sm:$0xff] %vm1070, %v1067
      %1085 = vst.msk [vmem:[#allocation3 + $0x30] sm:$0xff] %vm1070, %v1068
      %1086 = vst.msk [vmem:[#allocation3 + $0x38] sm:$0xff] %vm1070, %v1069
      %vm1087 = vcmp.eq.f32.partialorder %v498, %v1062
      %vm1088 = vcmp.eq.f32.partialorder %v499, %v1063
      %vm1089 = vcmp.eq.f32.partialorder %v500, %v1064
      %vm1090 = vcmp.eq.f32.partialorder %v501, %v1065
      %vm1091 = vcmp.eq.f32.partialorder %v502, %v1066
      %vm1092 = vcmp.eq.f32.partialorder %v503, %v1067
      %vm1093 = vcmp.eq.f32.partialorder %v504, %v1068
      %vm1094 = vcmp.eq.f32.partialorder %v505, %v1069
      %vm1095 = vmand %vm982, %vm1087
      %vm1096 = vmand %vm983, %vm1088
      %vm1097 = vmand %vm984, %vm1089
      %vm1098 = vmand %vm985, %vm1090
      %vm1099 = vmand %vm986, %vm1091
      %vm1100 = vmand %vm987, %vm1092
      %vm1101 = vmand %vm988, %vm1093
      %vm1102 = vmand %vm989, %vm1094
      %v1103 = vsel %vm1095, inf, %v894
      %v1104 = vsel %vm1096, inf, %v895
      %v1105 = vsel %vm1097, inf, %v896
      %v1106 = vsel %vm1098, inf, %v897
      %v1107 = vsel %vm1099, inf, %v898
      %v1108 = vsel %vm1100, inf, %v899
      %v1109 = vsel %vm1101, inf, %v900
      %v1110 = vsel %vm1102, inf, %v901
      %vm1111 = vcmp.eq.f32.partialorder %v489, %v1062
      %vm1112 = vcmp.eq.f32.partialorder %v489, %v1063
      %vm1113 = vcmp.eq.f32.partialorder %v489, %v1064
      %vm1114 = vcmp.eq.f32.partialorder %v489, %v1065
      %vm1115 = vcmp.eq.f32.partialorder %v489, %v1066
      %vm1116 = vcmp.eq.f32.partialorder %v489, %v1067
      %vm1117 = vcmp.eq.f32.partialorder %v489, %v1068
      %vm1118 = vcmp.eq.f32.partialorder %v489, %v1069
      %vm1119 = vmand %vm1022, %vm1111
      %vm1120 = vmand %vm1023, %vm1112
      %vm1121 = vmand %vm1024, %vm1113
      %vm1122 = vmand %vm1025, %vm1114
      %vm1123 = vmand %vm1026, %vm1115
      %vm1124 = vmand %vm1027, %vm1116
      %vm1125 = vmand %vm1028, %vm1117
      %vm1126 = vmand %vm1029, %vm1118
      %v1127 = vsel %vm1119, inf, %v918
      %v1128 = vsel %vm1120, inf, %v919
      %v1129 = vsel %vm1121, inf, %v920
      %v1130 = vsel %vm1122, inf, %v921
      %v1131 = vsel %vm1123, inf, %v922
      %v1132 = vsel %vm1124, inf, %v923
      %v1133 = vsel %vm1125, inf, %v924
      %v1134 = vsel %vm1126, inf, %v925
      %v1135 = vsel %vm506, %v1103, inf
      %1136 = vmin.xlane.f32.xlu0 %v1135
      %v1137 = vpop.xlane.xlu0 %1136
      %v1138 = vsel %vm506, %v1104, inf
      %1139 = vmin.xlane.f32.xlu0 %v1138
      %v1140 = vpop.xlane.xlu0 %1139
      %v1141 = vsel %vm506, %v1105, inf
      %1142 = vmin.xlane.f32.xlu0 %v1141
      %v1143 = vpop.xlane.xlu0 %1142
      %v1144 = vsel %vm506, %v1106, inf
      %1145 = vmin.xlane.f32.xlu0 %v1144
      %v1146 = vpop.xlane.xlu0 %1145
      %v1147 = vsel %vm506, %v1107, inf
      %1148 = vmin.xlane.f32.xlu0 %v1147
      %v1149 = vpop.xlane.xlu0 %1148
      %v1150 = vsel %vm506, %v1108, inf
      %1151 = vmin.xlane.f32.xlu0 %v1150
      %v1152 = vpop.xlane.xlu0 %1151
      %v1153 = vsel %vm506, %v1109, inf
      %1154 = vmin.xlane.f32.xlu0 %v1153
      %v1155 = vpop.xlane.xlu0 %1154
      %v1156 = vsel %vm506, %v1110, inf
      %1157 = vmin.xlane.f32.xlu0 %v1156
      %v1158 = vpop.xlane.xlu0 %1157
      %v1159 = vsel %vm531, %v1127, inf
      %1160 = vmin.xlane.f32.xlu0 %v1159
      %v1161 = vpop.xlane.xlu0 %1160
      %v1162 = vsel %vm531, %v1128, inf
      %1163 = vmin.xlane.f32.xlu0 %v1162
      %v1164 = vpop.xlane.xlu0 %1163
      %v1165 = vsel %vm531, %v1129, inf
      %1166 = vmin.xlane.f32.xlu0 %v1165
      %v1167 = vpop.xlane.xlu0 %1166
      %v1168 = vsel %vm531, %v1130, inf
      %1169 = vmin.xlane.f32.xlu0 %v1168
      %v1170 = vpop.xlane.xlu0 %1169
      %v1171 = vsel %vm531, %v1131, inf
      %1172 = vmin.xlane.f32.xlu0 %v1171
      %v1173 = vpop.xlane.xlu0 %1172
      %v1174 = vsel %vm531, %v1132, inf
      %1175 = vmin.xlane.f32.xlu0 %v1174
      %v1176 = vpop.xlane.xlu0 %1175
      %v1177 = vsel %vm531, %v1133, inf
      %1178 = vmin.xlane.f32.xlu0 %v1177
      %v1179 = vpop.xlane.xlu0 %1178
      %v1180 = vsel %vm531, %v1134, inf
      %1181 = vmin.xlane.f32.xlu0 %v1180
      %v1182 = vpop.xlane.xlu0 %1181
      %v1183 = vmin.f32 %v1137, %v1161
      %v1184 = vmin.f32 %v1140, %v1164
      %v1185 = vmin.f32 %v1143, %v1167
      %v1186 = vmin.f32 %v1146, %v1170
      %v1187 = vmin.f32 %v1149, %v1173
      %v1188 = vmin.f32 %v1152, %v1176
      %v1189 = vmin.f32 %v1155, %v1179
      %v1190 = vmin.f32 %v1158, %v1182
      %vm1191 = vcmp.eq.f32.partialorder %v1103, %v1183
      %vm1192 = vcmp.eq.f32.partialorder %v1104, %v1184
      %vm1193 = vcmp.eq.f32.partialorder %v1105, %v1185
      %vm1194 = vcmp.eq.f32.partialorder %v1106, %v1186
      %vm1195 = vcmp.eq.f32.partialorder %v1107, %v1187
      %vm1196 = vcmp.eq.f32.partialorder %v1108, %v1188
      %vm1197 = vcmp.eq.f32.partialorder %v1109, %v1189
      %vm1198 = vcmp.eq.f32.partialorder %v1110, %v1190
      %v1199 = vsel %vm1191, %v498, 1e+09
      %v1200 = vsel %vm1192, %v499, 1e+09
      %v1201 = vsel %vm1193, %v500, 1e+09
      %v1202 = vsel %vm1194, %v501, 1e+09
      %v1203 = vsel %vm1195, %v502, 1e+09
      %v1204 = vsel %vm1196, %v503, 1e+09
      %v1205 = vsel %vm1197, %v504, 1e+09
      %v1206 = vsel %vm1198, %v505, 1e+09
      %v1207 = vsel %vm506, %v1199, inf
      %1208 = vmin.xlane.f32.xlu0 %v1207
      %v1209 = vpop.xlane.xlu0 %1208
      %v1210 = vsel %vm506, %v1200, inf
      %1211 = vmin.xlane.f32.xlu0 %v1210
      %v1212 = vpop.xlane.xlu0 %1211
      %v1213 = vsel %vm506, %v1201, inf
      %1214 = vmin.xlane.f32.xlu0 %v1213
      %v1215 = vpop.xlane.xlu0 %1214
      %v1216 = vsel %vm506, %v1202, inf
      %1217 = vmin.xlane.f32.xlu0 %v1216
      %v1218 = vpop.xlane.xlu0 %1217
      %v1219 = vsel %vm506, %v1203, inf
      %1220 = vmin.xlane.f32.xlu0 %v1219
      %v1221 = vpop.xlane.xlu0 %1220
      %v1222 = vsel %vm506, %v1204, inf
      %1223 = vmin.xlane.f32.xlu0 %v1222
      %v1224 = vpop.xlane.xlu0 %1223
      %v1225 = vsel %vm506, %v1205, inf
      %1226 = vmin.xlane.f32.xlu0 %v1225
      %v1227 = vpop.xlane.xlu0 %1226
      %v1228 = vsel %vm506, %v1206, inf
      %1229 = vmin.xlane.f32.xlu0 %v1228
      %v1230 = vpop.xlane.xlu0 %1229
      %vm1231 = vcmp.eq.f32.partialorder %v1127, %v1183
      %vm1232 = vcmp.eq.f32.partialorder %v1128, %v1184
      %vm1233 = vcmp.eq.f32.partialorder %v1129, %v1185
      %vm1234 = vcmp.eq.f32.partialorder %v1130, %v1186
      %vm1235 = vcmp.eq.f32.partialorder %v1131, %v1187
      %vm1236 = vcmp.eq.f32.partialorder %v1132, %v1188
      %vm1237 = vcmp.eq.f32.partialorder %v1133, %v1189
      %vm1238 = vcmp.eq.f32.partialorder %v1134, %v1190
      %v1239 = vsel %vm1231, %v489, 1e+09
      %v1240 = vsel %vm1232, %v489, 1e+09
      %v1241 = vsel %vm1233, %v489, 1e+09
      %v1242 = vsel %vm1234, %v489, 1e+09
      %v1243 = vsel %vm1235, %v489, 1e+09
      %v1244 = vsel %vm1236, %v489, 1e+09
      %v1245 = vsel %vm1237, %v489, 1e+09
      %v1246 = vsel %vm1238, %v489, 1e+09
      %v1247 = vsel %vm531, %v1239, inf
      %1248 = vmin.xlane.f32.xlu0 %v1247
      %v1249 = vpop.xlane.xlu0 %1248
      %v1250 = vsel %vm531, %v1240, inf
      %1251 = vmin.xlane.f32.xlu0 %v1250
      %v1252 = vpop.xlane.xlu0 %1251
      %v1253 = vsel %vm531, %v1241, inf
      %1254 = vmin.xlane.f32.xlu0 %v1253
      %v1255 = vpop.xlane.xlu0 %1254
      %v1256 = vsel %vm531, %v1242, inf
      %1257 = vmin.xlane.f32.xlu0 %v1256
      %v1258 = vpop.xlane.xlu0 %1257
      %v1259 = vsel %vm531, %v1243, inf
      %1260 = vmin.xlane.f32.xlu0 %v1259
      %v1261 = vpop.xlane.xlu0 %1260
      %v1262 = vsel %vm531, %v1244, inf
      %1263 = vmin.xlane.f32.xlu0 %v1262
      %v1264 = vpop.xlane.xlu0 %1263
      %v1265 = vsel %vm531, %v1245, inf
      %1266 = vmin.xlane.f32.xlu0 %v1265
      %v1267 = vpop.xlane.xlu0 %1266
      %v1268 = vsel %vm531, %v1246, inf
      %1269 = vmin.xlane.f32.xlu0 %v1268
      %v1270 = vpop.xlane.xlu0 %1269
      %v1271 = vmin.f32 %v1209, %v1249
      %v1272 = vmin.f32 %v1212, %v1252
      %v1273 = vmin.f32 %v1215, %v1255
      %v1274 = vmin.f32 %v1218, %v1258
      %v1275 = vmin.f32 %v1221, %v1261
      %v1276 = vmin.f32 %v1224, %v1264
      %v1277 = vmin.f32 %v1227, %v1267
      %v1278 = vmin.f32 %v1230, %v1270
      %vm1279 = vcmask 31768
      %1280 = vst.msk [vmem:[#allocation2] sm:$0xff] %vm1279, %v1183
      %1281 = vst.msk [vmem:[#allocation2 + $0x8] sm:$0xff] %vm1279, %v1184
      %1282 = vst.msk [vmem:[#allocation2 + $0x10] sm:$0xff] %vm1279, %v1185
      %1283 = vst.msk [vmem:[#allocation2 + $0x18] sm:$0xff] %vm1279, %v1186
      %1284 = vst.msk [vmem:[#allocation2 + $0x20] sm:$0xff] %vm1279, %v1187
      %1285 = vst.msk [vmem:[#allocation2 + $0x28] sm:$0xff] %vm1279, %v1188
      %1286 = vst.msk [vmem:[#allocation2 + $0x30] sm:$0xff] %vm1279, %v1189
      %1287 = vst.msk [vmem:[#allocation2 + $0x38] sm:$0xff] %vm1279, %v1190
      %1288 = vst.msk [vmem:[#allocation3] sm:$0xff] %vm1279, %v1271
      %1289 = vst.msk [vmem:[#allocation3 + $0x8] sm:$0xff] %vm1279, %v1272
      %1290 = vst.msk [vmem:[#allocation3 + $0x10] sm:$0xff] %vm1279, %v1273
      %1291 = vst.msk [vmem:[#allocation3 + $0x18] sm:$0xff] %vm1279, %v1274
      %1292 = vst.msk [vmem:[#allocation3 + $0x20] sm:$0xff] %vm1279, %v1275
      %1293 = vst.msk [vmem:[#allocation3 + $0x28] sm:$0xff] %vm1279, %v1276
      %1294 = vst.msk [vmem:[#allocation3 + $0x30] sm:$0xff] %vm1279, %v1277
      %1295 = vst.msk [vmem:[#allocation3 + $0x38] sm:$0xff] %vm1279, %v1278
      %vm1296 = vcmp.eq.f32.partialorder %v498, %v1271
      %vm1297 = vcmp.eq.f32.partialorder %v499, %v1272
      %vm1298 = vcmp.eq.f32.partialorder %v500, %v1273
      %vm1299 = vcmp.eq.f32.partialorder %v501, %v1274
      %vm1300 = vcmp.eq.f32.partialorder %v502, %v1275
      %vm1301 = vcmp.eq.f32.partialorder %v503, %v1276
      %vm1302 = vcmp.eq.f32.partialorder %v504, %v1277
      %vm1303 = vcmp.eq.f32.partialorder %v505, %v1278
      %vm1304 = vmand %vm1191, %vm1296
      %vm1305 = vmand %vm1192, %vm1297
      %vm1306 = vmand %vm1193, %vm1298
      %vm1307 = vmand %vm1194, %vm1299
      %vm1308 = vmand %vm1195, %vm1300
      %vm1309 = vmand %vm1196, %vm1301
      %vm1310 = vmand %vm1197, %vm1302
      %vm1311 = vmand %vm1198, %vm1303
      %v1312 = vsel %vm1304, inf, %v1103
      %v1313 = vsel %vm1305, inf, %v1104
      %v1314 = vsel %vm1306, inf, %v1105
      %v1315 = vsel %vm1307, inf, %v1106
      %v1316 = vsel %vm1308, inf, %v1107
      %v1317 = vsel %vm1309, inf, %v1108
      %v1318 = vsel %vm1310, inf, %v1109
      %v1319 = vsel %vm1311, inf, %v1110
      %vm1320 = vcmp.eq.f32.partialorder %v489, %v1271
      %vm1321 = vcmp.eq.f32.partialorder %v489, %v1272
      %vm1322 = vcmp.eq.f32.partialorder %v489, %v1273
      %vm1323 = vcmp.eq.f32.partialorder %v489, %v1274
      %vm1324 = vcmp.eq.f32.partialorder %v489, %v1275
      %vm1325 = vcmp.eq.f32.partialorder %v489, %v1276
      %vm1326 = vcmp.eq.f32.partialorder %v489, %v1277
      %vm1327 = vcmp.eq.f32.partialorder %v489, %v1278
      %vm1328 = vmand %vm1231, %vm1320
      %vm1329 = vmand %vm1232, %vm1321
      %vm1330 = vmand %vm1233, %vm1322
      %vm1331 = vmand %vm1234, %vm1323
      %vm1332 = vmand %vm1235, %vm1324
      %vm1333 = vmand %vm1236, %vm1325
      %vm1334 = vmand %vm1237, %vm1326
      %vm1335 = vmand %vm1238, %vm1327
      %v1336 = vsel %vm1328, inf, %v1127
      %v1337 = vsel %vm1329, inf, %v1128
      %v1338 = vsel %vm1330, inf, %v1129
      %v1339 = vsel %vm1331, inf, %v1130
      %v1340 = vsel %vm1332, inf, %v1131
      %v1341 = vsel %vm1333, inf, %v1132
      %v1342 = vsel %vm1334, inf, %v1133
      %v1343 = vsel %vm1335, inf, %v1134
      %v1344 = vsel %vm506, %v1312, inf
      %1345 = vmin.xlane.f32.xlu0 %v1344
      %v1346 = vpop.xlane.xlu0 %1345
      %v1347 = vsel %vm506, %v1313, inf
      %1348 = vmin.xlane.f32.xlu0 %v1347
      %v1349 = vpop.xlane.xlu0 %1348
      %v1350 = vsel %vm506, %v1314, inf
      %1351 = vmin.xlane.f32.xlu0 %v1350
      %v1352 = vpop.xlane.xlu0 %1351
      %v1353 = vsel %vm506, %v1315, inf
      %1354 = vmin.xlane.f32.xlu0 %v1353
      %v1355 = vpop.xlane.xlu0 %1354
      %v1356 = vsel %vm506, %v1316, inf
      %1357 = vmin.xlane.f32.xlu0 %v1356
      %v1358 = vpop.xlane.xlu0 %1357
      %v1359 = vsel %vm506, %v1317, inf
      %1360 = vmin.xlane.f32.xlu0 %v1359
      %v1361 = vpop.xlane.xlu0 %1360
      %v1362 = vsel %vm506, %v1318, inf
      %1363 = vmin.xlane.f32.xlu0 %v1362
      %v1364 = vpop.xlane.xlu0 %1363
      %v1365 = vsel %vm506, %v1319, inf
      %1366 = vmin.xlane.f32.xlu0 %v1365
      %v1367 = vpop.xlane.xlu0 %1366
      %v1368 = vsel %vm531, %v1336, inf
      %1369 = vmin.xlane.f32.xlu0 %v1368
      %v1370 = vpop.xlane.xlu0 %1369
      %v1371 = vsel %vm531, %v1337, inf
      %1372 = vmin.xlane.f32.xlu0 %v1371
      %v1373 = vpop.xlane.xlu0 %1372
      %v1374 = vsel %vm531, %v1338, inf
      %1375 = vmin.xlane.f32.xlu0 %v1374
      %v1376 = vpop.xlane.xlu0 %1375
      %v1377 = vsel %vm531, %v1339, inf
      %1378 = vmin.xlane.f32.xlu0 %v1377
      %v1379 = vpop.xlane.xlu0 %1378
      %v1380 = vsel %vm531, %v1340, inf
      %1381 = vmin.xlane.f32.xlu0 %v1380
      %v1382 = vpop.xlane.xlu0 %1381
      %v1383 = vsel %vm531, %v1341, inf
      %1384 = vmin.xlane.f32.xlu0 %v1383
      %v1385 = vpop.xlane.xlu0 %1384
      %v1386 = vsel %vm531, %v1342, inf
      %1387 = vmin.xlane.f32.xlu0 %v1386
      %v1388 = vpop.xlane.xlu0 %1387
      %v1389 = vsel %vm531, %v1343, inf
      %1390 = vmin.xlane.f32.xlu0 %v1389
      %v1391 = vpop.xlane.xlu0 %1390
      %v1392 = vmin.f32 %v1346, %v1370
      %v1393 = vmin.f32 %v1349, %v1373
      %v1394 = vmin.f32 %v1352, %v1376
      %v1395 = vmin.f32 %v1355, %v1379
      %v1396 = vmin.f32 %v1358, %v1382
      %v1397 = vmin.f32 %v1361, %v1385
      %v1398 = vmin.f32 %v1364, %v1388
      %v1399 = vmin.f32 %v1367, %v1391
      %vm1400 = vcmp.eq.f32.partialorder %v1312, %v1392
      %vm1401 = vcmp.eq.f32.partialorder %v1313, %v1393
      %vm1402 = vcmp.eq.f32.partialorder %v1314, %v1394
      %vm1403 = vcmp.eq.f32.partialorder %v1315, %v1395
      %vm1404 = vcmp.eq.f32.partialorder %v1316, %v1396
      %vm1405 = vcmp.eq.f32.partialorder %v1317, %v1397
      %vm1406 = vcmp.eq.f32.partialorder %v1318, %v1398
      %vm1407 = vcmp.eq.f32.partialorder %v1319, %v1399
      %v1408 = vsel %vm1400, %v498, 1e+09
      %v1409 = vsel %vm1401, %v499, 1e+09
      %v1410 = vsel %vm1402, %v500, 1e+09
      %v1411 = vsel %vm1403, %v501, 1e+09
      %v1412 = vsel %vm1404, %v502, 1e+09
      %v1413 = vsel %vm1405, %v503, 1e+09
      %v1414 = vsel %vm1406, %v504, 1e+09
      %v1415 = vsel %vm1407, %v505, 1e+09
      %v1416 = vsel %vm506, %v1408, inf
      %1417 = vmin.xlane.f32.xlu0 %v1416
      %v1418 = vpop.xlane.xlu0 %1417
      %v1419 = vsel %vm506, %v1409, inf
      %1420 = vmin.xlane.f32.xlu0 %v1419
      %v1421 = vpop.xlane.xlu0 %1420
      %v1422 = vsel %vm506, %v1410, inf
      %1423 = vmin.xlane.f32.xlu0 %v1422
      %v1424 = vpop.xlane.xlu0 %1423
      %v1425 = vsel %vm506, %v1411, inf
      %1426 = vmin.xlane.f32.xlu0 %v1425
      %v1427 = vpop.xlane.xlu0 %1426
      %v1428 = vsel %vm506, %v1412, inf
      %1429 = vmin.xlane.f32.xlu0 %v1428
      %v1430 = vpop.xlane.xlu0 %1429
      %v1431 = vsel %vm506, %v1413, inf
      %1432 = vmin.xlane.f32.xlu0 %v1431
      %v1433 = vpop.xlane.xlu0 %1432
      %v1434 = vsel %vm506, %v1414, inf
      %1435 = vmin.xlane.f32.xlu0 %v1434
      %v1436 = vpop.xlane.xlu0 %1435
      %v1437 = vsel %vm506, %v1415, inf
      %1438 = vmin.xlane.f32.xlu0 %v1437
      %v1439 = vpop.xlane.xlu0 %1438
      %vm1440 = vcmp.eq.f32.partialorder %v1336, %v1392
      %vm1441 = vcmp.eq.f32.partialorder %v1337, %v1393
      %vm1442 = vcmp.eq.f32.partialorder %v1338, %v1394
      %vm1443 = vcmp.eq.f32.partialorder %v1339, %v1395
      %vm1444 = vcmp.eq.f32.partialorder %v1340, %v1396
      %vm1445 = vcmp.eq.f32.partialorder %v1341, %v1397
      %vm1446 = vcmp.eq.f32.partialorder %v1342, %v1398
      %vm1447 = vcmp.eq.f32.partialorder %v1343, %v1399
      %v1448 = vsel %vm1440, %v489, 1e+09
      %v1449 = vsel %vm1441, %v489, 1e+09
      %v1450 = vsel %vm1442, %v489, 1e+09
      %v1451 = vsel %vm1443, %v489, 1e+09
      %v1452 = vsel %vm1444, %v489, 1e+09
      %v1453 = vsel %vm1445, %v489, 1e+09
      %v1454 = vsel %vm1446, %v489, 1e+09
      %v1455 = vsel %vm1447, %v489, 1e+09
      %v1456 = vsel %vm531, %v1448, inf
      %1457 = vmin.xlane.f32.xlu0 %v1456
      %v1458 = vpop.xlane.xlu0 %1457
      %v1459 = vsel %vm531, %v1449, inf
      %1460 = vmin.xlane.f32.xlu0 %v1459
      %v1461 = vpop.xlane.xlu0 %1460
      %v1462 = vsel %vm531, %v1450, inf
      %1463 = vmin.xlane.f32.xlu0 %v1462
      %v1464 = vpop.xlane.xlu0 %1463
      %v1465 = vsel %vm531, %v1451, inf
      %1466 = vmin.xlane.f32.xlu0 %v1465
      %v1467 = vpop.xlane.xlu0 %1466
      %v1468 = vsel %vm531, %v1452, inf
      %1469 = vmin.xlane.f32.xlu0 %v1468
      %v1470 = vpop.xlane.xlu0 %1469
      %v1471 = vsel %vm531, %v1453, inf
      %1472 = vmin.xlane.f32.xlu0 %v1471
      %v1473 = vpop.xlane.xlu0 %1472
      %v1474 = vsel %vm531, %v1454, inf
      %1475 = vmin.xlane.f32.xlu0 %v1474
      %v1476 = vpop.xlane.xlu0 %1475
      %v1477 = vsel %vm531, %v1455, inf
      %1478 = vmin.xlane.f32.xlu0 %v1477
      %v1479 = vpop.xlane.xlu0 %1478
      %v1480 = vmin.f32 %v1418, %v1458
      %v1481 = vmin.f32 %v1421, %v1461
      %v1482 = vmin.f32 %v1424, %v1464
      %v1483 = vmin.f32 %v1427, %v1467
      %v1484 = vmin.f32 %v1430, %v1470
      %v1485 = vmin.f32 %v1433, %v1473
      %v1486 = vmin.f32 %v1436, %v1476
      %v1487 = vmin.f32 %v1439, %v1479
      %vm1488 = vcmask 39968
      %1489 = vst.msk [vmem:[#allocation2] sm:$0xff] %vm1488, %v1392
      %1490 = vst.msk [vmem:[#allocation2 + $0x8] sm:$0xff] %vm1488, %v1393
      %1491 = vst.msk [vmem:[#allocation2 + $0x10] sm:$0xff] %vm1488, %v1394
      %1492 = vst.msk [vmem:[#allocation2 + $0x18] sm:$0xff] %vm1488, %v1395
      %1493 = vst.msk [vmem:[#allocation2 + $0x20] sm:$0xff] %vm1488, %v1396
      %1494 = vst.msk [vmem:[#allocation2 + $0x28] sm:$0xff] %vm1488, %v1397
      %1495 = vst.msk [vmem:[#allocation2 + $0x30] sm:$0xff] %vm1488, %v1398
      %1496 = vst.msk [vmem:[#allocation2 + $0x38] sm:$0xff] %vm1488, %v1399
      %1497 = vst.msk [vmem:[#allocation3] sm:$0xff] %vm1488, %v1480
      %1498 = vst.msk [vmem:[#allocation3 + $0x8] sm:$0xff] %vm1488, %v1481
      %1499 = vst.msk [vmem:[#allocation3 + $0x10] sm:$0xff] %vm1488, %v1482
      %1500 = vst.msk [vmem:[#allocation3 + $0x18] sm:$0xff] %vm1488, %v1483
      %1501 = vst.msk [vmem:[#allocation3 + $0x20] sm:$0xff] %vm1488, %v1484
      %1502 = vst.msk [vmem:[#allocation3 + $0x28] sm:$0xff] %vm1488, %v1485
      %1503 = vst.msk [vmem:[#allocation3 + $0x30] sm:$0xff] %vm1488, %v1486
      %1504 = vst.msk [vmem:[#allocation3 + $0x38] sm:$0xff] %vm1488, %v1487
      %vm1505 = vcmp.eq.f32.partialorder %v498, %v1480
      %vm1506 = vcmp.eq.f32.partialorder %v499, %v1481
      %vm1507 = vcmp.eq.f32.partialorder %v500, %v1482
      %vm1508 = vcmp.eq.f32.partialorder %v501, %v1483
      %vm1509 = vcmp.eq.f32.partialorder %v502, %v1484
      %vm1510 = vcmp.eq.f32.partialorder %v503, %v1485
      %vm1511 = vcmp.eq.f32.partialorder %v504, %v1486
      %vm1512 = vcmp.eq.f32.partialorder %v505, %v1487
      %vm1513 = vmand %vm1400, %vm1505
      %vm1514 = vmand %vm1401, %vm1506
      %vm1515 = vmand %vm1402, %vm1507
      %vm1516 = vmand %vm1403, %vm1508
      %vm1517 = vmand %vm1404, %vm1509
      %vm1518 = vmand %vm1405, %vm1510
      %vm1519 = vmand %vm1406, %vm1511
      %vm1520 = vmand %vm1407, %vm1512
      %v1521 = vsel %vm1513, inf, %v1312
      %v1522 = vsel %vm1514, inf, %v1313
      %v1523 = vsel %vm1515, inf, %v1314
      %v1524 = vsel %vm1516, inf, %v1315
      %v1525 = vsel %vm1517, inf, %v1316
      %v1526 = vsel %vm1518, inf, %v1317
      %v1527 = vsel %vm1519, inf, %v1318
      %v1528 = vsel %vm1520, inf, %v1319
      %vm1529 = vcmp.eq.f32.partialorder %v489, %v1480
      %vm1530 = vcmp.eq.f32.partialorder %v489, %v1481
      %vm1531 = vcmp.eq.f32.partialorder %v489, %v1482
      %vm1532 = vcmp.eq.f32.partialorder %v489, %v1483
      %vm1533 = vcmp.eq.f32.partialorder %v489, %v1484
      %vm1534 = vcmp.eq.f32.partialorder %v489, %v1485
      %vm1535 = vcmp.eq.f32.partialorder %v489, %v1486
      %vm1536 = vcmp.eq.f32.partialorder %v489, %v1487
      %vm1537 = vmand %vm1440, %vm1529
      %vm1538 = vmand %vm1441, %vm1530
      %vm1539 = vmand %vm1442, %vm1531
      %vm1540 = vmand %vm1443, %vm1532
      %vm1541 = vmand %vm1444, %vm1533
      %vm1542 = vmand %vm1445, %vm1534
      %vm1543 = vmand %vm1446, %vm1535
      %vm1544 = vmand %vm1447, %vm1536
      %v1545 = vsel %vm1537, inf, %v1336
      %v1546 = vsel %vm1538, inf, %v1337
      %v1547 = vsel %vm1539, inf, %v1338
      %v1548 = vsel %vm1540, inf, %v1339
      %v1549 = vsel %vm1541, inf, %v1340
      %v1550 = vsel %vm1542, inf, %v1341
      %v1551 = vsel %vm1543, inf, %v1342
      %v1552 = vsel %vm1544, inf, %v1343
      %v1553 = vsel %vm506, %v1521, inf
      %1554 = vmin.xlane.f32.xlu0 %v1553
      %v1555 = vpop.xlane.xlu0 %1554
      %v1556 = vsel %vm506, %v1522, inf
      %1557 = vmin.xlane.f32.xlu0 %v1556
      %v1558 = vpop.xlane.xlu0 %1557
      %v1559 = vsel %vm506, %v1523, inf
      %1560 = vmin.xlane.f32.xlu0 %v1559
      %v1561 = vpop.xlane.xlu0 %1560
      %v1562 = vsel %vm506, %v1524, inf
      %1563 = vmin.xlane.f32.xlu0 %v1562
      %v1564 = vpop.xlane.xlu0 %1563
      %v1565 = vsel %vm506, %v1525, inf
      %1566 = vmin.xlane.f32.xlu0 %v1565
      %v1567 = vpop.xlane.xlu0 %1566
      %v1568 = vsel %vm506, %v1526, inf
      %1569 = vmin.xlane.f32.xlu0 %v1568
      %v1570 = vpop.xlane.xlu0 %1569
      %v1571 = vsel %vm506, %v1527, inf
      %1572 = vmin.xlane.f32.xlu0 %v1571
      %v1573 = vpop.xlane.xlu0 %1572
      %v1574 = vsel %vm506, %v1528, inf
      %1575 = vmin.xlane.f32.xlu0 %v1574
      %v1576 = vpop.xlane.xlu0 %1575
      %v1577 = vsel %vm531, %v1545, inf
      %1578 = vmin.xlane.f32.xlu0 %v1577
      %v1579 = vpop.xlane.xlu0 %1578
      %v1580 = vsel %vm531, %v1546, inf
      %1581 = vmin.xlane.f32.xlu0 %v1580
      %v1582 = vpop.xlane.xlu0 %1581
      %v1583 = vsel %vm531, %v1547, inf
      %1584 = vmin.xlane.f32.xlu0 %v1583
      %v1585 = vpop.xlane.xlu0 %1584
      %v1586 = vsel %vm531, %v1548, inf
      %1587 = vmin.xlane.f32.xlu0 %v1586
      %v1588 = vpop.xlane.xlu0 %1587
      %v1589 = vsel %vm531, %v1549, inf
      %1590 = vmin.xlane.f32.xlu0 %v1589
      %v1591 = vpop.xlane.xlu0 %1590
      %v1592 = vsel %vm531, %v1550, inf
      %1593 = vmin.xlane.f32.xlu0 %v1592
      %v1594 = vpop.xlane.xlu0 %1593
      %v1595 = vsel %vm531, %v1551, inf
      %1596 = vmin.xlane.f32.xlu0 %v1595
      %v1597 = vpop.xlane.xlu0 %1596
      %v1598 = vsel %vm531, %v1552, inf
      %1599 = vmin.xlane.f32.xlu0 %v1598
      %v1600 = vpop.xlane.xlu0 %1599
      %v1601 = vmin.f32 %v1555, %v1579
      %v1602 = vmin.f32 %v1558, %v1582
      %v1603 = vmin.f32 %v1561, %v1585
      %v1604 = vmin.f32 %v1564, %v1588
      %v1605 = vmin.f32 %v1567, %v1591
      %v1606 = vmin.f32 %v1570, %v1594
      %v1607 = vmin.f32 %v1573, %v1597
      %v1608 = vmin.f32 %v1576, %v1600
      %vm1609 = vcmp.eq.f32.partialorder %v1521, %v1601
      %vm1610 = vcmp.eq.f32.partialorder %v1522, %v1602
      %vm1611 = vcmp.eq.f32.partialorder %v1523, %v1603
      %vm1612 = vcmp.eq.f32.partialorder %v1524, %v1604
      %vm1613 = vcmp.eq.f32.partialorder %v1525, %v1605
      %vm1614 = vcmp.eq.f32.partialorder %v1526, %v1606
      %vm1615 = vcmp.eq.f32.partialorder %v1527, %v1607
      %vm1616 = vcmp.eq.f32.partialorder %v1528, %v1608
      %v1617 = vsel %vm1609, %v498, 1e+09
      %v1618 = vsel %vm1610, %v499, 1e+09
      %v1619 = vsel %vm1611, %v500, 1e+09
      %v1620 = vsel %vm1612, %v501, 1e+09
      %v1621 = vsel %vm1613, %v502, 1e+09
      %v1622 = vsel %vm1614, %v503, 1e+09
      %v1623 = vsel %vm1615, %v504, 1e+09
      %v1624 = vsel %vm1616, %v505, 1e+09
      %v1625 = vsel %vm506, %v1617, inf
      %1626 = vmin.xlane.f32.xlu0 %v1625
      %v1627 = vpop.xlane.xlu0 %1626
      %v1628 = vsel %vm506, %v1618, inf
      %1629 = vmin.xlane.f32.xlu0 %v1628
      %v1630 = vpop.xlane.xlu0 %1629
      %v1631 = vsel %vm506, %v1619, inf
      %1632 = vmin.xlane.f32.xlu0 %v1631
      %v1633 = vpop.xlane.xlu0 %1632
      %v1634 = vsel %vm506, %v1620, inf
      %1635 = vmin.xlane.f32.xlu0 %v1634
      %v1636 = vpop.xlane.xlu0 %1635
      %v1637 = vsel %vm506, %v1621, inf
      %1638 = vmin.xlane.f32.xlu0 %v1637
      %v1639 = vpop.xlane.xlu0 %1638
      %v1640 = vsel %vm506, %v1622, inf
      %1641 = vmin.xlane.f32.xlu0 %v1640
      %v1642 = vpop.xlane.xlu0 %1641
      %v1643 = vsel %vm506, %v1623, inf
      %1644 = vmin.xlane.f32.xlu0 %v1643
      %v1645 = vpop.xlane.xlu0 %1644
      %v1646 = vsel %vm506, %v1624, inf
      %1647 = vmin.xlane.f32.xlu0 %v1646
      %v1648 = vpop.xlane.xlu0 %1647
      %vm1649 = vcmp.eq.f32.partialorder %v1545, %v1601
      %vm1650 = vcmp.eq.f32.partialorder %v1546, %v1602
      %vm1651 = vcmp.eq.f32.partialorder %v1547, %v1603
      %vm1652 = vcmp.eq.f32.partialorder %v1548, %v1604
      %vm1653 = vcmp.eq.f32.partialorder %v1549, %v1605
      %vm1654 = vcmp.eq.f32.partialorder %v1550, %v1606
      %vm1655 = vcmp.eq.f32.partialorder %v1551, %v1607
      %vm1656 = vcmp.eq.f32.partialorder %v1552, %v1608
      %v1657 = vsel %vm1649, %v489, 1e+09
      %v1658 = vsel %vm1650, %v489, 1e+09
      %v1659 = vsel %vm1651, %v489, 1e+09
      %v1660 = vsel %vm1652, %v489, 1e+09
      %v1661 = vsel %vm1653, %v489, 1e+09
      %v1662 = vsel %vm1654, %v489, 1e+09
      %v1663 = vsel %vm1655, %v489, 1e+09
      %v1664 = vsel %vm1656, %v489, 1e+09
      %v1665 = vsel %vm531, %v1657, inf
      %1666 = vmin.xlane.f32.xlu0 %v1665
      %v1667 = vpop.xlane.xlu0 %1666
      %v1668 = vsel %vm531, %v1658, inf
      %1669 = vmin.xlane.f32.xlu0 %v1668
      %v1670 = vpop.xlane.xlu0 %1669
      %v1671 = vsel %vm531, %v1659, inf
      %1672 = vmin.xlane.f32.xlu0 %v1671
      %v1673 = vpop.xlane.xlu0 %1672
      %v1674 = vsel %vm531, %v1660, inf
      %1675 = vmin.xlane.f32.xlu0 %v1674
      %v1676 = vpop.xlane.xlu0 %1675
      %v1677 = vsel %vm531, %v1661, inf
      %1678 = vmin.xlane.f32.xlu0 %v1677
      %v1679 = vpop.xlane.xlu0 %1678
      %v1680 = vsel %vm531, %v1662, inf
      %1681 = vmin.xlane.f32.xlu0 %v1680
      %v1682 = vpop.xlane.xlu0 %1681
      %v1683 = vsel %vm531, %v1663, inf
      %1684 = vmin.xlane.f32.xlu0 %v1683
      %v1685 = vpop.xlane.xlu0 %1684
      %v1686 = vsel %vm531, %v1664, inf
      %1687 = vmin.xlane.f32.xlu0 %v1686
      %v1688 = vpop.xlane.xlu0 %1687
      %v1689 = vmin.f32 %v1627, %v1667
      %v1690 = vmin.f32 %v1630, %v1670
      %v1691 = vmin.f32 %v1633, %v1673
      %v1692 = vmin.f32 %v1636, %v1676
      %v1693 = vmin.f32 %v1639, %v1679
      %v1694 = vmin.f32 %v1642, %v1682
      %v1695 = vmin.f32 %v1645, %v1685
      %v1696 = vmin.f32 %v1648, %v1688
      %vm1697 = vcmask 48168
      %1698 = vst.msk [vmem:[#allocation2] sm:$0xff] %vm1697, %v1601
      %1699 = vst.msk [vmem:[#allocation2 + $0x8] sm:$0xff] %vm1697, %v1602
      %1700 = vst.msk [vmem:[#allocation2 + $0x10] sm:$0xff] %vm1697, %v1603
      %1701 = vst.msk [vmem:[#allocation2 + $0x18] sm:$0xff] %vm1697, %v1604
      %1702 = vst.msk [vmem:[#allocation2 + $0x20] sm:$0xff] %vm1697, %v1605
      %1703 = vst.msk [vmem:[#allocation2 + $0x28] sm:$0xff] %vm1697, %v1606
      %1704 = vst.msk [vmem:[#allocation2 + $0x30] sm:$0xff] %vm1697, %v1607
      %1705 = vst.msk [vmem:[#allocation2 + $0x38] sm:$0xff] %vm1697, %v1608
      %1706 = vst.msk [vmem:[#allocation3] sm:$0xff] %vm1697, %v1689
      %1707 = vst.msk [vmem:[#allocation3 + $0x8] sm:$0xff] %vm1697, %v1690
      %1708 = vst.msk [vmem:[#allocation3 + $0x10] sm:$0xff] %vm1697, %v1691
      %1709 = vst.msk [vmem:[#allocation3 + $0x18] sm:$0xff] %vm1697, %v1692
      %1710 = vst.msk [vmem:[#allocation3 + $0x20] sm:$0xff] %vm1697, %v1693
      %1711 = vst.msk [vmem:[#allocation3 + $0x28] sm:$0xff] %vm1697, %v1694
      %1712 = vst.msk [vmem:[#allocation3 + $0x30] sm:$0xff] %vm1697, %v1695
      %1713 = vst.msk [vmem:[#allocation3 + $0x38] sm:$0xff] %vm1697, %v1696
      %vm1714 = vcmp.eq.f32.partialorder %v498, %v1689
      %vm1715 = vcmp.eq.f32.partialorder %v499, %v1690
      %vm1716 = vcmp.eq.f32.partialorder %v500, %v1691
      %vm1717 = vcmp.eq.f32.partialorder %v501, %v1692
      %vm1718 = vcmp.eq.f32.partialorder %v502, %v1693
      %vm1719 = vcmp.eq.f32.partialorder %v503, %v1694
      %vm1720 = vcmp.eq.f32.partialorder %v504, %v1695
      %vm1721 = vcmp.eq.f32.partialorder %v505, %v1696
      %vm1722 = vmand %vm1609, %vm1714
      %vm1723 = vmand %vm1610, %vm1715
      %vm1724 = vmand %vm1611, %vm1716
      %vm1725 = vmand %vm1612, %vm1717
      %vm1726 = vmand %vm1613, %vm1718
      %vm1727 = vmand %vm1614, %vm1719
      %vm1728 = vmand %vm1615, %vm1720
      %vm1729 = vmand %vm1616, %vm1721
      %v1730 = vsel %vm1722, inf, %v1521
      %v1731 = vsel %vm1723, inf, %v1522
      %v1732 = vsel %vm1724, inf, %v1523
      %v1733 = vsel %vm1725, inf, %v1524
      %v1734 = vsel %vm1726, inf, %v1525
      %v1735 = vsel %vm1727, inf, %v1526
      %v1736 = vsel %vm1728, inf, %v1527
      %v1737 = vsel %vm1729, inf, %v1528
      %vm1738 = vcmp.eq.f32.partialorder %v489, %v1689
      %vm1739 = vcmp.eq.f32.partialorder %v489, %v1690
      %vm1740 = vcmp.eq.f32.partialorder %v489, %v1691
      %vm1741 = vcmp.eq.f32.partialorder %v489, %v1692
      %vm1742 = vcmp.eq.f32.partialorder %v489, %v1693
      %vm1743 = vcmp.eq.f32.partialorder %v489, %v1694
      %vm1744 = vcmp.eq.f32.partialorder %v489, %v1695
      %vm1745 = vcmp.eq.f32.partialorder %v489, %v1696
      %vm1746 = vmand %vm1649, %vm1738
      %vm1747 = vmand %vm1650, %vm1739
      %vm1748 = vmand %vm1651, %vm1740
      %vm1749 = vmand %vm1652, %vm1741
      %vm1750 = vmand %vm1653, %vm1742
      %vm1751 = vmand %vm1654, %vm1743
      %vm1752 = vmand %vm1655, %vm1744
      %vm1753 = vmand %vm1656, %vm1745
      %v1754 = vsel %vm1746, inf, %v1545
      %v1755 = vsel %vm1747, inf, %v1546
      %v1756 = vsel %vm1748, inf, %v1547
      %v1757 = vsel %vm1749, inf, %v1548
      %v1758 = vsel %vm1750, inf, %v1549
      %v1759 = vsel %vm1751, inf, %v1550
      %v1760 = vsel %vm1752, inf, %v1551
      %v1761 = vsel %vm1753, inf, %v1552
      %v1762 = vsel %vm506, %v1730, inf
      %1763 = vmin.xlane.f32.xlu0 %v1762
      %v1764 = vpop.xlane.xlu0 %1763
      %v1765 = vsel %vm506, %v1731, inf
      %1766 = vmin.xlane.f32.xlu0 %v1765
      %v1767 = vpop.xlane.xlu0 %1766
      %v1768 = vsel %vm506, %v1732, inf
      %1769 = vmin.xlane.f32.xlu0 %v1768
      %v1770 = vpop.xlane.xlu0 %1769
      %v1771 = vsel %vm506, %v1733, inf
      %1772 = vmin.xlane.f32.xlu0 %v1771
      %v1773 = vpop.xlane.xlu0 %1772
      %v1774 = vsel %vm506, %v1734, inf
      %1775 = vmin.xlane.f32.xlu0 %v1774
      %v1776 = vpop.xlane.xlu0 %1775
      %v1777 = vsel %vm506, %v1735, inf
      %1778 = vmin.xlane.f32.xlu0 %v1777
      %v1779 = vpop.xlane.xlu0 %1778
      %v1780 = vsel %vm506, %v1736, inf
      %1781 = vmin.xlane.f32.xlu0 %v1780
      %v1782 = vpop.xlane.xlu0 %1781
      %v1783 = vsel %vm506, %v1737, inf
      %1784 = vmin.xlane.f32.xlu0 %v1783
      %v1785 = vpop.xlane.xlu0 %1784
      %v1786 = vsel %vm531, %v1754, inf
      %1787 = vmin.xlane.f32.xlu0 %v1786
      %v1788 = vpop.xlane.xlu0 %1787
      %v1789 = vsel %vm531, %v1755, inf
      %1790 = vmin.xlane.f32.xlu0 %v1789
      %v1791 = vpop.xlane.xlu0 %1790
      %v1792 = vsel %vm531, %v1756, inf
      %1793 = vmin.xlane.f32.xlu0 %v1792
      %v1794 = vpop.xlane.xlu0 %1793
      %v1795 = vsel %vm531, %v1757, inf
      %1796 = vmin.xlane.f32.xlu0 %v1795
      %v1797 = vpop.xlane.xlu0 %1796
      %v1798 = vsel %vm531, %v1758, inf
      %1799 = vmin.xlane.f32.xlu0 %v1798
      %v1800 = vpop.xlane.xlu0 %1799
      %v1801 = vsel %vm531, %v1759, inf
      %1802 = vmin.xlane.f32.xlu0 %v1801
      %v1803 = vpop.xlane.xlu0 %1802
      %v1804 = vsel %vm531, %v1760, inf
      %1805 = vmin.xlane.f32.xlu0 %v1804
      %v1806 = vpop.xlane.xlu0 %1805
      %v1807 = vsel %vm531, %v1761, inf
      %1808 = vmin.xlane.f32.xlu0 %v1807
      %v1809 = vpop.xlane.xlu0 %1808
      %v1810 = vmin.f32 %v1764, %v1788
      %v1811 = vmin.f32 %v1767, %v1791
      %v1812 = vmin.f32 %v1770, %v1794
      %v1813 = vmin.f32 %v1773, %v1797
      %v1814 = vmin.f32 %v1776, %v1800
      %v1815 = vmin.f32 %v1779, %v1803
      %v1816 = vmin.f32 %v1782, %v1806
      %v1817 = vmin.f32 %v1785, %v1809
      %vm1818 = vcmp.eq.f32.partialorder %v1730, %v1810
      %vm1819 = vcmp.eq.f32.partialorder %v1731, %v1811
      %vm1820 = vcmp.eq.f32.partialorder %v1732, %v1812
      %vm1821 = vcmp.eq.f32.partialorder %v1733, %v1813
      %vm1822 = vcmp.eq.f32.partialorder %v1734, %v1814
      %vm1823 = vcmp.eq.f32.partialorder %v1735, %v1815
      %vm1824 = vcmp.eq.f32.partialorder %v1736, %v1816
      %vm1825 = vcmp.eq.f32.partialorder %v1737, %v1817
      %v1826 = vsel %vm1818, %v498, 1e+09
      %v1827 = vsel %vm1819, %v499, 1e+09
      %v1828 = vsel %vm1820, %v500, 1e+09
      %v1829 = vsel %vm1821, %v501, 1e+09
      %v1830 = vsel %vm1822, %v502, 1e+09
      %v1831 = vsel %vm1823, %v503, 1e+09
      %v1832 = vsel %vm1824, %v504, 1e+09
      %v1833 = vsel %vm1825, %v505, 1e+09
      %v1834 = vsel %vm506, %v1826, inf
      %1835 = vmin.xlane.f32.xlu0 %v1834
      %v1836 = vpop.xlane.xlu0 %1835
      %v1837 = vsel %vm506, %v1827, inf
      %1838 = vmin.xlane.f32.xlu0 %v1837
      %v1839 = vpop.xlane.xlu0 %1838
      %v1840 = vsel %vm506, %v1828, inf
      %1841 = vmin.xlane.f32.xlu0 %v1840
      %v1842 = vpop.xlane.xlu0 %1841
      %v1843 = vsel %vm506, %v1829, inf
      %1844 = vmin.xlane.f32.xlu0 %v1843
      %v1845 = vpop.xlane.xlu0 %1844
      %v1846 = vsel %vm506, %v1830, inf
      %1847 = vmin.xlane.f32.xlu0 %v1846
      %v1848 = vpop.xlane.xlu0 %1847
      %v1849 = vsel %vm506, %v1831, inf
      %1850 = vmin.xlane.f32.xlu0 %v1849
      %v1851 = vpop.xlane.xlu0 %1850
      %v1852 = vsel %vm506, %v1832, inf
      %1853 = vmin.xlane.f32.xlu0 %v1852
      %v1854 = vpop.xlane.xlu0 %1853
      %v1855 = vsel %vm506, %v1833, inf
      %1856 = vmin.xlane.f32.xlu0 %v1855
      %v1857 = vpop.xlane.xlu0 %1856
      %vm1858 = vcmp.eq.f32.partialorder %v1754, %v1810
      %vm1859 = vcmp.eq.f32.partialorder %v1755, %v1811
      %vm1860 = vcmp.eq.f32.partialorder %v1756, %v1812
      %vm1861 = vcmp.eq.f32.partialorder %v1757, %v1813
      %vm1862 = vcmp.eq.f32.partialorder %v1758, %v1814
      %vm1863 = vcmp.eq.f32.partialorder %v1759, %v1815
      %vm1864 = vcmp.eq.f32.partialorder %v1760, %v1816
      %vm1865 = vcmp.eq.f32.partialorder %v1761, %v1817
      %v1866 = vsel %vm1858, %v489, 1e+09
      %v1867 = vsel %vm1859, %v489, 1e+09
      %v1868 = vsel %vm1860, %v489, 1e+09
      %v1869 = vsel %vm1861, %v489, 1e+09
      %v1870 = vsel %vm1862, %v489, 1e+09
      %v1871 = vsel %vm1863, %v489, 1e+09
      %v1872 = vsel %vm1864, %v489, 1e+09
      %v1873 = vsel %vm1865, %v489, 1e+09
      %v1874 = vsel %vm531, %v1866, inf
      %1875 = vmin.xlane.f32.xlu0 %v1874
      %v1876 = vpop.xlane.xlu0 %1875
      %v1877 = vsel %vm531, %v1867, inf
      %1878 = vmin.xlane.f32.xlu0 %v1877
      %v1879 = vpop.xlane.xlu0 %1878
      %v1880 = vsel %vm531, %v1868, inf
      %1881 = vmin.xlane.f32.xlu0 %v1880
      %v1882 = vpop.xlane.xlu0 %1881
      %v1883 = vsel %vm531, %v1869, inf
      %1884 = vmin.xlane.f32.xlu0 %v1883
      %v1885 = vpop.xlane.xlu0 %1884
      %v1886 = vsel %vm531, %v1870, inf
      %1887 = vmin.xlane.f32.xlu0 %v1886
      %v1888 = vpop.xlane.xlu0 %1887
      %v1889 = vsel %vm531, %v1871, inf
      %1890 = vmin.xlane.f32.xlu0 %v1889
      %v1891 = vpop.xlane.xlu0 %1890
      %v1892 = vsel %vm531, %v1872, inf
      %1893 = vmin.xlane.f32.xlu0 %v1892
      %v1894 = vpop.xlane.xlu0 %1893
      %v1895 = vsel %vm531, %v1873, inf
      %1896 = vmin.xlane.f32.xlu0 %v1895
      %v1897 = vpop.xlane.xlu0 %1896
      %v1898 = vmin.f32 %v1836, %v1876
      %v1899 = vmin.f32 %v1839, %v1879
      %v1900 = vmin.f32 %v1842, %v1882
      %v1901 = vmin.f32 %v1845, %v1885
      %v1902 = vmin.f32 %v1848, %v1888
      %v1903 = vmin.f32 %v1851, %v1891
      %v1904 = vmin.f32 %v1854, %v1894
      %v1905 = vmin.f32 %v1857, %v1897
      %vm1906 = vcmask 56368
      %1907 = vst.msk [vmem:[#allocation2] sm:$0xff] %vm1906, %v1810
      %1908 = vst.msk [vmem:[#allocation2 + $0x8] sm:$0xff] %vm1906, %v1811
      %1909 = vst.msk [vmem:[#allocation2 + $0x10] sm:$0xff] %vm1906, %v1812
      %1910 = vst.msk [vmem:[#allocation2 + $0x18] sm:$0xff] %vm1906, %v1813
      %1911 = vst.msk [vmem:[#allocation2 + $0x20] sm:$0xff] %vm1906, %v1814
      %1912 = vst.msk [vmem:[#allocation2 + $0x28] sm:$0xff] %vm1906, %v1815
      %1913 = vst.msk [vmem:[#allocation2 + $0x30] sm:$0xff] %vm1906, %v1816
      %1914 = vst.msk [vmem:[#allocation2 + $0x38] sm:$0xff] %vm1906, %v1817
      %1915 = vst.msk [vmem:[#allocation3] sm:$0xff] %vm1906, %v1898
      %1916 = vst.msk [vmem:[#allocation3 + $0x8] sm:$0xff] %vm1906, %v1899
      %1917 = vst.msk [vmem:[#allocation3 + $0x10] sm:$0xff] %vm1906, %v1900
      %1918 = vst.msk [vmem:[#allocation3 + $0x18] sm:$0xff] %vm1906, %v1901
      %1919 = vst.msk [vmem:[#allocation3 + $0x20] sm:$0xff] %vm1906, %v1902
      %1920 = vst.msk [vmem:[#allocation3 + $0x28] sm:$0xff] %vm1906, %v1903
      %1921 = vst.msk [vmem:[#allocation3 + $0x30] sm:$0xff] %vm1906, %v1904
      %1922 = vst.msk [vmem:[#allocation3 + $0x38] sm:$0xff] %vm1906, %v1905
      %vm1923 = vcmp.eq.f32.partialorder %v498, %v1898
      %vm1924 = vcmp.eq.f32.partialorder %v499, %v1899
      %vm1925 = vcmp.eq.f32.partialorder %v500, %v1900
      %vm1926 = vcmp.eq.f32.partialorder %v501, %v1901
      %vm1927 = vcmp.eq.f32.partialorder %v502, %v1902
      %vm1928 = vcmp.eq.f32.partialorder %v503, %v1903
      %vm1929 = vcmp.eq.f32.partialorder %v504, %v1904
      %vm1930 = vcmp.eq.f32.partialorder %v505, %v1905
      %vm1931 = vmand %vm1818, %vm1923
      %vm1932 = vmand %vm1819, %vm1924
      %vm1933 = vmand %vm1820, %vm1925
      %vm1934 = vmand %vm1821, %vm1926
      %vm1935 = vmand %vm1822, %vm1927
      %vm1936 = vmand %vm1823, %vm1928
      %vm1937 = vmand %vm1824, %vm1929
      %vm1938 = vmand %vm1825, %vm1930
      %v1939 = vsel %vm1931, inf, %v1730
      %v1940 = vsel %vm1932, inf, %v1731
      %v1941 = vsel %vm1933, inf, %v1732
      %v1942 = vsel %vm1934, inf, %v1733
      %v1943 = vsel %vm1935, inf, %v1734
      %v1944 = vsel %vm1936, inf, %v1735
      %v1945 = vsel %vm1937, inf, %v1736
      %v1946 = vsel %vm1938, inf, %v1737
      %vm1947 = vcmp.eq.f32.partialorder %v489, %v1898
      %vm1948 = vcmp.eq.f32.partialorder %v489, %v1899
      %vm1949 = vcmp.eq.f32.partialorder %v489, %v1900
      %vm1950 = vcmp.eq.f32.partialorder %v489, %v1901
      %vm1951 = vcmp.eq.f32.partialorder %v489, %v1902
      %vm1952 = vcmp.eq.f32.partialorder %v489, %v1903
      %vm1953 = vcmp.eq.f32.partialorder %v489, %v1904
      %vm1954 = vcmp.eq.f32.partialorder %v489, %v1905
      %vm1955 = vmand %vm1858, %vm1947
      %vm1956 = vmand %vm1859, %vm1948
      %vm1957 = vmand %vm1860, %vm1949
      %vm1958 = vmand %vm1861, %vm1950
      %vm1959 = vmand %vm1862, %vm1951
      %vm1960 = vmand %vm1863, %vm1952
      %vm1961 = vmand %vm1864, %vm1953
      %vm1962 = vmand %vm1865, %vm1954
      %v1963 = vsel %vm1955, inf, %v1754
      %v1964 = vsel %vm1956, inf, %v1755
      %v1965 = vsel %vm1957, inf, %v1756
      %v1966 = vsel %vm1958, inf, %v1757
      %v1967 = vsel %vm1959, inf, %v1758
      %v1968 = vsel %vm1960, inf, %v1759
      %v1969 = vsel %vm1961, inf, %v1760
      %v1970 = vsel %vm1962, inf, %v1761
      %v1971 = vsel %vm506, %v1939, inf
      %1972 = vmin.xlane.f32.xlu0 %v1971
      %v1973 = vpop.xlane.xlu0 %1972
      %v1974 = vsel %vm506, %v1940, inf
      %1975 = vmin.xlane.f32.xlu0 %v1974
      %v1976 = vpop.xlane.xlu0 %1975
      %v1977 = vsel %vm506, %v1941, inf
      %1978 = vmin.xlane.f32.xlu0 %v1977
      %v1979 = vpop.xlane.xlu0 %1978
      %v1980 = vsel %vm506, %v1942, inf
      %1981 = vmin.xlane.f32.xlu0 %v1980
      %v1982 = vpop.xlane.xlu0 %1981
      %v1983 = vsel %vm506, %v1943, inf
      %1984 = vmin.xlane.f32.xlu0 %v1983
      %v1985 = vpop.xlane.xlu0 %1984
      %v1986 = vsel %vm506, %v1944, inf
      %1987 = vmin.xlane.f32.xlu0 %v1986
      %v1988 = vpop.xlane.xlu0 %1987
      %v1989 = vsel %vm506, %v1945, inf
      %1990 = vmin.xlane.f32.xlu0 %v1989
      %v1991 = vpop.xlane.xlu0 %1990
      %v1992 = vsel %vm506, %v1946, inf
      %1993 = vmin.xlane.f32.xlu0 %v1992
      %v1994 = vpop.xlane.xlu0 %1993
      %v1995 = vsel %vm531, %v1963, inf
      %1996 = vmin.xlane.f32.xlu0 %v1995
      %v1997 = vpop.xlane.xlu0 %1996
      %v1998 = vsel %vm531, %v1964, inf
      %1999 = vmin.xlane.f32.xlu0 %v1998
      %v2000 = vpop.xlane.xlu0 %1999
      %v2001 = vsel %vm531, %v1965, inf
      %2002 = vmin.xlane.f32.xlu0 %v2001
      %v2003 = vpop.xlane.xlu0 %2002
      %v2004 = vsel %vm531, %v1966, inf
      %2005 = vmin.xlane.f32.xlu0 %v2004
      %v2006 = vpop.xlane.xlu0 %2005
      %v2007 = vsel %vm531, %v1967, inf
      %2008 = vmin.xlane.f32.xlu0 %v2007
      %v2009 = vpop.xlane.xlu0 %2008
      %v2010 = vsel %vm531, %v1968, inf
      %2011 = vmin.xlane.f32.xlu0 %v2010
      %v2012 = vpop.xlane.xlu0 %2011
      %v2013 = vsel %vm531, %v1969, inf
      %2014 = vmin.xlane.f32.xlu0 %v2013
      %v2015 = vpop.xlane.xlu0 %2014
      %v2016 = vsel %vm531, %v1970, inf
      %2017 = vmin.xlane.f32.xlu0 %v2016
      %v2018 = vpop.xlane.xlu0 %2017
      %v2019 = vmin.f32 %v1973, %v1997
      %v2020 = vmin.f32 %v1976, %v2000
      %v2021 = vmin.f32 %v1979, %v2003
      %v2022 = vmin.f32 %v1982, %v2006
      %v2023 = vmin.f32 %v1985, %v2009
      %v2024 = vmin.f32 %v1988, %v2012
      %v2025 = vmin.f32 %v1991, %v2015
      %v2026 = vmin.f32 %v1994, %v2018
      %vm2027 = vcmp.eq.f32.partialorder %v1939, %v2019
      %vm2028 = vcmp.eq.f32.partialorder %v1940, %v2020
      %vm2029 = vcmp.eq.f32.partialorder %v1941, %v2021
      %vm2030 = vcmp.eq.f32.partialorder %v1942, %v2022
      %vm2031 = vcmp.eq.f32.partialorder %v1943, %v2023
      %vm2032 = vcmp.eq.f32.partialorder %v1944, %v2024
      %vm2033 = vcmp.eq.f32.partialorder %v1945, %v2025
      %vm2034 = vcmp.eq.f32.partialorder %v1946, %v2026
      %v2035 = vsel %vm2027, %v498, 1e+09
      %v2036 = vsel %vm2028, %v499, 1e+09
      %v2037 = vsel %vm2029, %v500, 1e+09
      %v2038 = vsel %vm2030, %v501, 1e+09
      %v2039 = vsel %vm2031, %v502, 1e+09
      %v2040 = vsel %vm2032, %v503, 1e+09
      %v2041 = vsel %vm2033, %v504, 1e+09
      %v2042 = vsel %vm2034, %v505, 1e+09
      %v2043 = vsel %vm506, %v2035, inf
      %2044 = vmin.xlane.f32.xlu0 %v2043
      %v2045 = vpop.xlane.xlu0 %2044
      %v2046 = vsel %vm506, %v2036, inf
      %2047 = vmin.xlane.f32.xlu0 %v2046
      %v2048 = vpop.xlane.xlu0 %2047
      %v2049 = vsel %vm506, %v2037, inf
      %2050 = vmin.xlane.f32.xlu0 %v2049
      %v2051 = vpop.xlane.xlu0 %2050
      %v2052 = vsel %vm506, %v2038, inf
      %2053 = vmin.xlane.f32.xlu0 %v2052
      %v2054 = vpop.xlane.xlu0 %2053
      %v2055 = vsel %vm506, %v2039, inf
      %2056 = vmin.xlane.f32.xlu0 %v2055
      %v2057 = vpop.xlane.xlu0 %2056
      %v2058 = vsel %vm506, %v2040, inf
      %2059 = vmin.xlane.f32.xlu0 %v2058
      %v2060 = vpop.xlane.xlu0 %2059
      %v2061 = vsel %vm506, %v2041, inf
      %2062 = vmin.xlane.f32.xlu0 %v2061
      %v2063 = vpop.xlane.xlu0 %2062
      %v2064 = vsel %vm506, %v2042, inf
      %2065 = vmin.xlane.f32.xlu0 %v2064
      %v2066 = vpop.xlane.xlu0 %2065
      %vm2067 = vcmp.eq.f32.partialorder %v1963, %v2019
      %vm2068 = vcmp.eq.f32.partialorder %v1964, %v2020
      %vm2069 = vcmp.eq.f32.partialorder %v1965, %v2021
      %vm2070 = vcmp.eq.f32.partialorder %v1966, %v2022
      %vm2071 = vcmp.eq.f32.partialorder %v1967, %v2023
      %vm2072 = vcmp.eq.f32.partialorder %v1968, %v2024
      %vm2073 = vcmp.eq.f32.partialorder %v1969, %v2025
      %vm2074 = vcmp.eq.f32.partialorder %v1970, %v2026
      %v2075 = vsel %vm2067, %v489, 1e+09
      %v2076 = vsel %vm2068, %v489, 1e+09
      %v2077 = vsel %vm2069, %v489, 1e+09
      %v2078 = vsel %vm2070, %v489, 1e+09
      %v2079 = vsel %vm2071, %v489, 1e+09
      %v2080 = vsel %vm2072, %v489, 1e+09
      %v2081 = vsel %vm2073, %v489, 1e+09
      %v2082 = vsel %vm2074, %v489, 1e+09
      %v2083 = vsel %vm531, %v2075, inf
      %2084 = vmin.xlane.f32.xlu0 %v2083
      %v2085 = vpop.xlane.xlu0 %2084
      %v2086 = vsel %vm531, %v2076, inf
      %2087 = vmin.xlane.f32.xlu0 %v2086
      %v2088 = vpop.xlane.xlu0 %2087
      %v2089 = vsel %vm531, %v2077, inf
      %2090 = vmin.xlane.f32.xlu0 %v2089
      %v2091 = vpop.xlane.xlu0 %2090
      %v2092 = vsel %vm531, %v2078, inf
      %2093 = vmin.xlane.f32.xlu0 %v2092
      %v2094 = vpop.xlane.xlu0 %2093
      %v2095 = vsel %vm531, %v2079, inf
      %2096 = vmin.xlane.f32.xlu0 %v2095
      %v2097 = vpop.xlane.xlu0 %2096
      %v2098 = vsel %vm531, %v2080, inf
      %2099 = vmin.xlane.f32.xlu0 %v2098
      %v2100 = vpop.xlane.xlu0 %2099
      %v2101 = vsel %vm531, %v2081, inf
      %2102 = vmin.xlane.f32.xlu0 %v2101
      %v2103 = vpop.xlane.xlu0 %2102
      %v2104 = vsel %vm531, %v2082, inf
      %2105 = vmin.xlane.f32.xlu0 %v2104
      %v2106 = vpop.xlane.xlu0 %2105
      %v2107 = vmin.f32 %v2045, %v2085
      %v2108 = vmin.f32 %v2048, %v2088
      %v2109 = vmin.f32 %v2051, %v2091
      %v2110 = vmin.f32 %v2054, %v2094
      %v2111 = vmin.f32 %v2057, %v2097
      %v2112 = vmin.f32 %v2060, %v2100
      %v2113 = vmin.f32 %v2063, %v2103
      %v2114 = vmin.f32 %v2066, %v2106
      %vm2115 = vcmask 64568
      %2116 = vst.msk [vmem:[#allocation2] sm:$0xff] %vm2115, %v2019
      %2117 = vst.msk [vmem:[#allocation2 + $0x8] sm:$0xff] %vm2115, %v2020
      %2118 = vst.msk [vmem:[#allocation2 + $0x10] sm:$0xff] %vm2115, %v2021
      %2119 = vst.msk [vmem:[#allocation2 + $0x18] sm:$0xff] %vm2115, %v2022
      %2120 = vst.msk [vmem:[#allocation2 + $0x20] sm:$0xff] %vm2115, %v2023
      %2121 = vst.msk [vmem:[#allocation2 + $0x28] sm:$0xff] %vm2115, %v2024
      %2122 = vst.msk [vmem:[#allocation2 + $0x30] sm:$0xff] %vm2115, %v2025
      %2123 = vst.msk [vmem:[#allocation2 + $0x38] sm:$0xff] %vm2115, %v2026
      %2124 = vst.msk [vmem:[#allocation3] sm:$0xff] %vm2115, %v2107
      %2125 = vst.msk [vmem:[#allocation3 + $0x8] sm:$0xff] %vm2115, %v2108
      %2126 = vst.msk [vmem:[#allocation3 + $0x10] sm:$0xff] %vm2115, %v2109
      %2127 = vst.msk [vmem:[#allocation3 + $0x18] sm:$0xff] %vm2115, %v2110
      %2128 = vst.msk [vmem:[#allocation3 + $0x20] sm:$0xff] %vm2115, %v2111
      %2129 = vst.msk [vmem:[#allocation3 + $0x28] sm:$0xff] %vm2115, %v2112
      %2130 = vst.msk [vmem:[#allocation3 + $0x30] sm:$0xff] %vm2115, %v2113
      %2131 = vst.msk [vmem:[#allocation3 + $0x38] sm:$0xff] %vm2115, %v2114
      %vm2132 = vcmp.eq.f32.partialorder %v498, %v2107
      %vm2133 = vcmp.eq.f32.partialorder %v499, %v2108
      %vm2134 = vcmp.eq.f32.partialorder %v500, %v2109
      %vm2135 = vcmp.eq.f32.partialorder %v501, %v2110
      %vm2136 = vcmp.eq.f32.partialorder %v502, %v2111
      %vm2137 = vcmp.eq.f32.partialorder %v503, %v2112
      %vm2138 = vcmp.eq.f32.partialorder %v504, %v2113
      %vm2139 = vcmp.eq.f32.partialorder %v505, %v2114
      %vm2140 = vmand %vm2027, %vm2132
      %vm2141 = vmand %vm2028, %vm2133
      %vm2142 = vmand %vm2029, %vm2134
      %vm2143 = vmand %vm2030, %vm2135
      %vm2144 = vmand %vm2031, %vm2136
      %vm2145 = vmand %vm2032, %vm2137
      %vm2146 = vmand %vm2033, %vm2138
      %vm2147 = vmand %vm2034, %vm2139
      %v2148 = vsel %vm2140, inf, %v1939
      %v2149 = vsel %vm2141, inf, %v1940
      %v2150 = vsel %vm2142, inf, %v1941
      %v2151 = vsel %vm2143, inf, %v1942
      %v2152 = vsel %vm2144, inf, %v1943
      %v2153 = vsel %vm2145, inf, %v1944
      %v2154 = vsel %vm2146, inf, %v1945
      %v2155 = vsel %vm2147, inf, %v1946
      %vm2156 = vcmp.eq.f32.partialorder %v489, %v2107
      %vm2157 = vcmp.eq.f32.partialorder %v489, %v2108
      %vm2158 = vcmp.eq.f32.partialorder %v489, %v2109
      %vm2159 = vcmp.eq.f32.partialorder %v489, %v2110
      %vm2160 = vcmp.eq.f32.partialorder %v489, %v2111
      %vm2161 = vcmp.eq.f32.partialorder %v489, %v2112
      %vm2162 = vcmp.eq.f32.partialorder %v489, %v2113
      %vm2163 = vcmp.eq.f32.partialorder %v489, %v2114
      %vm2164 = vmand %vm2067, %vm2156
      %vm2165 = vmand %vm2068, %vm2157
      %vm2166 = vmand %vm2069, %vm2158
      %vm2167 = vmand %vm2070, %vm2159
      %vm2168 = vmand %vm2071, %vm2160
      %vm2169 = vmand %vm2072, %vm2161
      %vm2170 = vmand %vm2073, %vm2162
      %vm2171 = vmand %vm2074, %vm2163
      %v2172 = vsel %vm2164, inf, %v1963
      %v2173 = vsel %vm2165, inf, %v1964
      %v2174 = vsel %vm2166, inf, %v1965
      %v2175 = vsel %vm2167, inf, %v1966
      %v2176 = vsel %vm2168, inf, %v1967
      %v2177 = vsel %vm2169, inf, %v1968
      %v2178 = vsel %vm2170, inf, %v1969
      %v2179 = vsel %vm2171, inf, %v1970
      %v2180 = vsel %vm506, %v2148, inf
      %2181 = vmin.xlane.f32.xlu0 %v2180
      %v2182 = vpop.xlane.xlu0 %2181
      %v2183 = vsel %vm506, %v2149, inf
      %2184 = vmin.xlane.f32.xlu0 %v2183
      %v2185 = vpop.xlane.xlu0 %2184
      %v2186 = vsel %vm506, %v2150, inf
      %2187 = vmin.xlane.f32.xlu0 %v2186
      %v2188 = vpop.xlane.xlu0 %2187
      %v2189 = vsel %vm506, %v2151, inf
      %2190 = vmin.xlane.f32.xlu0 %v2189
      %v2191 = vpop.xlane.xlu0 %2190
      %v2192 = vsel %vm506, %v2152, inf
      %2193 = vmin.xlane.f32.xlu0 %v2192
      %v2194 = vpop.xlane.xlu0 %2193
      %v2195 = vsel %vm506, %v2153, inf
      %2196 = vmin.xlane.f32.xlu0 %v2195
      %v2197 = vpop.xlane.xlu0 %2196
      %v2198 = vsel %vm506, %v2154, inf
      %2199 = vmin.xlane.f32.xlu0 %v2198
      %v2200 = vpop.xlane.xlu0 %2199
      %v2201 = vsel %vm506, %v2155, inf
      %2202 = vmin.xlane.f32.xlu0 %v2201
      %v2203 = vpop.xlane.xlu0 %2202
      %v2204 = vsel %vm531, %v2172, inf
      %2205 = vmin.xlane.f32.xlu0 %v2204
      %v2206 = vpop.xlane.xlu0 %2205
      %v2207 = vsel %vm531, %v2173, inf
      %2208 = vmin.xlane.f32.xlu0 %v2207
      %v2209 = vpop.xlane.xlu0 %2208
      %v2210 = vsel %vm531, %v2174, inf
      %2211 = vmin.xlane.f32.xlu0 %v2210
      %v2212 = vpop.xlane.xlu0 %2211
      %v2213 = vsel %vm531, %v2175, inf
      %2214 = vmin.xlane.f32.xlu0 %v2213
      %v2215 = vpop.xlane.xlu0 %2214
      %v2216 = vsel %vm531, %v2176, inf
      %2217 = vmin.xlane.f32.xlu0 %v2216
      %v2218 = vpop.xlane.xlu0 %2217
      %v2219 = vsel %vm531, %v2177, inf
      %2220 = vmin.xlane.f32.xlu0 %v2219
      %v2221 = vpop.xlane.xlu0 %2220
      %v2222 = vsel %vm531, %v2178, inf
      %2223 = vmin.xlane.f32.xlu0 %v2222
      %v2224 = vpop.xlane.xlu0 %2223
      %v2225 = vsel %vm531, %v2179, inf
      %2226 = vmin.xlane.f32.xlu0 %v2225
      %v2227 = vpop.xlane.xlu0 %2226
      %v2228 = vmin.f32 %v2182, %v2206
      %v2229 = vmin.f32 %v2185, %v2209
      %v2230 = vmin.f32 %v2188, %v2212
      %v2231 = vmin.f32 %v2191, %v2215
      %v2232 = vmin.f32 %v2194, %v2218
      %v2233 = vmin.f32 %v2197, %v2221
      %v2234 = vmin.f32 %v2200, %v2224
      %v2235 = vmin.f32 %v2203, %v2227
      %vm2236 = vcmp.eq.f32.partialorder %v2148, %v2228
      %vm2237 = vcmp.eq.f32.partialorder %v2149, %v2229
      %vm2238 = vcmp.eq.f32.partialorder %v2150, %v2230
      %vm2239 = vcmp.eq.f32.partialorder %v2151, %v2231
      %vm2240 = vcmp.eq.f32.partialorder %v2152, %v2232
      %vm2241 = vcmp.eq.f32.partialorder %v2153, %v2233
      %vm2242 = vcmp.eq.f32.partialorder %v2154, %v2234
      %vm2243 = vcmp.eq.f32.partialorder %v2155, %v2235
      %v2244 = vsel %vm2236, %v498, 1e+09
      %v2245 = vsel %vm2237, %v499, 1e+09
      %v2246 = vsel %vm2238, %v500, 1e+09
      %v2247 = vsel %vm2239, %v501, 1e+09
      %v2248 = vsel %vm2240, %v502, 1e+09
      %v2249 = vsel %vm2241, %v503, 1e+09
      %v2250 = vsel %vm2242, %v504, 1e+09
      %v2251 = vsel %vm2243, %v505, 1e+09
      %v2252 = vsel %vm506, %v2244, inf
      %2253 = vmin.xlane.f32.xlu0 %v2252
      %v2254 = vpop.xlane.xlu0 %2253
      %v2255 = vsel %vm506, %v2245, inf
      %2256 = vmin.xlane.f32.xlu0 %v2255
      %v2257 = vpop.xlane.xlu0 %2256
      %v2258 = vsel %vm506, %v2246, inf
      %2259 = vmin.xlane.f32.xlu0 %v2258
      %v2260 = vpop.xlane.xlu0 %2259
      %v2261 = vsel %vm506, %v2247, inf
      %2262 = vmin.xlane.f32.xlu0 %v2261
      %v2263 = vpop.xlane.xlu0 %2262
      %v2264 = vsel %vm506, %v2248, inf
      %2265 = vmin.xlane.f32.xlu0 %v2264
      %v2266 = vpop.xlane.xlu0 %2265
      %v2267 = vsel %vm506, %v2249, inf
      %2268 = vmin.xlane.f32.xlu0 %v2267
      %v2269 = vpop.xlane.xlu0 %2268
      %v2270 = vsel %vm506, %v2250, inf
      %2271 = vmin.xlane.f32.xlu0 %v2270
      %v2272 = vpop.xlane.xlu0 %2271
      %v2273 = vsel %vm506, %v2251, inf
      %2274 = vmin.xlane.f32.xlu0 %v2273
      %v2275 = vpop.xlane.xlu0 %2274
      %vm2276 = vcmp.eq.f32.partialorder %v2172, %v2228
      %vm2277 = vcmp.eq.f32.partialorder %v2173, %v2229
      %vm2278 = vcmp.eq.f32.partialorder %v2174, %v2230
      %vm2279 = vcmp.eq.f32.partialorder %v2175, %v2231
      %vm2280 = vcmp.eq.f32.partialorder %v2176, %v2232
      %vm2281 = vcmp.eq.f32.partialorder %v2177, %v2233
      %vm2282 = vcmp.eq.f32.partialorder %v2178, %v2234
      %vm2283 = vcmp.eq.f32.partialorder %v2179, %v2235
      %v2284 = vsel %vm2276, %v489, 1e+09
      %v2285 = vsel %vm2277, %v489, 1e+09
      %v2286 = vsel %vm2278, %v489, 1e+09
      %v2287 = vsel %vm2279, %v489, 1e+09
      %v2288 = vsel %vm2280, %v489, 1e+09
      %v2289 = vsel %vm2281, %v489, 1e+09
      %v2290 = vsel %vm2282, %v489, 1e+09
      %v2291 = vsel %vm2283, %v489, 1e+09
      %v2292 = vsel %vm531, %v2284, inf
      %2293 = vmin.xlane.f32.xlu0 %v2292
      %v2294 = vpop.xlane.xlu0 %2293
      %v2295 = vsel %vm531, %v2285, inf
      %2296 = vmin.xlane.f32.xlu0 %v2295
      %v2297 = vpop.xlane.xlu0 %2296
      %v2298 = vsel %vm531, %v2286, inf
      %2299 = vmin.xlane.f32.xlu0 %v2298
      %v2300 = vpop.xlane.xlu0 %2299
      %v2301 = vsel %vm531, %v2287, inf
      %2302 = vmin.xlane.f32.xlu0 %v2301
      %v2303 = vpop.xlane.xlu0 %2302
      %v2304 = vsel %vm531, %v2288, inf
      %2305 = vmin.xlane.f32.xlu0 %v2304
      %v2306 = vpop.xlane.xlu0 %2305
      %v2307 = vsel %vm531, %v2289, inf
      %2308 = vmin.xlane.f32.xlu0 %v2307
      %v2309 = vpop.xlane.xlu0 %2308
      %v2310 = vsel %vm531, %v2290, inf
      %2311 = vmin.xlane.f32.xlu0 %v2310
      %v2312 = vpop.xlane.xlu0 %2311
      %v2313 = vsel %vm531, %v2291, inf
      %2314 = vmin.xlane.f32.xlu0 %v2313
      %v2315 = vpop.xlane.xlu0 %2314
      %v2316 = vmin.f32 %v2254, %v2294
      %v2317 = vmin.f32 %v2257, %v2297
      %v2318 = vmin.f32 %v2260, %v2300
      %v2319 = vmin.f32 %v2263, %v2303
      %v2320 = vmin.f32 %v2266, %v2306
      %v2321 = vmin.f32 %v2269, %v2309
      %v2322 = vmin.f32 %v2272, %v2312
      %v2323 = vmin.f32 %v2275, %v2315
      %vm2324 = vcmask 72768
      %2325 = vst.msk [vmem:[#allocation2] sm:$0xff] %vm2324, %v2228
      %2326 = vst.msk [vmem:[#allocation2 + $0x8] sm:$0xff] %vm2324, %v2229
      %2327 = vst.msk [vmem:[#allocation2 + $0x10] sm:$0xff] %vm2324, %v2230
      %2328 = vst.msk [vmem:[#allocation2 + $0x18] sm:$0xff] %vm2324, %v2231
      %2329 = vst.msk [vmem:[#allocation2 + $0x20] sm:$0xff] %vm2324, %v2232
      %2330 = vst.msk [vmem:[#allocation2 + $0x28] sm:$0xff] %vm2324, %v2233
      %2331 = vst.msk [vmem:[#allocation2 + $0x30] sm:$0xff] %vm2324, %v2234
      %2332 = vst.msk [vmem:[#allocation2 + $0x38] sm:$0xff] %vm2324, %v2235
      %2333 = vst.msk [vmem:[#allocation3] sm:$0xff] %vm2324, %v2316
      %2334 = vst.msk [vmem:[#allocation3 + $0x8] sm:$0xff] %vm2324, %v2317
      %2335 = vst.msk [vmem:[#allocation3 + $0x10] sm:$0xff] %vm2324, %v2318
      %2336 = vst.msk [vmem:[#allocation3 + $0x18] sm:$0xff] %vm2324, %v2319
      %2337 = vst.msk [vmem:[#allocation3 + $0x20] sm:$0xff] %vm2324, %v2320
      %2338 = vst.msk [vmem:[#allocation3 + $0x28] sm:$0xff] %vm2324, %v2321
      %2339 = vst.msk [vmem:[#allocation3 + $0x30] sm:$0xff] %vm2324, %v2322
      %2340 = vst.msk [vmem:[#allocation3 + $0x38] sm:$0xff] %vm2324, %v2323
      %vm2341 = vcmp.eq.f32.partialorder %v498, %v2316
      %vm2342 = vcmp.eq.f32.partialorder %v499, %v2317
      %vm2343 = vcmp.eq.f32.partialorder %v500, %v2318
      %vm2344 = vcmp.eq.f32.partialorder %v501, %v2319
      %vm2345 = vcmp.eq.f32.partialorder %v502, %v2320
      %vm2346 = vcmp.eq.f32.partialorder %v503, %v2321
      %vm2347 = vcmp.eq.f32.partialorder %v504, %v2322
      %vm2348 = vcmp.eq.f32.partialorder %v505, %v2323
      %vm2349 = vmand %vm2236, %vm2341
      %vm2350 = vmand %vm2237, %vm2342
      %vm2351 = vmand %vm2238, %vm2343
      %vm2352 = vmand %vm2239, %vm2344
      %vm2353 = vmand %vm2240, %vm2345
      %vm2354 = vmand %vm2241, %vm2346
      %vm2355 = vmand %vm2242, %vm2347
      %vm2356 = vmand %vm2243, %vm2348
      %v2357 = vsel %vm2349, inf, %v2148
      %v2358 = vsel %vm2350, inf, %v2149
      %v2359 = vsel %vm2351, inf, %v2150
      %v2360 = vsel %vm2352, inf, %v2151
      %v2361 = vsel %vm2353, inf, %v2152
      %v2362 = vsel %vm2354, inf, %v2153
      %v2363 = vsel %vm2355, inf, %v2154
      %v2364 = vsel %vm2356, inf, %v2155
      %vm2365 = vcmp.eq.f32.partialorder %v489, %v2316
      %vm2366 = vcmp.eq.f32.partialorder %v489, %v2317
      %vm2367 = vcmp.eq.f32.partialorder %v489, %v2318
      %vm2368 = vcmp.eq.f32.partialorder %v489, %v2319
      %vm2369 = vcmp.eq.f32.partialorder %v489, %v2320
      %vm2370 = vcmp.eq.f32.partialorder %v489, %v2321
      %vm2371 = vcmp.eq.f32.partialorder %v489, %v2322
      %vm2372 = vcmp.eq.f32.partialorder %v489, %v2323
      %vm2373 = vmand %vm2276, %vm2365
      %vm2374 = vmand %vm2277, %vm2366
      %vm2375 = vmand %vm2278, %vm2367
      %vm2376 = vmand %vm2279, %vm2368
      %vm2377 = vmand %vm2280, %vm2369
      %vm2378 = vmand %vm2281, %vm2370
      %vm2379 = vmand %vm2282, %vm2371
      %vm2380 = vmand %vm2283, %vm2372
      %v2381 = vsel %vm2373, inf, %v2172
      %v2382 = vsel %vm2374, inf, %v2173
      %v2383 = vsel %vm2375, inf, %v2174
      %v2384 = vsel %vm2376, inf, %v2175
      %v2385 = vsel %vm2377, inf, %v2176
      %v2386 = vsel %vm2378, inf, %v2177
      %v2387 = vsel %vm2379, inf, %v2178
      %v2388 = vsel %vm2380, inf, %v2179
      %v2389 = vsel %vm506, %v2357, inf
      %2390 = vmin.xlane.f32.xlu0 %v2389
      %v2391 = vpop.xlane.xlu0 %2390
      %v2392 = vsel %vm506, %v2358, inf
      %2393 = vmin.xlane.f32.xlu0 %v2392
      %v2394 = vpop.xlane.xlu0 %2393
      %v2395 = vsel %vm506, %v2359, inf
      %2396 = vmin.xlane.f32.xlu0 %v2395
      %v2397 = vpop.xlane.xlu0 %2396
      %v2398 = vsel %vm506, %v2360, inf
      %2399 = vmin.xlane.f32.xlu0 %v2398
      %v2400 = vpop.xlane.xlu0 %2399
      %v2401 = vsel %vm506, %v2361, inf
      %2402 = vmin.xlane.f32.xlu0 %v2401
      %v2403 = vpop.xlane.xlu0 %2402
      %v2404 = vsel %vm506, %v2362, inf
      %2405 = vmin.xlane.f32.xlu0 %v2404
      %v2406 = vpop.xlane.xlu0 %2405
      %v2407 = vsel %vm506, %v2363, inf
      %2408 = vmin.xlane.f32.xlu0 %v2407
      %v2409 = vpop.xlane.xlu0 %2408
      %v2410 = vsel %vm506, %v2364, inf
      %2411 = vmin.xlane.f32.xlu0 %v2410
      %v2412 = vpop.xlane.xlu0 %2411
      %v2413 = vsel %vm531, %v2381, inf
      %2414 = vmin.xlane.f32.xlu0 %v2413
      %v2415 = vpop.xlane.xlu0 %2414
      %v2416 = vsel %vm531, %v2382, inf
      %2417 = vmin.xlane.f32.xlu0 %v2416
      %v2418 = vpop.xlane.xlu0 %2417
      %v2419 = vsel %vm531, %v2383, inf
      %2420 = vmin.xlane.f32.xlu0 %v2419
      %v2421 = vpop.xlane.xlu0 %2420
      %v2422 = vsel %vm531, %v2384, inf
      %2423 = vmin.xlane.f32.xlu0 %v2422
      %v2424 = vpop.xlane.xlu0 %2423
      %v2425 = vsel %vm531, %v2385, inf
      %2426 = vmin.xlane.f32.xlu0 %v2425
      %v2427 = vpop.xlane.xlu0 %2426
      %v2428 = vsel %vm531, %v2386, inf
      %2429 = vmin.xlane.f32.xlu0 %v2428
      %v2430 = vpop.xlane.xlu0 %2429
      %v2431 = vsel %vm531, %v2387, inf
      %2432 = vmin.xlane.f32.xlu0 %v2431
      %v2433 = vpop.xlane.xlu0 %2432
      %v2434 = vsel %vm531, %v2388, inf
      %2435 = vmin.xlane.f32.xlu0 %v2434
      %v2436 = vpop.xlane.xlu0 %2435
      %v2437 = vmin.f32 %v2391, %v2415
      %v2438 = vmin.f32 %v2394, %v2418
      %v2439 = vmin.f32 %v2397, %v2421
      %v2440 = vmin.f32 %v2400, %v2424
      %v2441 = vmin.f32 %v2403, %v2427
      %v2442 = vmin.f32 %v2406, %v2430
      %v2443 = vmin.f32 %v2409, %v2433
      %v2444 = vmin.f32 %v2412, %v2436
      %vm2445 = vcmp.eq.f32.partialorder %v2357, %v2437
      %vm2446 = vcmp.eq.f32.partialorder %v2358, %v2438
      %vm2447 = vcmp.eq.f32.partialorder %v2359, %v2439
      %vm2448 = vcmp.eq.f32.partialorder %v2360, %v2440
      %vm2449 = vcmp.eq.f32.partialorder %v2361, %v2441
      %vm2450 = vcmp.eq.f32.partialorder %v2362, %v2442
      %vm2451 = vcmp.eq.f32.partialorder %v2363, %v2443
      %vm2452 = vcmp.eq.f32.partialorder %v2364, %v2444
      %v2453 = vsel %vm2445, %v498, 1e+09
      %v2454 = vsel %vm2446, %v499, 1e+09
      %v2455 = vsel %vm2447, %v500, 1e+09
      %v2456 = vsel %vm2448, %v501, 1e+09
      %v2457 = vsel %vm2449, %v502, 1e+09
      %v2458 = vsel %vm2450, %v503, 1e+09
      %v2459 = vsel %vm2451, %v504, 1e+09
      %v2460 = vsel %vm2452, %v505, 1e+09
      %v2461 = vsel %vm506, %v2453, inf
      %2462 = vmin.xlane.f32.xlu0 %v2461
      %v2463 = vpop.xlane.xlu0 %2462
      %v2464 = vsel %vm506, %v2454, inf
      %2465 = vmin.xlane.f32.xlu0 %v2464
      %v2466 = vpop.xlane.xlu0 %2465
      %v2467 = vsel %vm506, %v2455, inf
      %2468 = vmin.xlane.f32.xlu0 %v2467
      %v2469 = vpop.xlane.xlu0 %2468
      %v2470 = vsel %vm506, %v2456, inf
      %2471 = vmin.xlane.f32.xlu0 %v2470
      %v2472 = vpop.xlane.xlu0 %2471
      %v2473 = vsel %vm506, %v2457, inf
      %2474 = vmin.xlane.f32.xlu0 %v2473
      %v2475 = vpop.xlane.xlu0 %2474
      %v2476 = vsel %vm506, %v2458, inf
      %2477 = vmin.xlane.f32.xlu0 %v2476
      %v2478 = vpop.xlane.xlu0 %2477
      %v2479 = vsel %vm506, %v2459, inf
      %2480 = vmin.xlane.f32.xlu0 %v2479
      %v2481 = vpop.xlane.xlu0 %2480
      %v2482 = vsel %vm506, %v2460, inf
      %2483 = vmin.xlane.f32.xlu0 %v2482
      %v2484 = vpop.xlane.xlu0 %2483
      %vm2485 = vcmp.eq.f32.partialorder %v2381, %v2437
      %vm2486 = vcmp.eq.f32.partialorder %v2382, %v2438
      %vm2487 = vcmp.eq.f32.partialorder %v2383, %v2439
      %vm2488 = vcmp.eq.f32.partialorder %v2384, %v2440
      %vm2489 = vcmp.eq.f32.partialorder %v2385, %v2441
      %vm2490 = vcmp.eq.f32.partialorder %v2386, %v2442
      %vm2491 = vcmp.eq.f32.partialorder %v2387, %v2443
      %vm2492 = vcmp.eq.f32.partialorder %v2388, %v2444
      %v2493 = vsel %vm2485, %v489, 1e+09
      %v2494 = vsel %vm2486, %v489, 1e+09
      %v2495 = vsel %vm2487, %v489, 1e+09
      %v2496 = vsel %vm2488, %v489, 1e+09
      %v2497 = vsel %vm2489, %v489, 1e+09
      %v2498 = vsel %vm2490, %v489, 1e+09
      %v2499 = vsel %vm2491, %v489, 1e+09
      %v2500 = vsel %vm2492, %v489, 1e+09
      %v2501 = vsel %vm531, %v2493, inf
      %2502 = vmin.xlane.f32.xlu0 %v2501
      %v2503 = vpop.xlane.xlu0 %2502
      %v2504 = vsel %vm531, %v2494, inf
      %2505 = vmin.xlane.f32.xlu0 %v2504
      %v2506 = vpop.xlane.xlu0 %2505
      %v2507 = vsel %vm531, %v2495, inf
      %2508 = vmin.xlane.f32.xlu0 %v2507
      %v2509 = vpop.xlane.xlu0 %2508
      %v2510 = vsel %vm531, %v2496, inf
      %2511 = vmin.xlane.f32.xlu0 %v2510
      %v2512 = vpop.xlane.xlu0 %2511
      %v2513 = vsel %vm531, %v2497, inf
      %2514 = vmin.xlane.f32.xlu0 %v2513
      %v2515 = vpop.xlane.xlu0 %2514
      %v2516 = vsel %vm531, %v2498, inf
      %2517 = vmin.xlane.f32.xlu0 %v2516
      %v2518 = vpop.xlane.xlu0 %2517
      %v2519 = vsel %vm531, %v2499, inf
      %2520 = vmin.xlane.f32.xlu0 %v2519
      %v2521 = vpop.xlane.xlu0 %2520
      %v2522 = vsel %vm531, %v2500, inf
      %2523 = vmin.xlane.f32.xlu0 %v2522
      %v2524 = vpop.xlane.xlu0 %2523
      %v2525 = vmin.f32 %v2463, %v2503
      %v2526 = vmin.f32 %v2466, %v2506
      %v2527 = vmin.f32 %v2469, %v2509
      %v2528 = vmin.f32 %v2472, %v2512
      %v2529 = vmin.f32 %v2475, %v2515
      %v2530 = vmin.f32 %v2478, %v2518
      %v2531 = vmin.f32 %v2481, %v2521
      %v2532 = vmin.f32 %v2484, %v2524
      %vm2533 = vcmask 80968
      %2534 = vst.msk [vmem:[#allocation2] sm:$0xff] %vm2533, %v2437
      %2535 = vst.msk [vmem:[#allocation2 + $0x8] sm:$0xff] %vm2533, %v2438
      %2536 = vst.msk [vmem:[#allocation2 + $0x10] sm:$0xff] %vm2533, %v2439
      %2537 = vst.msk [vmem:[#allocation2 + $0x18] sm:$0xff] %vm2533, %v2440
      %2538 = vst.msk [vmem:[#allocation2 + $0x20] sm:$0xff] %vm2533, %v2441
      %2539 = vst.msk [vmem:[#allocation2 + $0x28] sm:$0xff] %vm2533, %v2442
      %2540 = vst.msk [vmem:[#allocation2 + $0x30] sm:$0xff] %vm2533, %v2443
      %2541 = vst.msk [vmem:[#allocation2 + $0x38] sm:$0xff] %vm2533, %v2444
      %2542 = vst.msk [vmem:[#allocation3] sm:$0xff] %vm2533, %v2525
      %2543 = vst.msk [vmem:[#allocation3 + $0x8] sm:$0xff] %vm2533, %v2526
      %2544 = vst.msk [vmem:[#allocation3 + $0x10] sm:$0xff] %vm2533, %v2527
      %2545 = vst.msk [vmem:[#allocation3 + $0x18] sm:$0xff] %vm2533, %v2528
      %2546 = vst.msk [vmem:[#allocation3 + $0x20] sm:$0xff] %vm2533, %v2529
      %2547 = vst.msk [vmem:[#allocation3 + $0x28] sm:$0xff] %vm2533, %v2530
      %2548 = vst.msk [vmem:[#allocation3 + $0x30] sm:$0xff] %vm2533, %v2531
      %2549 = vst.msk [vmem:[#allocation3 + $0x38] sm:$0xff] %vm2533, %v2532
      %vm2550 = vcmp.eq.f32.partialorder %v498, %v2525
      %vm2551 = vcmp.eq.f32.partialorder %v499, %v2526
      %vm2552 = vcmp.eq.f32.partialorder %v500, %v2527
      %vm2553 = vcmp.eq.f32.partialorder %v501, %v2528
      %vm2554 = vcmp.eq.f32.partialorder %v502, %v2529
      %vm2555 = vcmp.eq.f32.partialorder %v503, %v2530
      %vm2556 = vcmp.eq.f32.partialorder %v504, %v2531
      %vm2557 = vcmp.eq.f32.partialorder %v505, %v2532
      %vm2558 = vmand %vm2445, %vm2550
      %vm2559 = vmand %vm2446, %vm2551
      %vm2560 = vmand %vm2447, %vm2552
      %vm2561 = vmand %vm2448, %vm2553
      %vm2562 = vmand %vm2449, %vm2554
      %vm2563 = vmand %vm2450, %vm2555
      %vm2564 = vmand %vm2451, %vm2556
      %vm2565 = vmand %vm2452, %vm2557
      %v2566 = vsel %vm2558, inf, %v2357
      %v2567 = vsel %vm2559, inf, %v2358
      %v2568 = vsel %vm2560, inf, %v2359
      %v2569 = vsel %vm2561, inf, %v2360
      %v2570 = vsel %vm2562, inf, %v2361
      %v2571 = vsel %vm2563, inf, %v2362
      %v2572 = vsel %vm2564, inf, %v2363
      %v2573 = vsel %vm2565, inf, %v2364
      %vm2574 = vcmp.eq.f32.partialorder %v489, %v2525
      %vm2575 = vcmp.eq.f32.partialorder %v489, %v2526
      %vm2576 = vcmp.eq.f32.partialorder %v489, %v2527
      %vm2577 = vcmp.eq.f32.partialorder %v489, %v2528
      %vm2578 = vcmp.eq.f32.partialorder %v489, %v2529
      %vm2579 = vcmp.eq.f32.partialorder %v489, %v2530
      %vm2580 = vcmp.eq.f32.partialorder %v489, %v2531
      %vm2581 = vcmp.eq.f32.partialorder %v489, %v2532
      %vm2582 = vmand %vm2485, %vm2574
      %vm2583 = vmand %vm2486, %vm2575
      %vm2584 = vmand %vm2487, %vm2576
      %vm2585 = vmand %vm2488, %vm2577
      %vm2586 = vmand %vm2489, %vm2578
      %vm2587 = vmand %vm2490, %vm2579
      %vm2588 = vmand %vm2491, %vm2580
      %vm2589 = vmand %vm2492, %vm2581
      %v2590 = vsel %vm2582, inf, %v2381
      %v2591 = vsel %vm2583, inf, %v2382
      %v2592 = vsel %vm2584, inf, %v2383
      %v2593 = vsel %vm2585, inf, %v2384
      %v2594 = vsel %vm2586, inf, %v2385
      %v2595 = vsel %vm2587, inf, %v2386
      %v2596 = vsel %vm2588, inf, %v2387
      %v2597 = vsel %vm2589, inf, %v2388
      %v2598 = vsel %vm506, %v2566, inf
      %2599 = vmin.xlane.f32.xlu0 %v2598
      %v2600 = vpop.xlane.xlu0 %2599
      %v2601 = vsel %vm506, %v2567, inf
      %2602 = vmin.xlane.f32.xlu0 %v2601
      %v2603 = vpop.xlane.xlu0 %2602
      %v2604 = vsel %vm506, %v2568, inf
      %2605 = vmin.xlane.f32.xlu0 %v2604
      %v2606 = vpop.xlane.xlu0 %2605
      %v2607 = vsel %vm506, %v2569, inf
      %2608 = vmin.xlane.f32.xlu0 %v2607
      %v2609 = vpop.xlane.xlu0 %2608
      %v2610 = vsel %vm506, %v2570, inf
      %2611 = vmin.xlane.f32.xlu0 %v2610
      %v2612 = vpop.xlane.xlu0 %2611
      %v2613 = vsel %vm506, %v2571, inf
      %2614 = vmin.xlane.f32.xlu0 %v2613
      %v2615 = vpop.xlane.xlu0 %2614
      %v2616 = vsel %vm506, %v2572, inf
      %2617 = vmin.xlane.f32.xlu0 %v2616
      %v2618 = vpop.xlane.xlu0 %2617
      %v2619 = vsel %vm506, %v2573, inf
      %2620 = vmin.xlane.f32.xlu0 %v2619
      %v2621 = vpop.xlane.xlu0 %2620
      %v2622 = vsel %vm531, %v2590, inf
      %2623 = vmin.xlane.f32.xlu0 %v2622
      %v2624 = vpop.xlane.xlu0 %2623
      %v2625 = vsel %vm531, %v2591, inf
      %2626 = vmin.xlane.f32.xlu0 %v2625
      %v2627 = vpop.xlane.xlu0 %2626
      %v2628 = vsel %vm531, %v2592, inf
      %2629 = vmin.xlane.f32.xlu0 %v2628
      %v2630 = vpop.xlane.xlu0 %2629
      %v2631 = vsel %vm531, %v2593, inf
      %2632 = vmin.xlane.f32.xlu0 %v2631
      %v2633 = vpop.xlane.xlu0 %2632
      %v2634 = vsel %vm531, %v2594, inf
      %2635 = vmin.xlane.f32.xlu0 %v2634
      %v2636 = vpop.xlane.xlu0 %2635
      %v2637 = vsel %vm531, %v2595, inf
      %2638 = vmin.xlane.f32.xlu0 %v2637
      %v2639 = vpop.xlane.xlu0 %2638
      %v2640 = vsel %vm531, %v2596, inf
      %2641 = vmin.xlane.f32.xlu0 %v2640
      %v2642 = vpop.xlane.xlu0 %2641
      %v2643 = vsel %vm531, %v2597, inf
      %2644 = vmin.xlane.f32.xlu0 %v2643
      %v2645 = vpop.xlane.xlu0 %2644
      %v2646 = vmin.f32 %v2600, %v2624
      %v2647 = vmin.f32 %v2603, %v2627
      %v2648 = vmin.f32 %v2606, %v2630
      %v2649 = vmin.f32 %v2609, %v2633
      %v2650 = vmin.f32 %v2612, %v2636
      %v2651 = vmin.f32 %v2615, %v2639
      %v2652 = vmin.f32 %v2618, %v2642
      %v2653 = vmin.f32 %v2621, %v2645
      %vm2654 = vcmp.eq.f32.partialorder %v2566, %v2646
      %vm2655 = vcmp.eq.f32.partialorder %v2567, %v2647
      %vm2656 = vcmp.eq.f32.partialorder %v2568, %v2648
      %vm2657 = vcmp.eq.f32.partialorder %v2569, %v2649
      %vm2658 = vcmp.eq.f32.partialorder %v2570, %v2650
      %vm2659 = vcmp.eq.f32.partialorder %v2571, %v2651
      %vm2660 = vcmp.eq.f32.partialorder %v2572, %v2652
      %vm2661 = vcmp.eq.f32.partialorder %v2573, %v2653
      %v2662 = vsel %vm2654, %v498, 1e+09
      %v2663 = vsel %vm2655, %v499, 1e+09
      %v2664 = vsel %vm2656, %v500, 1e+09
      %v2665 = vsel %vm2657, %v501, 1e+09
      %v2666 = vsel %vm2658, %v502, 1e+09
      %v2667 = vsel %vm2659, %v503, 1e+09
      %v2668 = vsel %vm2660, %v504, 1e+09
      %v2669 = vsel %vm2661, %v505, 1e+09
      %v2670 = vsel %vm506, %v2662, inf
      %2671 = vmin.xlane.f32.xlu0 %v2670
      %v2672 = vpop.xlane.xlu0 %2671
      %v2673 = vsel %vm506, %v2663, inf
      %2674 = vmin.xlane.f32.xlu0 %v2673
      %v2675 = vpop.xlane.xlu0 %2674
      %v2676 = vsel %vm506, %v2664, inf
      %2677 = vmin.xlane.f32.xlu0 %v2676
      %v2678 = vpop.xlane.xlu0 %2677
      %v2679 = vsel %vm506, %v2665, inf
      %2680 = vmin.xlane.f32.xlu0 %v2679
      %v2681 = vpop.xlane.xlu0 %2680
      %v2682 = vsel %vm506, %v2666, inf
      %2683 = vmin.xlane.f32.xlu0 %v2682
      %v2684 = vpop.xlane.xlu0 %2683
      %v2685 = vsel %vm506, %v2667, inf
      %2686 = vmin.xlane.f32.xlu0 %v2685
      %v2687 = vpop.xlane.xlu0 %2686
      %v2688 = vsel %vm506, %v2668, inf
      %2689 = vmin.xlane.f32.xlu0 %v2688
      %v2690 = vpop.xlane.xlu0 %2689
      %v2691 = vsel %vm506, %v2669, inf
      %2692 = vmin.xlane.f32.xlu0 %v2691
      %v2693 = vpop.xlane.xlu0 %2692
      %vm2694 = vcmp.eq.f32.partialorder %v2590, %v2646
      %vm2695 = vcmp.eq.f32.partialorder %v2591, %v2647
      %vm2696 = vcmp.eq.f32.partialorder %v2592, %v2648
      %vm2697 = vcmp.eq.f32.partialorder %v2593, %v2649
      %vm2698 = vcmp.eq.f32.partialorder %v2594, %v2650
      %vm2699 = vcmp.eq.f32.partialorder %v2595, %v2651
      %vm2700 = vcmp.eq.f32.partialorder %v2596, %v2652
      %vm2701 = vcmp.eq.f32.partialorder %v2597, %v2653
      %v2702 = vsel %vm2694, %v489, 1e+09
      %v2703 = vsel %vm2695, %v489, 1e+09
      %v2704 = vsel %vm2696, %v489, 1e+09
      %v2705 = vsel %vm2697, %v489, 1e+09
      %v2706 = vsel %vm2698, %v489, 1e+09
      %v2707 = vsel %vm2699, %v489, 1e+09
      %v2708 = vsel %vm2700, %v489, 1e+09
      %v2709 = vsel %vm2701, %v489, 1e+09
      %v2710 = vsel %vm531, %v2702, inf
      %2711 = vmin.xlane.f32.xlu0 %v2710
      %v2712 = vpop.xlane.xlu0 %2711
      %v2713 = vsel %vm531, %v2703, inf
      %2714 = vmin.xlane.f32.xlu0 %v2713
      %v2715 = vpop.xlane.xlu0 %2714
      %v2716 = vsel %vm531, %v2704, inf
      %2717 = vmin.xlane.f32.xlu0 %v2716
      %v2718 = vpop.xlane.xlu0 %2717
      %v2719 = vsel %vm531, %v2705, inf
      %2720 = vmin.xlane.f32.xlu0 %v2719
      %v2721 = vpop.xlane.xlu0 %2720
      %v2722 = vsel %vm531, %v2706, inf
      %2723 = vmin.xlane.f32.xlu0 %v2722
      %v2724 = vpop.xlane.xlu0 %2723
      %v2725 = vsel %vm531, %v2707, inf
      %2726 = vmin.xlane.f32.xlu0 %v2725
      %v2727 = vpop.xlane.xlu0 %2726
      %v2728 = vsel %vm531, %v2708, inf
      %2729 = vmin.xlane.f32.xlu0 %v2728
      %v2730 = vpop.xlane.xlu0 %2729
      %v2731 = vsel %vm531, %v2709, inf
      %2732 = vmin.xlane.f32.xlu0 %v2731
      %v2733 = vpop.xlane.xlu0 %2732
      %v2734 = vmin.f32 %v2672, %v2712
      %v2735 = vmin.f32 %v2675, %v2715
      %v2736 = vmin.f32 %v2678, %v2718
      %v2737 = vmin.f32 %v2681, %v2721
      %v2738 = vmin.f32 %v2684, %v2724
      %v2739 = vmin.f32 %v2687, %v2727
      %v2740 = vmin.f32 %v2690, %v2730
      %v2741 = vmin.f32 %v2693, %v2733
      %vm2742 = vcmask 89168
      %2743 = vst.msk [vmem:[#allocation2] sm:$0xff] %vm2742, %v2646
      %2744 = vst.msk [vmem:[#allocation2 + $0x8] sm:$0xff] %vm2742, %v2647
      %2745 = vst.msk [vmem:[#allocation2 + $0x10] sm:$0xff] %vm2742, %v2648
      %2746 = vst.msk [vmem:[#allocation2 + $0x18] sm:$0xff] %vm2742, %v2649
      %2747 = vst.msk [vmem:[#allocation2 + $0x20] sm:$0xff] %vm2742, %v2650
      %2748 = vst.msk [vmem:[#allocation2 + $0x28] sm:$0xff] %vm2742, %v2651
      %2749 = vst.msk [vmem:[#allocation2 + $0x30] sm:$0xff] %vm2742, %v2652
      %2750 = vst.msk [vmem:[#allocation2 + $0x38] sm:$0xff] %vm2742, %v2653
      %2751 = vst.msk [vmem:[#allocation3] sm:$0xff] %vm2742, %v2734
      %2752 = vst.msk [vmem:[#allocation3 + $0x8] sm:$0xff] %vm2742, %v2735
      %2753 = vst.msk [vmem:[#allocation3 + $0x10] sm:$0xff] %vm2742, %v2736
      %2754 = vst.msk [vmem:[#allocation3 + $0x18] sm:$0xff] %vm2742, %v2737
      %2755 = vst.msk [vmem:[#allocation3 + $0x20] sm:$0xff] %vm2742, %v2738
      %2756 = vst.msk [vmem:[#allocation3 + $0x28] sm:$0xff] %vm2742, %v2739
      %2757 = vst.msk [vmem:[#allocation3 + $0x30] sm:$0xff] %vm2742, %v2740
      %2758 = vst.msk [vmem:[#allocation3 + $0x38] sm:$0xff] %vm2742, %v2741
      %vm2759 = vcmp.eq.f32.partialorder %v498, %v2734
      %vm2760 = vcmp.eq.f32.partialorder %v499, %v2735
      %vm2761 = vcmp.eq.f32.partialorder %v500, %v2736
      %vm2762 = vcmp.eq.f32.partialorder %v501, %v2737
      %vm2763 = vcmp.eq.f32.partialorder %v502, %v2738
      %vm2764 = vcmp.eq.f32.partialorder %v503, %v2739
      %vm2765 = vcmp.eq.f32.partialorder %v504, %v2740
      %vm2766 = vcmp.eq.f32.partialorder %v505, %v2741
      %vm2767 = vmand %vm2654, %vm2759
      %vm2768 = vmand %vm2655, %vm2760
      %vm2769 = vmand %vm2656, %vm2761
      %vm2770 = vmand %vm2657, %vm2762
      %vm2771 = vmand %vm2658, %vm2763
      %vm2772 = vmand %vm2659, %vm2764
      %vm2773 = vmand %vm2660, %vm2765
      %vm2774 = vmand %vm2661, %vm2766
      %v2775 = vsel %vm2767, inf, %v2566
      %v2776 = vsel %vm2768, inf, %v2567
      %v2777 = vsel %vm2769, inf, %v2568
      %v2778 = vsel %vm2770, inf, %v2569
      %v2779 = vsel %vm2771, inf, %v2570
      %v2780 = vsel %vm2772, inf, %v2571
      %v2781 = vsel %vm2773, inf, %v2572
      %v2782 = vsel %vm2774, inf, %v2573
      %vm2783 = vcmp.eq.f32.partialorder %v489, %v2734
      %vm2784 = vcmp.eq.f32.partialorder %v489, %v2735
      %vm2785 = vcmp.eq.f32.partialorder %v489, %v2736
      %vm2786 = vcmp.eq.f32.partialorder %v489, %v2737
      %vm2787 = vcmp.eq.f32.partialorder %v489, %v2738
      %vm2788 = vcmp.eq.f32.partialorder %v489, %v2739
      %vm2789 = vcmp.eq.f32.partialorder %v489, %v2740
      %vm2790 = vcmp.eq.f32.partialorder %v489, %v2741
      %vm2791 = vmand %vm2694, %vm2783
      %vm2792 = vmand %vm2695, %vm2784
      %vm2793 = vmand %vm2696, %vm2785
      %vm2794 = vmand %vm2697, %vm2786
      %vm2795 = vmand %vm2698, %vm2787
      %vm2796 = vmand %vm2699, %vm2788
      %vm2797 = vmand %vm2700, %vm2789
      %vm2798 = vmand %vm2701, %vm2790
      %v2799 = vsel %vm2791, inf, %v2590
      %v2800 = vsel %vm2792, inf, %v2591
      %v2801 = vsel %vm2793, inf, %v2592
      %v2802 = vsel %vm2794, inf, %v2593
      %v2803 = vsel %vm2795, inf, %v2594
      %v2804 = vsel %vm2796, inf, %v2595
      %v2805 = vsel %vm2797, inf, %v2596
      %v2806 = vsel %vm2798, inf, %v2597
      %v2807 = vsel %vm506, %v2775, inf
      %2808 = vmin.xlane.f32.xlu0 %v2807
      %v2809 = vpop.xlane.xlu0 %2808
      %v2810 = vsel %vm506, %v2776, inf
      %2811 = vmin.xlane.f32.xlu0 %v2810
      %v2812 = vpop.xlane.xlu0 %2811
      %v2813 = vsel %vm506, %v2777, inf
      %2814 = vmin.xlane.f32.xlu0 %v2813
      %v2815 = vpop.xlane.xlu0 %2814
      %v2816 = vsel %vm506, %v2778, inf
      %2817 = vmin.xlane.f32.xlu0 %v2816
      %v2818 = vpop.xlane.xlu0 %2817
      %v2819 = vsel %vm506, %v2779, inf
      %2820 = vmin.xlane.f32.xlu0 %v2819
      %v2821 = vpop.xlane.xlu0 %2820
      %v2822 = vsel %vm506, %v2780, inf
      %2823 = vmin.xlane.f32.xlu0 %v2822
      %v2824 = vpop.xlane.xlu0 %2823
      %v2825 = vsel %vm506, %v2781, inf
      %2826 = vmin.xlane.f32.xlu0 %v2825
      %v2827 = vpop.xlane.xlu0 %2826
      %v2828 = vsel %vm506, %v2782, inf
      %2829 = vmin.xlane.f32.xlu0 %v2828
      %v2830 = vpop.xlane.xlu0 %2829
      %v2831 = vsel %vm531, %v2799, inf
      %2832 = vmin.xlane.f32.xlu0 %v2831
      %v2833 = vpop.xlane.xlu0 %2832
      %v2834 = vsel %vm531, %v2800, inf
      %2835 = vmin.xlane.f32.xlu0 %v2834
      %v2836 = vpop.xlane.xlu0 %2835
      %v2837 = vsel %vm531, %v2801, inf
      %2838 = vmin.xlane.f32.xlu0 %v2837
      %v2839 = vpop.xlane.xlu0 %2838
      %v2840 = vsel %vm531, %v2802, inf
      %2841 = vmin.xlane.f32.xlu0 %v2840
      %v2842 = vpop.xlane.xlu0 %2841
      %v2843 = vsel %vm531, %v2803, inf
      %2844 = vmin.xlane.f32.xlu0 %v2843
      %v2845 = vpop.xlane.xlu0 %2844
      %v2846 = vsel %vm531, %v2804, inf
      %2847 = vmin.xlane.f32.xlu0 %v2846
      %v2848 = vpop.xlane.xlu0 %2847
      %v2849 = vsel %vm531, %v2805, inf
      %2850 = vmin.xlane.f32.xlu0 %v2849
      %v2851 = vpop.xlane.xlu0 %2850
      %v2852 = vsel %vm531, %v2806, inf
      %2853 = vmin.xlane.f32.xlu0 %v2852
      %v2854 = vpop.xlane.xlu0 %2853
      %v2855 = vmin.f32 %v2809, %v2833
      %v2856 = vmin.f32 %v2812, %v2836
      %v2857 = vmin.f32 %v2815, %v2839
      %v2858 = vmin.f32 %v2818, %v2842
      %v2859 = vmin.f32 %v2821, %v2845
      %v2860 = vmin.f32 %v2824, %v2848
      %v2861 = vmin.f32 %v2827, %v2851
      %v2862 = vmin.f32 %v2830, %v2854
      %vm2863 = vcmp.eq.f32.partialorder %v2775, %v2855
      %vm2864 = vcmp.eq.f32.partialorder %v2776, %v2856
      %vm2865 = vcmp.eq.f32.partialorder %v2777, %v2857
      %vm2866 = vcmp.eq.f32.partialorder %v2778, %v2858
      %vm2867 = vcmp.eq.f32.partialorder %v2779, %v2859
      %vm2868 = vcmp.eq.f32.partialorder %v2780, %v2860
      %vm2869 = vcmp.eq.f32.partialorder %v2781, %v2861
      %vm2870 = vcmp.eq.f32.partialorder %v2782, %v2862
      %v2871 = vsel %vm2863, %v498, 1e+09
      %v2872 = vsel %vm2864, %v499, 1e+09
      %v2873 = vsel %vm2865, %v500, 1e+09
      %v2874 = vsel %vm2866, %v501, 1e+09
      %v2875 = vsel %vm2867, %v502, 1e+09
      %v2876 = vsel %vm2868, %v503, 1e+09
      %v2877 = vsel %vm2869, %v504, 1e+09
      %v2878 = vsel %vm2870, %v505, 1e+09
      %v2879 = vsel %vm506, %v2871, inf
      %2880 = vmin.xlane.f32.xlu0 %v2879
      %v2881 = vpop.xlane.xlu0 %2880
      %v2882 = vsel %vm506, %v2872, inf
      %2883 = vmin.xlane.f32.xlu0 %v2882
      %v2884 = vpop.xlane.xlu0 %2883
      %v2885 = vsel %vm506, %v2873, inf
      %2886 = vmin.xlane.f32.xlu0 %v2885
      %v2887 = vpop.xlane.xlu0 %2886
      %v2888 = vsel %vm506, %v2874, inf
      %2889 = vmin.xlane.f32.xlu0 %v2888
      %v2890 = vpop.xlane.xlu0 %2889
      %v2891 = vsel %vm506, %v2875, inf
      %2892 = vmin.xlane.f32.xlu0 %v2891
      %v2893 = vpop.xlane.xlu0 %2892
      %v2894 = vsel %vm506, %v2876, inf
      %2895 = vmin.xlane.f32.xlu0 %v2894
      %v2896 = vpop.xlane.xlu0 %2895
      %v2897 = vsel %vm506, %v2877, inf
      %2898 = vmin.xlane.f32.xlu0 %v2897
      %v2899 = vpop.xlane.xlu0 %2898
      %v2900 = vsel %vm506, %v2878, inf
      %2901 = vmin.xlane.f32.xlu0 %v2900
      %v2902 = vpop.xlane.xlu0 %2901
      %vm2903 = vcmp.eq.f32.partialorder %v2799, %v2855
      %vm2904 = vcmp.eq.f32.partialorder %v2800, %v2856
      %vm2905 = vcmp.eq.f32.partialorder %v2801, %v2857
      %vm2906 = vcmp.eq.f32.partialorder %v2802, %v2858
      %vm2907 = vcmp.eq.f32.partialorder %v2803, %v2859
      %vm2908 = vcmp.eq.f32.partialorder %v2804, %v2860
      %vm2909 = vcmp.eq.f32.partialorder %v2805, %v2861
      %vm2910 = vcmp.eq.f32.partialorder %v2806, %v2862
      %v2911 = vsel %vm2903, %v489, 1e+09
      %v2912 = vsel %vm2904, %v489, 1e+09
      %v2913 = vsel %vm2905, %v489, 1e+09
      %v2914 = vsel %vm2906, %v489, 1e+09
      %v2915 = vsel %vm2907, %v489, 1e+09
      %v2916 = vsel %vm2908, %v489, 1e+09
      %v2917 = vsel %vm2909, %v489, 1e+09
      %v2918 = vsel %vm2910, %v489, 1e+09
      %v2919 = vsel %vm531, %v2911, inf
      %2920 = vmin.xlane.f32.xlu0 %v2919
      %v2921 = vpop.xlane.xlu0 %2920
      %v2922 = vsel %vm531, %v2912, inf
      %2923 = vmin.xlane.f32.xlu0 %v2922
      %v2924 = vpop.xlane.xlu0 %2923
      %v2925 = vsel %vm531, %v2913, inf
      %2926 = vmin.xlane.f32.xlu0 %v2925
      %v2927 = vpop.xlane.xlu0 %2926
      %v2928 = vsel %vm531, %v2914, inf
      %2929 = vmin.xlane.f32.xlu0 %v2928
      %v2930 = vpop.xlane.xlu0 %2929
      %v2931 = vsel %vm531, %v2915, inf
      %2932 = vmin.xlane.f32.xlu0 %v2931
      %v2933 = vpop.xlane.xlu0 %2932
      %v2934 = vsel %vm531, %v2916, inf
      %2935 = vmin.xlane.f32.xlu0 %v2934
      %v2936 = vpop.xlane.xlu0 %2935
      %v2937 = vsel %vm531, %v2917, inf
      %2938 = vmin.xlane.f32.xlu0 %v2937
      %v2939 = vpop.xlane.xlu0 %2938
      %v2940 = vsel %vm531, %v2918, inf
      %2941 = vmin.xlane.f32.xlu0 %v2940
      %v2942 = vpop.xlane.xlu0 %2941
      %v2943 = vmin.f32 %v2881, %v2921
      %v2944 = vmin.f32 %v2884, %v2924
      %v2945 = vmin.f32 %v2887, %v2927
      %v2946 = vmin.f32 %v2890, %v2930
      %v2947 = vmin.f32 %v2893, %v2933
      %v2948 = vmin.f32 %v2896, %v2936
      %v2949 = vmin.f32 %v2899, %v2939
      %v2950 = vmin.f32 %v2902, %v2942
      %vm2951 = vcmask 97368
      %2952 = vst.msk [vmem:[#allocation2] sm:$0xff] %vm2951, %v2855
      %2953 = vst.msk [vmem:[#allocation2 + $0x8] sm:$0xff] %vm2951, %v2856
      %2954 = vst.msk [vmem:[#allocation2 + $0x10] sm:$0xff] %vm2951, %v2857
      %2955 = vst.msk [vmem:[#allocation2 + $0x18] sm:$0xff] %vm2951, %v2858
      %2956 = vst.msk [vmem:[#allocation2 + $0x20] sm:$0xff] %vm2951, %v2859
      %2957 = vst.msk [vmem:[#allocation2 + $0x28] sm:$0xff] %vm2951, %v2860
      %2958 = vst.msk [vmem:[#allocation2 + $0x30] sm:$0xff] %vm2951, %v2861
      %2959 = vst.msk [vmem:[#allocation2 + $0x38] sm:$0xff] %vm2951, %v2862
      %2960 = vst.msk [vmem:[#allocation3] sm:$0xff] %vm2951, %v2943
      %2961 = vst.msk [vmem:[#allocation3 + $0x8] sm:$0xff] %vm2951, %v2944
      %2962 = vst.msk [vmem:[#allocation3 + $0x10] sm:$0xff] %vm2951, %v2945
      %2963 = vst.msk [vmem:[#allocation3 + $0x18] sm:$0xff] %vm2951, %v2946
      %2964 = vst.msk [vmem:[#allocation3 + $0x20] sm:$0xff] %vm2951, %v2947
      %2965 = vst.msk [vmem:[#allocation3 + $0x28] sm:$0xff] %vm2951, %v2948
      %2966 = vst.msk [vmem:[#allocation3 + $0x30] sm:$0xff] %vm2951, %v2949
      %2967 = vst.msk [vmem:[#allocation3 + $0x38] sm:$0xff] %vm2951, %v2950
      %vm2968 = vcmp.eq.f32.partialorder %v498, %v2943
      %vm2969 = vcmp.eq.f32.partialorder %v499, %v2944
      %vm2970 = vcmp.eq.f32.partialorder %v500, %v2945
      %vm2971 = vcmp.eq.f32.partialorder %v501, %v2946
      %vm2972 = vcmp.eq.f32.partialorder %v502, %v2947
      %vm2973 = vcmp.eq.f32.partialorder %v503, %v2948
      %vm2974 = vcmp.eq.f32.partialorder %v504, %v2949
      %vm2975 = vcmp.eq.f32.partialorder %v505, %v2950
      %vm2976 = vmand %vm2863, %vm2968
      %vm2977 = vmand %vm2864, %vm2969
      %vm2978 = vmand %vm2865, %vm2970
      %vm2979 = vmand %vm2866, %vm2971
      %vm2980 = vmand %vm2867, %vm2972
      %vm2981 = vmand %vm2868, %vm2973
      %vm2982 = vmand %vm2869, %vm2974
      %vm2983 = vmand %vm2870, %vm2975
      %v2984 = vsel %vm2976, inf, %v2775
      %v2985 = vsel %vm2977, inf, %v2776
      %v2986 = vsel %vm2978, inf, %v2777
      %v2987 = vsel %vm2979, inf, %v2778
      %v2988 = vsel %vm2980, inf, %v2779
      %v2989 = vsel %vm2981, inf, %v2780
      %v2990 = vsel %vm2982, inf, %v2781
      %v2991 = vsel %vm2983, inf, %v2782
      %vm2992 = vcmp.eq.f32.partialorder %v489, %v2943
      %vm2993 = vcmp.eq.f32.partialorder %v489, %v2944
      %vm2994 = vcmp.eq.f32.partialorder %v489, %v2945
      %vm2995 = vcmp.eq.f32.partialorder %v489, %v2946
      %vm2996 = vcmp.eq.f32.partialorder %v489, %v2947
      %vm2997 = vcmp.eq.f32.partialorder %v489, %v2948
      %vm2998 = vcmp.eq.f32.partialorder %v489, %v2949
      %vm2999 = vcmp.eq.f32.partialorder %v489, %v2950
      %vm3000 = vmand %vm2903, %vm2992
      %vm3001 = vmand %vm2904, %vm2993
      %vm3002 = vmand %vm2905, %vm2994
      %vm3003 = vmand %vm2906, %vm2995
      %vm3004 = vmand %vm2907, %vm2996
      %vm3005 = vmand %vm2908, %vm2997
      %vm3006 = vmand %vm2909, %vm2998
      %vm3007 = vmand %vm2910, %vm2999
      %v3008 = vsel %vm3000, inf, %v2799
      %v3009 = vsel %vm3001, inf, %v2800
      %v3010 = vsel %vm3002, inf, %v2801
      %v3011 = vsel %vm3003, inf, %v2802
      %v3012 = vsel %vm3004, inf, %v2803
      %v3013 = vsel %vm3005, inf, %v2804
      %v3014 = vsel %vm3006, inf, %v2805
      %v3015 = vsel %vm3007, inf, %v2806
      %v3016 = vsel %vm506, %v2984, inf
      %3017 = vmin.xlane.f32.xlu0 %v3016
      %v3018 = vpop.xlane.xlu0 %3017
      %v3019 = vsel %vm506, %v2985, inf
      %3020 = vmin.xlane.f32.xlu0 %v3019
      %v3021 = vpop.xlane.xlu0 %3020
      %v3022 = vsel %vm506, %v2986, inf
      %3023 = vmin.xlane.f32.xlu0 %v3022
      %v3024 = vpop.xlane.xlu0 %3023
      %v3025 = vsel %vm506, %v2987, inf
      %3026 = vmin.xlane.f32.xlu0 %v3025
      %v3027 = vpop.xlane.xlu0 %3026
      %v3028 = vsel %vm506, %v2988, inf
      %3029 = vmin.xlane.f32.xlu0 %v3028
      %v3030 = vpop.xlane.xlu0 %3029
      %v3031 = vsel %vm506, %v2989, inf
      %3032 = vmin.xlane.f32.xlu0 %v3031
      %v3033 = vpop.xlane.xlu0 %3032
      %v3034 = vsel %vm506, %v2990, inf
      %3035 = vmin.xlane.f32.xlu0 %v3034
      %v3036 = vpop.xlane.xlu0 %3035
      %v3037 = vsel %vm506, %v2991, inf
      %3038 = vmin.xlane.f32.xlu0 %v3037
      %v3039 = vpop.xlane.xlu0 %3038
      %v3040 = vsel %vm531, %v3008, inf
      %3041 = vmin.xlane.f32.xlu0 %v3040
      %v3042 = vpop.xlane.xlu0 %3041
      %v3043 = vsel %vm531, %v3009, inf
      %3044 = vmin.xlane.f32.xlu0 %v3043
      %v3045 = vpop.xlane.xlu0 %3044
      %v3046 = vsel %vm531, %v3010, inf
      %3047 = vmin.xlane.f32.xlu0 %v3046
      %v3048 = vpop.xlane.xlu0 %3047
      %v3049 = vsel %vm531, %v3011, inf
      %3050 = vmin.xlane.f32.xlu0 %v3049
      %v3051 = vpop.xlane.xlu0 %3050
      %v3052 = vsel %vm531, %v3012, inf
      %3053 = vmin.xlane.f32.xlu0 %v3052
      %v3054 = vpop.xlane.xlu0 %3053
      %v3055 = vsel %vm531, %v3013, inf
      %3056 = vmin.xlane.f32.xlu0 %v3055
      %v3057 = vpop.xlane.xlu0 %3056
      %v3058 = vsel %vm531, %v3014, inf
      %3059 = vmin.xlane.f32.xlu0 %v3058
      %v3060 = vpop.xlane.xlu0 %3059
      %v3061 = vsel %vm531, %v3015, inf
      %3062 = vmin.xlane.f32.xlu0 %v3061
      %v3063 = vpop.xlane.xlu0 %3062
      %v3064 = vmin.f32 %v3018, %v3042
      %v3065 = vmin.f32 %v3021, %v3045
      %v3066 = vmin.f32 %v3024, %v3048
      %v3067 = vmin.f32 %v3027, %v3051
      %v3068 = vmin.f32 %v3030, %v3054
      %v3069 = vmin.f32 %v3033, %v3057
      %v3070 = vmin.f32 %v3036, %v3060
      %v3071 = vmin.f32 %v3039, %v3063
      %vm3072 = vcmp.eq.f32.partialorder %v2984, %v3064
      %vm3073 = vcmp.eq.f32.partialorder %v2985, %v3065
      %vm3074 = vcmp.eq.f32.partialorder %v2986, %v3066
      %vm3075 = vcmp.eq.f32.partialorder %v2987, %v3067
      %vm3076 = vcmp.eq.f32.partialorder %v2988, %v3068
      %vm3077 = vcmp.eq.f32.partialorder %v2989, %v3069
      %vm3078 = vcmp.eq.f32.partialorder %v2990, %v3070
      %vm3079 = vcmp.eq.f32.partialorder %v2991, %v3071
      %v3080 = vsel %vm3072, %v498, 1e+09
      %v3081 = vsel %vm3073, %v499, 1e+09
      %v3082 = vsel %vm3074, %v500, 1e+09
      %v3083 = vsel %vm3075, %v501, 1e+09
      %v3084 = vsel %vm3076, %v502, 1e+09
      %v3085 = vsel %vm3077, %v503, 1e+09
      %v3086 = vsel %vm3078, %v504, 1e+09
      %v3087 = vsel %vm3079, %v505, 1e+09
      %v3088 = vsel %vm506, %v3080, inf
      %3089 = vmin.xlane.f32.xlu0 %v3088
      %v3090 = vpop.xlane.xlu0 %3089
      %v3091 = vsel %vm506, %v3081, inf
      %3092 = vmin.xlane.f32.xlu0 %v3091
      %v3093 = vpop.xlane.xlu0 %3092
      %v3094 = vsel %vm506, %v3082, inf
      %3095 = vmin.xlane.f32.xlu0 %v3094
      %v3096 = vpop.xlane.xlu0 %3095
      %v3097 = vsel %vm506, %v3083, inf
      %3098 = vmin.xlane.f32.xlu0 %v3097
      %v3099 = vpop.xlane.xlu0 %3098
      %v3100 = vsel %vm506, %v3084, inf
      %3101 = vmin.xlane.f32.xlu0 %v3100
      %v3102 = vpop.xlane.xlu0 %3101
      %v3103 = vsel %vm506, %v3085, inf
      %3104 = vmin.xlane.f32.xlu0 %v3103
      %v3105 = vpop.xlane.xlu0 %3104
      %v3106 = vsel %vm506, %v3086, inf
      %3107 = vmin.xlane.f32.xlu0 %v3106
      %v3108 = vpop.xlane.xlu0 %3107
      %v3109 = vsel %vm506, %v3087, inf
      %3110 = vmin.xlane.f32.xlu0 %v3109
      %v3111 = vpop.xlane.xlu0 %3110
      %vm3112 = vcmp.eq.f32.partialorder %v3008, %v3064
      %vm3113 = vcmp.eq.f32.partialorder %v3009, %v3065
      %vm3114 = vcmp.eq.f32.partialorder %v3010, %v3066
      %vm3115 = vcmp.eq.f32.partialorder %v3011, %v3067
      %vm3116 = vcmp.eq.f32.partialorder %v3012, %v3068
      %vm3117 = vcmp.eq.f32.partialorder %v3013, %v3069
      %vm3118 = vcmp.eq.f32.partialorder %v3014, %v3070
      %vm3119 = vcmp.eq.f32.partialorder %v3015, %v3071
      %v3120 = vsel %vm3112, %v489, 1e+09
      %v3121 = vsel %vm3113, %v489, 1e+09
      %v3122 = vsel %vm3114, %v489, 1e+09
      %v3123 = vsel %vm3115, %v489, 1e+09
      %v3124 = vsel %vm3116, %v489, 1e+09
      %v3125 = vsel %vm3117, %v489, 1e+09
      %v3126 = vsel %vm3118, %v489, 1e+09
      %v3127 = vsel %vm3119, %v489, 1e+09
      %v3128 = vsel %vm531, %v3120, inf
      %3129 = vmin.xlane.f32.xlu0 %v3128
      %v3130 = vpop.xlane.xlu0 %3129
      %v3131 = vsel %vm531, %v3121, inf
      %3132 = vmin.xlane.f32.xlu0 %v3131
      %v3133 = vpop.xlane.xlu0 %3132
      %v3134 = vsel %vm531, %v3122, inf
      %3135 = vmin.xlane.f32.xlu0 %v3134
      %v3136 = vpop.xlane.xlu0 %3135
      %v3137 = vsel %vm531, %v3123, inf
      %3138 = vmin.xlane.f32.xlu0 %v3137
      %v3139 = vpop.xlane.xlu0 %3138
      %v3140 = vsel %vm531, %v3124, inf
      %3141 = vmin.xlane.f32.xlu0 %v3140
      %v3142 = vpop.xlane.xlu0 %3141
      %v3143 = vsel %vm531, %v3125, inf
      %3144 = vmin.xlane.f32.xlu0 %v3143
      %v3145 = vpop.xlane.xlu0 %3144
      %v3146 = vsel %vm531, %v3126, inf
      %3147 = vmin.xlane.f32.xlu0 %v3146
      %v3148 = vpop.xlane.xlu0 %3147
      %v3149 = vsel %vm531, %v3127, inf
      %3150 = vmin.xlane.f32.xlu0 %v3149
      %v3151 = vpop.xlane.xlu0 %3150
      %v3152 = vmin.f32 %v3090, %v3130
      %v3153 = vmin.f32 %v3093, %v3133
      %v3154 = vmin.f32 %v3096, %v3136
      %v3155 = vmin.f32 %v3099, %v3139
      %v3156 = vmin.f32 %v3102, %v3142
      %v3157 = vmin.f32 %v3105, %v3145
      %v3158 = vmin.f32 %v3108, %v3148
      %v3159 = vmin.f32 %v3111, %v3151
      %vm3160 = vcmask 105568
      %3161 = vst.msk [vmem:[#allocation2] sm:$0xff] %vm3160, %v3064
      %3162 = vst.msk [vmem:[#allocation2 + $0x8] sm:$0xff] %vm3160, %v3065
      %3163 = vst.msk [vmem:[#allocation2 + $0x10] sm:$0xff] %vm3160, %v3066
      %3164 = vst.msk [vmem:[#allocation2 + $0x18] sm:$0xff] %vm3160, %v3067
      %3165 = vst.msk [vmem:[#allocation2 + $0x20] sm:$0xff] %vm3160, %v3068
      %3166 = vst.msk [vmem:[#allocation2 + $0x28] sm:$0xff] %vm3160, %v3069
      %3167 = vst.msk [vmem:[#allocation2 + $0x30] sm:$0xff] %vm3160, %v3070
      %3168 = vst.msk [vmem:[#allocation2 + $0x38] sm:$0xff] %vm3160, %v3071
      %3169 = vst.msk [vmem:[#allocation3] sm:$0xff] %vm3160, %v3152
      %3170 = vst.msk [vmem:[#allocation3 + $0x8] sm:$0xff] %vm3160, %v3153
      %3171 = vst.msk [vmem:[#allocation3 + $0x10] sm:$0xff] %vm3160, %v3154
      %3172 = vst.msk [vmem:[#allocation3 + $0x18] sm:$0xff] %vm3160, %v3155
      %3173 = vst.msk [vmem:[#allocation3 + $0x20] sm:$0xff] %vm3160, %v3156
      %3174 = vst.msk [vmem:[#allocation3 + $0x28] sm:$0xff] %vm3160, %v3157
      %3175 = vst.msk [vmem:[#allocation3 + $0x30] sm:$0xff] %vm3160, %v3158
      %3176 = vst.msk [vmem:[#allocation3 + $0x38] sm:$0xff] %vm3160, %v3159
      %vm3177 = vcmp.eq.f32.partialorder %v498, %v3152
      %vm3178 = vcmp.eq.f32.partialorder %v499, %v3153
      %vm3179 = vcmp.eq.f32.partialorder %v500, %v3154
      %vm3180 = vcmp.eq.f32.partialorder %v501, %v3155
      %vm3181 = vcmp.eq.f32.partialorder %v502, %v3156
      %vm3182 = vcmp.eq.f32.partialorder %v503, %v3157
      %vm3183 = vcmp.eq.f32.partialorder %v504, %v3158
      %vm3184 = vcmp.eq.f32.partialorder %v505, %v3159
      %vm3185 = vmand %vm3072, %vm3177
      %vm3186 = vmand %vm3073, %vm3178
      %vm3187 = vmand %vm3074, %vm3179
      %vm3188 = vmand %vm3075, %vm3180
      %vm3189 = vmand %vm3076, %vm3181
      %vm3190 = vmand %vm3077, %vm3182
      %vm3191 = vmand %vm3078, %vm3183
      %vm3192 = vmand %vm3079, %vm3184
      %v3193 = vsel %vm3185, inf, %v2984
      %v3194 = vsel %vm3186, inf, %v2985
      %v3195 = vsel %vm3187, inf, %v2986
      %v3196 = vsel %vm3188, inf, %v2987
      %v3197 = vsel %vm3189, inf, %v2988
      %v3198 = vsel %vm3190, inf, %v2989
      %v3199 = vsel %vm3191, inf, %v2990
      %v3200 = vsel %vm3192, inf, %v2991
      %vm3201 = vcmp.eq.f32.partialorder %v489, %v3152
      %vm3202 = vcmp.eq.f32.partialorder %v489, %v3153
      %vm3203 = vcmp.eq.f32.partialorder %v489, %v3154
      %vm3204 = vcmp.eq.f32.partialorder %v489, %v3155
      %vm3205 = vcmp.eq.f32.partialorder %v489, %v3156
      %vm3206 = vcmp.eq.f32.partialorder %v489, %v3157
      %vm3207 = vcmp.eq.f32.partialorder %v489, %v3158
      %vm3208 = vcmp.eq.f32.partialorder %v489, %v3159
      %vm3209 = vmand %vm3112, %vm3201
      %vm3210 = vmand %vm3113, %vm3202
      %vm3211 = vmand %vm3114, %vm3203
      %vm3212 = vmand %vm3115, %vm3204
      %vm3213 = vmand %vm3116, %vm3205
      %vm3214 = vmand %vm3117, %vm3206
      %vm3215 = vmand %vm3118, %vm3207
      %vm3216 = vmand %vm3119, %vm3208
      %v3217 = vsel %vm3209, inf, %v3008
      %v3218 = vsel %vm3210, inf, %v3009
      %v3219 = vsel %vm3211, inf, %v3010
      %v3220 = vsel %vm3212, inf, %v3011
      %v3221 = vsel %vm3213, inf, %v3012
      %v3222 = vsel %vm3214, inf, %v3013
      %v3223 = vsel %vm3215, inf, %v3014
      %v3224 = vsel %vm3216, inf, %v3015
      %v3225 = vsel %vm506, %v3193, inf
      %3226 = vmin.xlane.f32.xlu0 %v3225
      %v3227 = vpop.xlane.xlu0 %3226
      %v3228 = vsel %vm506, %v3194, inf
      %3229 = vmin.xlane.f32.xlu0 %v3228
      %v3230 = vpop.xlane.xlu0 %3229
      %v3231 = vsel %vm506, %v3195, inf
      %3232 = vmin.xlane.f32.xlu0 %v3231
      %v3233 = vpop.xlane.xlu0 %3232
      %v3234 = vsel %vm506, %v3196, inf
      %3235 = vmin.xlane.f32.xlu0 %v3234
      %v3236 = vpop.xlane.xlu0 %3235
      %v3237 = vsel %vm506, %v3197, inf
      %3238 = vmin.xlane.f32.xlu0 %v3237
      %v3239 = vpop.xlane.xlu0 %3238
      %v3240 = vsel %vm506, %v3198, inf
      %3241 = vmin.xlane.f32.xlu0 %v3240
      %v3242 = vpop.xlane.xlu0 %3241
      %v3243 = vsel %vm506, %v3199, inf
      %3244 = vmin.xlane.f32.xlu0 %v3243
      %v3245 = vpop.xlane.xlu0 %3244
      %v3246 = vsel %vm506, %v3200, inf
      %3247 = vmin.xlane.f32.xlu0 %v3246
      %v3248 = vpop.xlane.xlu0 %3247
      %v3249 = vsel %vm531, %v3217, inf
      %3250 = vmin.xlane.f32.xlu0 %v3249
      %v3251 = vpop.xlane.xlu0 %3250
      %v3252 = vsel %vm531, %v3218, inf
      %3253 = vmin.xlane.f32.xlu0 %v3252
      %v3254 = vpop.xlane.xlu0 %3253
      %v3255 = vsel %vm531, %v3219, inf
      %3256 = vmin.xlane.f32.xlu0 %v3255
      %v3257 = vpop.xlane.xlu0 %3256
      %v3258 = vsel %vm531, %v3220, inf
      %3259 = vmin.xlane.f32.xlu0 %v3258
      %v3260 = vpop.xlane.xlu0 %3259
      %v3261 = vsel %vm531, %v3221, inf
      %3262 = vmin.xlane.f32.xlu0 %v3261
      %v3263 = vpop.xlane.xlu0 %3262
      %v3264 = vsel %vm531, %v3222, inf
      %3265 = vmin.xlane.f32.xlu0 %v3264
      %v3266 = vpop.xlane.xlu0 %3265
      %v3267 = vsel %vm531, %v3223, inf
      %3268 = vmin.xlane.f32.xlu0 %v3267
      %v3269 = vpop.xlane.xlu0 %3268
      %v3270 = vsel %vm531, %v3224, inf
      %3271 = vmin.xlane.f32.xlu0 %v3270
      %v3272 = vpop.xlane.xlu0 %3271
      %v3273 = vmin.f32 %v3227, %v3251
      %v3274 = vmin.f32 %v3230, %v3254
      %v3275 = vmin.f32 %v3233, %v3257
      %v3276 = vmin.f32 %v3236, %v3260
      %v3277 = vmin.f32 %v3239, %v3263
      %v3278 = vmin.f32 %v3242, %v3266
      %v3279 = vmin.f32 %v3245, %v3269
      %v3280 = vmin.f32 %v3248, %v3272
      %vm3281 = vcmp.eq.f32.partialorder %v3193, %v3273
      %vm3282 = vcmp.eq.f32.partialorder %v3194, %v3274
      %vm3283 = vcmp.eq.f32.partialorder %v3195, %v3275
      %vm3284 = vcmp.eq.f32.partialorder %v3196, %v3276
      %vm3285 = vcmp.eq.f32.partialorder %v3197, %v3277
      %vm3286 = vcmp.eq.f32.partialorder %v3198, %v3278
      %vm3287 = vcmp.eq.f32.partialorder %v3199, %v3279
      %vm3288 = vcmp.eq.f32.partialorder %v3200, %v3280
      %v3289 = vsel %vm3281, %v498, 1e+09
      %v3290 = vsel %vm3282, %v499, 1e+09
      %v3291 = vsel %vm3283, %v500, 1e+09
      %v3292 = vsel %vm3284, %v501, 1e+09
      %v3293 = vsel %vm3285, %v502, 1e+09
      %v3294 = vsel %vm3286, %v503, 1e+09
      %v3295 = vsel %vm3287, %v504, 1e+09
      %v3296 = vsel %vm3288, %v505, 1e+09
      %v3297 = vsel %vm506, %v3289, inf
      %3298 = vmin.xlane.f32.xlu0 %v3297
      %v3299 = vpop.xlane.xlu0 %3298
      %v3300 = vsel %vm506, %v3290, inf
      %3301 = vmin.xlane.f32.xlu0 %v3300
      %v3302 = vpop.xlane.xlu0 %3301
      %v3303 = vsel %vm506, %v3291, inf
      %3304 = vmin.xlane.f32.xlu0 %v3303
      %v3305 = vpop.xlane.xlu0 %3304
      %v3306 = vsel %vm506, %v3292, inf
      %3307 = vmin.xlane.f32.xlu0 %v3306
      %v3308 = vpop.xlane.xlu0 %3307
      %v3309 = vsel %vm506, %v3293, inf
      %3310 = vmin.xlane.f32.xlu0 %v3309
      %v3311 = vpop.xlane.xlu0 %3310
      %v3312 = vsel %vm506, %v3294, inf
      %3313 = vmin.xlane.f32.xlu0 %v3312
      %v3314 = vpop.xlane.xlu0 %3313
      %v3315 = vsel %vm506, %v3295, inf
      %3316 = vmin.xlane.f32.xlu0 %v3315
      %v3317 = vpop.xlane.xlu0 %3316
      %v3318 = vsel %vm506, %v3296, inf
      %3319 = vmin.xlane.f32.xlu0 %v3318
      %v3320 = vpop.xlane.xlu0 %3319
      %vm3321 = vcmp.eq.f32.partialorder %v3217, %v3273
      %vm3322 = vcmp.eq.f32.partialorder %v3218, %v3274
      %vm3323 = vcmp.eq.f32.partialorder %v3219, %v3275
      %vm3324 = vcmp.eq.f32.partialorder %v3220, %v3276
      %vm3325 = vcmp.eq.f32.partialorder %v3221, %v3277
      %vm3326 = vcmp.eq.f32.partialorder %v3222, %v3278
      %vm3327 = vcmp.eq.f32.partialorder %v3223, %v3279
      %vm3328 = vcmp.eq.f32.partialorder %v3224, %v3280
      %v3329 = vsel %vm3321, %v489, 1e+09
      %v3330 = vsel %vm3322, %v489, 1e+09
      %v3331 = vsel %vm3323, %v489, 1e+09
      %v3332 = vsel %vm3324, %v489, 1e+09
      %v3333 = vsel %vm3325, %v489, 1e+09
      %v3334 = vsel %vm3326, %v489, 1e+09
      %v3335 = vsel %vm3327, %v489, 1e+09
      %v3336 = vsel %vm3328, %v489, 1e+09
      %v3337 = vsel %vm531, %v3329, inf
      %3338 = vmin.xlane.f32.xlu0 %v3337
      %v3339 = vpop.xlane.xlu0 %3338
      %v3340 = vsel %vm531, %v3330, inf
      %3341 = vmin.xlane.f32.xlu0 %v3340
      %v3342 = vpop.xlane.xlu0 %3341
      %v3343 = vsel %vm531, %v3331, inf
      %3344 = vmin.xlane.f32.xlu0 %v3343
      %v3345 = vpop.xlane.xlu0 %3344
      %v3346 = vsel %vm531, %v3332, inf
      %3347 = vmin.xlane.f32.xlu0 %v3346
      %v3348 = vpop.xlane.xlu0 %3347
      %v3349 = vsel %vm531, %v3333, inf
      %3350 = vmin.xlane.f32.xlu0 %v3349
      %v3351 = vpop.xlane.xlu0 %3350
      %v3352 = vsel %vm531, %v3334, inf
      %3353 = vmin.xlane.f32.xlu0 %v3352
      %v3354 = vpop.xlane.xlu0 %3353
      %v3355 = vsel %vm531, %v3335, inf
      %3356 = vmin.xlane.f32.xlu0 %v3355
      %v3357 = vpop.xlane.xlu0 %3356
      %v3358 = vsel %vm531, %v3336, inf
      %3359 = vmin.xlane.f32.xlu0 %v3358
      %v3360 = vpop.xlane.xlu0 %3359
      %v3361 = vmin.f32 %v3299, %v3339
      %v3362 = vmin.f32 %v3302, %v3342
      %v3363 = vmin.f32 %v3305, %v3345
      %v3364 = vmin.f32 %v3308, %v3348
      %v3365 = vmin.f32 %v3311, %v3351
      %v3366 = vmin.f32 %v3314, %v3354
      %v3367 = vmin.f32 %v3317, %v3357
      %v3368 = vmin.f32 %v3320, %v3360
      %vm3369 = vcmask 113768
      %3370 = vst.msk [vmem:[#allocation2] sm:$0xff] %vm3369, %v3273
      %3371 = vst.msk [vmem:[#allocation2 + $0x8] sm:$0xff] %vm3369, %v3274
      %3372 = vst.msk [vmem:[#allocation2 + $0x10] sm:$0xff] %vm3369, %v3275
      %3373 = vst.msk [vmem:[#allocation2 + $0x18] sm:$0xff] %vm3369, %v3276
      %3374 = vst.msk [vmem:[#allocation2 + $0x20] sm:$0xff] %vm3369, %v3277
      %3375 = vst.msk [vmem:[#allocation2 + $0x28] sm:$0xff] %vm3369, %v3278
      %3376 = vst.msk [vmem:[#allocation2 + $0x30] sm:$0xff] %vm3369, %v3279
      %3377 = vst.msk [vmem:[#allocation2 + $0x38] sm:$0xff] %vm3369, %v3280
      %3378 = vst.msk [vmem:[#allocation3] sm:$0xff] %vm3369, %v3361
      %3379 = vst.msk [vmem:[#allocation3 + $0x8] sm:$0xff] %vm3369, %v3362
      %3380 = vst.msk [vmem:[#allocation3 + $0x10] sm:$0xff] %vm3369, %v3363
      %3381 = vst.msk [vmem:[#allocation3 + $0x18] sm:$0xff] %vm3369, %v3364
      %3382 = vst.msk [vmem:[#allocation3 + $0x20] sm:$0xff] %vm3369, %v3365
      %3383 = vst.msk [vmem:[#allocation3 + $0x28] sm:$0xff] %vm3369, %v3366
      %3384 = vst.msk [vmem:[#allocation3 + $0x30] sm:$0xff] %vm3369, %v3367
      %3385 = vst.msk [vmem:[#allocation3 + $0x38] sm:$0xff] %vm3369, %v3368
      %vm3386 = vcmp.eq.f32.partialorder %v498, %v3361
      %vm3387 = vcmp.eq.f32.partialorder %v499, %v3362
      %vm3388 = vcmp.eq.f32.partialorder %v500, %v3363
      %vm3389 = vcmp.eq.f32.partialorder %v501, %v3364
      %vm3390 = vcmp.eq.f32.partialorder %v502, %v3365
      %vm3391 = vcmp.eq.f32.partialorder %v503, %v3366
      %vm3392 = vcmp.eq.f32.partialorder %v504, %v3367
      %vm3393 = vcmp.eq.f32.partialorder %v505, %v3368
      %vm3394 = vmand %vm3281, %vm3386
      %vm3395 = vmand %vm3282, %vm3387
      %vm3396 = vmand %vm3283, %vm3388
      %vm3397 = vmand %vm3284, %vm3389
      %vm3398 = vmand %vm3285, %vm3390
      %vm3399 = vmand %vm3286, %vm3391
      %vm3400 = vmand %vm3287, %vm3392
      %vm3401 = vmand %vm3288, %vm3393
      %v3402 = vsel %vm3394, inf, %v3193
      %v3403 = vsel %vm3395, inf, %v3194
      %v3404 = vsel %vm3396, inf, %v3195
      %v3405 = vsel %vm3397, inf, %v3196
      %v3406 = vsel %vm3398, inf, %v3197
      %v3407 = vsel %vm3399, inf, %v3198
      %v3408 = vsel %vm3400, inf, %v3199
      %v3409 = vsel %vm3401, inf, %v3200
      %vm3410 = vcmp.eq.f32.partialorder %v489, %v3361
      %vm3411 = vcmp.eq.f32.partialorder %v489, %v3362
      %vm3412 = vcmp.eq.f32.partialorder %v489, %v3363
      %vm3413 = vcmp.eq.f32.partialorder %v489, %v3364
      %vm3414 = vcmp.eq.f32.partialorder %v489, %v3365
      %vm3415 = vcmp.eq.f32.partialorder %v489, %v3366
      %vm3416 = vcmp.eq.f32.partialorder %v489, %v3367
      %vm3417 = vcmp.eq.f32.partialorder %v489, %v3368
      %vm3418 = vmand %vm3321, %vm3410
      %vm3419 = vmand %vm3322, %vm3411
      %vm3420 = vmand %vm3323, %vm3412
      %vm3421 = vmand %vm3324, %vm3413
      %vm3422 = vmand %vm3325, %vm3414
      %vm3423 = vmand %vm3326, %vm3415
      %vm3424 = vmand %vm3327, %vm3416
      %vm3425 = vmand %vm3328, %vm3417
      %v3426 = vsel %vm3418, inf, %v3217
      %v3427 = vsel %vm3419, inf, %v3218
      %v3428 = vsel %vm3420, inf, %v3219
      %v3429 = vsel %vm3421, inf, %v3220
      %v3430 = vsel %vm3422, inf, %v3221
      %v3431 = vsel %vm3423, inf, %v3222
      %v3432 = vsel %vm3424, inf, %v3223
      %v3433 = vsel %vm3425, inf, %v3224
      %v3434 = vsel %vm506, %v3402, inf
      %3435 = vmin.xlane.f32.xlu0 %v3434
      %v3436 = vpop.xlane.xlu0 %3435
      %v3437 = vsel %vm506, %v3403, inf
      %3438 = vmin.xlane.f32.xlu0 %v3437
      %v3439 = vpop.xlane.xlu0 %3438
      %v3440 = vsel %vm506, %v3404, inf
      %3441 = vmin.xlane.f32.xlu0 %v3440
      %v3442 = vpop.xlane.xlu0 %3441
      %v3443 = vsel %vm506, %v3405, inf
      %3444 = vmin.xlane.f32.xlu0 %v3443
      %v3445 = vpop.xlane.xlu0 %3444
      %v3446 = vsel %vm506, %v3406, inf
      %3447 = vmin.xlane.f32.xlu0 %v3446
      %v3448 = vpop.xlane.xlu0 %3447
      %v3449 = vsel %vm506, %v3407, inf
      %3450 = vmin.xlane.f32.xlu0 %v3449
      %v3451 = vpop.xlane.xlu0 %3450
      %v3452 = vsel %vm506, %v3408, inf
      %3453 = vmin.xlane.f32.xlu0 %v3452
      %v3454 = vpop.xlane.xlu0 %3453
      %v3455 = vsel %vm506, %v3409, inf
      %3456 = vmin.xlane.f32.xlu0 %v3455
      %v3457 = vpop.xlane.xlu0 %3456
      %v3458 = vsel %vm531, %v3426, inf
      %3459 = vmin.xlane.f32.xlu0 %v3458
      %v3460 = vpop.xlane.xlu0 %3459
      %v3461 = vsel %vm531, %v3427, inf
      %3462 = vmin.xlane.f32.xlu0 %v3461
      %v3463 = vpop.xlane.xlu0 %3462
      %v3464 = vsel %vm531, %v3428, inf
      %3465 = vmin.xlane.f32.xlu0 %v3464
      %v3466 = vpop.xlane.xlu0 %3465
      %v3467 = vsel %vm531, %v3429, inf
      %3468 = vmin.xlane.f32.xlu0 %v3467
      %v3469 = vpop.xlane.xlu0 %3468
      %v3470 = vsel %vm531, %v3430, inf
      %3471 = vmin.xlane.f32.xlu0 %v3470
      %v3472 = vpop.xlane.xlu0 %3471
      %v3473 = vsel %vm531, %v3431, inf
      %3474 = vmin.xlane.f32.xlu0 %v3473
      %v3475 = vpop.xlane.xlu0 %3474
      %v3476 = vsel %vm531, %v3432, inf
      %3477 = vmin.xlane.f32.xlu0 %v3476
      %v3478 = vpop.xlane.xlu0 %3477
      %v3479 = vsel %vm531, %v3433, inf
      %3480 = vmin.xlane.f32.xlu0 %v3479
      %v3481 = vpop.xlane.xlu0 %3480
      %v3482 = vmin.f32 %v3436, %v3460
      %v3483 = vmin.f32 %v3439, %v3463
      %v3484 = vmin.f32 %v3442, %v3466
      %v3485 = vmin.f32 %v3445, %v3469
      %v3486 = vmin.f32 %v3448, %v3472
      %v3487 = vmin.f32 %v3451, %v3475
      %v3488 = vmin.f32 %v3454, %v3478
      %v3489 = vmin.f32 %v3457, %v3481
      %vm3490 = vcmp.eq.f32.partialorder %v3402, %v3482
      %vm3491 = vcmp.eq.f32.partialorder %v3403, %v3483
      %vm3492 = vcmp.eq.f32.partialorder %v3404, %v3484
      %vm3493 = vcmp.eq.f32.partialorder %v3405, %v3485
      %vm3494 = vcmp.eq.f32.partialorder %v3406, %v3486
      %vm3495 = vcmp.eq.f32.partialorder %v3407, %v3487
      %vm3496 = vcmp.eq.f32.partialorder %v3408, %v3488
      %vm3497 = vcmp.eq.f32.partialorder %v3409, %v3489
      %v3498 = vsel %vm3490, %v498, 1e+09
      %v3499 = vsel %vm3491, %v499, 1e+09
      %v3500 = vsel %vm3492, %v500, 1e+09
      %v3501 = vsel %vm3493, %v501, 1e+09
      %v3502 = vsel %vm3494, %v502, 1e+09
      %v3503 = vsel %vm3495, %v503, 1e+09
      %v3504 = vsel %vm3496, %v504, 1e+09
      %v3505 = vsel %vm3497, %v505, 1e+09
      %v3506 = vsel %vm506, %v3498, inf
      %3507 = vmin.xlane.f32.xlu0 %v3506
      %v3508 = vpop.xlane.xlu0 %3507
      %v3509 = vsel %vm506, %v3499, inf
      %3510 = vmin.xlane.f32.xlu0 %v3509
      %v3511 = vpop.xlane.xlu0 %3510
      %v3512 = vsel %vm506, %v3500, inf
      %3513 = vmin.xlane.f32.xlu0 %v3512
      %v3514 = vpop.xlane.xlu0 %3513
      %v3515 = vsel %vm506, %v3501, inf
      %3516 = vmin.xlane.f32.xlu0 %v3515
      %v3517 = vpop.xlane.xlu0 %3516
      %v3518 = vsel %vm506, %v3502, inf
      %3519 = vmin.xlane.f32.xlu0 %v3518
      %v3520 = vpop.xlane.xlu0 %3519
      %v3521 = vsel %vm506, %v3503, inf
      %3522 = vmin.xlane.f32.xlu0 %v3521
      %v3523 = vpop.xlane.xlu0 %3522
      %v3524 = vsel %vm506, %v3504, inf
      %3525 = vmin.xlane.f32.xlu0 %v3524
      %v3526 = vpop.xlane.xlu0 %3525
      %v3527 = vsel %vm506, %v3505, inf
      %3528 = vmin.xlane.f32.xlu0 %v3527
      %v3529 = vpop.xlane.xlu0 %3528
      %vm3530 = vcmp.eq.f32.partialorder %v3426, %v3482
      %vm3531 = vcmp.eq.f32.partialorder %v3427, %v3483
      %vm3532 = vcmp.eq.f32.partialorder %v3428, %v3484
      %vm3533 = vcmp.eq.f32.partialorder %v3429, %v3485
      %vm3534 = vcmp.eq.f32.partialorder %v3430, %v3486
      %vm3535 = vcmp.eq.f32.partialorder %v3431, %v3487
      %vm3536 = vcmp.eq.f32.partialorder %v3432, %v3488
      %vm3537 = vcmp.eq.f32.partialorder %v3433, %v3489
      %v3538 = vsel %vm3530, %v489, 1e+09
      %v3539 = vsel %vm3531, %v489, 1e+09
      %v3540 = vsel %vm3532, %v489, 1e+09
      %v3541 = vsel %vm3533, %v489, 1e+09
      %v3542 = vsel %vm3534, %v489, 1e+09
      %v3543 = vsel %vm3535, %v489, 1e+09
      %v3544 = vsel %vm3536, %v489, 1e+09
      %v3545 = vsel %vm3537, %v489, 1e+09
      %v3546 = vsel %vm531, %v3538, inf
      %3547 = vmin.xlane.f32.xlu0 %v3546
      %v3548 = vpop.xlane.xlu0 %3547
      %v3549 = vsel %vm531, %v3539, inf
      %3550 = vmin.xlane.f32.xlu0 %v3549
      %v3551 = vpop.xlane.xlu0 %3550
      %v3552 = vsel %vm531, %v3540, inf
      %3553 = vmin.xlane.f32.xlu0 %v3552
      %v3554 = vpop.xlane.xlu0 %3553
      %v3555 = vsel %vm531, %v3541, inf
      %3556 = vmin.xlane.f32.xlu0 %v3555
      %v3557 = vpop.xlane.xlu0 %3556
      %v3558 = vsel %vm531, %v3542, inf
      %3559 = vmin.xlane.f32.xlu0 %v3558
      %v3560 = vpop.xlane.xlu0 %3559
      %v3561 = vsel %vm531, %v3543, inf
      %3562 = vmin.xlane.f32.xlu0 %v3561
      %v3563 = vpop.xlane.xlu0 %3562
      %v3564 = vsel %vm531, %v3544, inf
      %3565 = vmin.xlane.f32.xlu0 %v3564
      %v3566 = vpop.xlane.xlu0 %3565
      %v3567 = vsel %vm531, %v3545, inf
      %3568 = vmin.xlane.f32.xlu0 %v3567
      %v3569 = vpop.xlane.xlu0 %3568
      %v3570 = vmin.f32 %v3508, %v3548
      %v3571 = vmin.f32 %v3511, %v3551
      %v3572 = vmin.f32 %v3514, %v3554
      %v3573 = vmin.f32 %v3517, %v3557
      %v3574 = vmin.f32 %v3520, %v3560
      %v3575 = vmin.f32 %v3523, %v3563
      %v3576 = vmin.f32 %v3526, %v3566
      %v3577 = vmin.f32 %v3529, %v3569
      %vm3578 = vcmask 121968
      %3579 = vst.msk [vmem:[#allocation2] sm:$0xff] %vm3578, %v3482
      %3580 = vst.msk [vmem:[#allocation2 + $0x8] sm:$0xff] %vm3578, %v3483
      %3581 = vst.msk [vmem:[#allocation2 + $0x10] sm:$0xff] %vm3578, %v3484
      %3582 = vst.msk [vmem:[#allocation2 + $0x18] sm:$0xff] %vm3578, %v3485
      %3583 = vst.msk [vmem:[#allocation2 + $0x20] sm:$0xff] %vm3578, %v3486
      %3584 = vst.msk [vmem:[#allocation2 + $0x28] sm:$0xff] %vm3578, %v3487
      %3585 = vst.msk [vmem:[#allocation2 + $0x30] sm:$0xff] %vm3578, %v3488
      %3586 = vst.msk [vmem:[#allocation2 + $0x38] sm:$0xff] %vm3578, %v3489
      %3587 = vst.msk [vmem:[#allocation3] sm:$0xff] %vm3578, %v3570
      %3588 = vst.msk [vmem:[#allocation3 + $0x8] sm:$0xff] %vm3578, %v3571
      %3589 = vst.msk [vmem:[#allocation3 + $0x10] sm:$0xff] %vm3578, %v3572
      %3590 = vst.msk [vmem:[#allocation3 + $0x18] sm:$0xff] %vm3578, %v3573
      %3591 = vst.msk [vmem:[#allocation3 + $0x20] sm:$0xff] %vm3578, %v3574
      %3592 = vst.msk [vmem:[#allocation3 + $0x28] sm:$0xff] %vm3578, %v3575
      %3593 = vst.msk [vmem:[#allocation3 + $0x30] sm:$0xff] %vm3578, %v3576
      %3594 = vst.msk [vmem:[#allocation3 + $0x38] sm:$0xff] %vm3578, %v3577
      %vm3595 = vcmp.eq.f32.partialorder %v498, %v3570
      %vm3596 = vcmp.eq.f32.partialorder %v499, %v3571
      %vm3597 = vcmp.eq.f32.partialorder %v500, %v3572
      %vm3598 = vcmp.eq.f32.partialorder %v501, %v3573
      %vm3599 = vcmp.eq.f32.partialorder %v502, %v3574
      %vm3600 = vcmp.eq.f32.partialorder %v503, %v3575
      %vm3601 = vcmp.eq.f32.partialorder %v504, %v3576
      %vm3602 = vcmp.eq.f32.partialorder %v505, %v3577
      %vm3603 = vmand %vm3490, %vm3595
      %vm3604 = vmand %vm3491, %vm3596
      %vm3605 = vmand %vm3492, %vm3597
      %vm3606 = vmand %vm3493, %vm3598
      %vm3607 = vmand %vm3494, %vm3599
      %vm3608 = vmand %vm3495, %vm3600
      %vm3609 = vmand %vm3496, %vm3601
      %vm3610 = vmand %vm3497, %vm3602
      %v3611 = vsel %vm3603, inf, %v3402
      %v3612 = vsel %vm3604, inf, %v3403
      %v3613 = vsel %vm3605, inf, %v3404
      %v3614 = vsel %vm3606, inf, %v3405
      %v3615 = vsel %vm3607, inf, %v3406
      %v3616 = vsel %vm3608, inf, %v3407
      %v3617 = vsel %vm3609, inf, %v3408
      %v3618 = vsel %vm3610, inf, %v3409
      %vm3619 = vcmp.eq.f32.partialorder %v489, %v3570
      %vm3620 = vcmp.eq.f32.partialorder %v489, %v3571
      %vm3621 = vcmp.eq.f32.partialorder %v489, %v3572
      %vm3622 = vcmp.eq.f32.partialorder %v489, %v3573
      %vm3623 = vcmp.eq.f32.partialorder %v489, %v3574
      %vm3624 = vcmp.eq.f32.partialorder %v489, %v3575
      %vm3625 = vcmp.eq.f32.partialorder %v489, %v3576
      %vm3626 = vcmp.eq.f32.partialorder %v489, %v3577
      %vm3627 = vmand %vm3530, %vm3619
      %vm3628 = vmand %vm3531, %vm3620
      %vm3629 = vmand %vm3532, %vm3621
      %vm3630 = vmand %vm3533, %vm3622
      %vm3631 = vmand %vm3534, %vm3623
      %vm3632 = vmand %vm3535, %vm3624
      %vm3633 = vmand %vm3536, %vm3625
      %vm3634 = vmand %vm3537, %vm3626
      %v3635 = vsel %vm3627, inf, %v3426
      %v3636 = vsel %vm3628, inf, %v3427
      %v3637 = vsel %vm3629, inf, %v3428
      %v3638 = vsel %vm3630, inf, %v3429
      %v3639 = vsel %vm3631, inf, %v3430
      %v3640 = vsel %vm3632, inf, %v3431
      %v3641 = vsel %vm3633, inf, %v3432
      %v3642 = vsel %vm3634, inf, %v3433
      %v3643 = vsel %vm506, %v3611, inf
      %3644 = vmin.xlane.f32.xlu0 %v3643
      %v3645 = vpop.xlane.xlu0 %3644
      %v3646 = vsel %vm506, %v3612, inf
      %3647 = vmin.xlane.f32.xlu0 %v3646
      %v3648 = vpop.xlane.xlu0 %3647
      %v3649 = vsel %vm506, %v3613, inf
      %3650 = vmin.xlane.f32.xlu0 %v3649
      %v3651 = vpop.xlane.xlu0 %3650
      %v3652 = vsel %vm506, %v3614, inf
      %3653 = vmin.xlane.f32.xlu0 %v3652
      %v3654 = vpop.xlane.xlu0 %3653
      %v3655 = vsel %vm506, %v3615, inf
      %3656 = vmin.xlane.f32.xlu0 %v3655
      %v3657 = vpop.xlane.xlu0 %3656
      %v3658 = vsel %vm506, %v3616, inf
      %3659 = vmin.xlane.f32.xlu0 %v3658
      %v3660 = vpop.xlane.xlu0 %3659
      %v3661 = vsel %vm506, %v3617, inf
      %3662 = vmin.xlane.f32.xlu0 %v3661
      %v3663 = vpop.xlane.xlu0 %3662
      %v3664 = vsel %vm506, %v3618, inf
      %3665 = vmin.xlane.f32.xlu0 %v3664
      %v3666 = vpop.xlane.xlu0 %3665
      %v3667 = vsel %vm531, %v3635, inf
      %3668 = vmin.xlane.f32.xlu0 %v3667
      %v3669 = vpop.xlane.xlu0 %3668
      %v3670 = vsel %vm531, %v3636, inf
      %3671 = vmin.xlane.f32.xlu0 %v3670
      %v3672 = vpop.xlane.xlu0 %3671
      %v3673 = vsel %vm531, %v3637, inf
      %3674 = vmin.xlane.f32.xlu0 %v3673
      %v3675 = vpop.xlane.xlu0 %3674
      %v3676 = vsel %vm531, %v3638, inf
      %3677 = vmin.xlane.f32.xlu0 %v3676
      %v3678 = vpop.xlane.xlu0 %3677
      %v3679 = vsel %vm531, %v3639, inf
      %3680 = vmin.xlane.f32.xlu0 %v3679
      %v3681 = vpop.xlane.xlu0 %3680
      %v3682 = vsel %vm531, %v3640, inf
      %3683 = vmin.xlane.f32.xlu0 %v3682
      %v3684 = vpop.xlane.xlu0 %3683
      %v3685 = vsel %vm531, %v3641, inf
      %3686 = vmin.xlane.f32.xlu0 %v3685
      %v3687 = vpop.xlane.xlu0 %3686
      %v3688 = vsel %vm531, %v3642, inf
      %3689 = vmin.xlane.f32.xlu0 %v3688
      %v3690 = vpop.xlane.xlu0 %3689
      %v3691 = vmin.f32 %v3645, %v3669
      %v3692 = vmin.f32 %v3648, %v3672
      %v3693 = vmin.f32 %v3651, %v3675
      %v3694 = vmin.f32 %v3654, %v3678
      %v3695 = vmin.f32 %v3657, %v3681
      %v3696 = vmin.f32 %v3660, %v3684
      %v3697 = vmin.f32 %v3663, %v3687
      %v3698 = vmin.f32 %v3666, %v3690
      %vm3699 = vcmp.eq.f32.partialorder %v3611, %v3691
      %vm3700 = vcmp.eq.f32.partialorder %v3612, %v3692
      %vm3701 = vcmp.eq.f32.partialorder %v3613, %v3693
      %vm3702 = vcmp.eq.f32.partialorder %v3614, %v3694
      %vm3703 = vcmp.eq.f32.partialorder %v3615, %v3695
      %vm3704 = vcmp.eq.f32.partialorder %v3616, %v3696
      %vm3705 = vcmp.eq.f32.partialorder %v3617, %v3697
      %vm3706 = vcmp.eq.f32.partialorder %v3618, %v3698
      %v3707 = vsel %vm3699, %v498, 1e+09
      %v3708 = vsel %vm3700, %v499, 1e+09
      %v3709 = vsel %vm3701, %v500, 1e+09
      %v3710 = vsel %vm3702, %v501, 1e+09
      %v3711 = vsel %vm3703, %v502, 1e+09
      %v3712 = vsel %vm3704, %v503, 1e+09
      %v3713 = vsel %vm3705, %v504, 1e+09
      %v3714 = vsel %vm3706, %v505, 1e+09
      %v3715 = vsel %vm506, %v3707, inf
      %3716 = vmin.xlane.f32.xlu0 %v3715
      %v3717 = vpop.xlane.xlu0 %3716
      %v3718 = vsel %vm506, %v3708, inf
      %3719 = vmin.xlane.f32.xlu0 %v3718
      %v3720 = vpop.xlane.xlu0 %3719
      %v3721 = vsel %vm506, %v3709, inf
      %3722 = vmin.xlane.f32.xlu0 %v3721
      %v3723 = vpop.xlane.xlu0 %3722
      %v3724 = vsel %vm506, %v3710, inf
      %3725 = vmin.xlane.f32.xlu0 %v3724
      %v3726 = vpop.xlane.xlu0 %3725
      %v3727 = vsel %vm506, %v3711, inf
      %3728 = vmin.xlane.f32.xlu0 %v3727
      %v3729 = vpop.xlane.xlu0 %3728
      %v3730 = vsel %vm506, %v3712, inf
      %3731 = vmin.xlane.f32.xlu0 %v3730
      %v3732 = vpop.xlane.xlu0 %3731
      %v3733 = vsel %vm506, %v3713, inf
      %3734 = vmin.xlane.f32.xlu0 %v3733
      %v3735 = vpop.xlane.xlu0 %3734
      %v3736 = vsel %vm506, %v3714, inf
      %3737 = vmin.xlane.f32.xlu0 %v3736
      %v3738 = vpop.xlane.xlu0 %3737
      %vm3739 = vcmp.eq.f32.partialorder %v3635, %v3691
      %vm3740 = vcmp.eq.f32.partialorder %v3636, %v3692
      %vm3741 = vcmp.eq.f32.partialorder %v3637, %v3693
      %vm3742 = vcmp.eq.f32.partialorder %v3638, %v3694
      %vm3743 = vcmp.eq.f32.partialorder %v3639, %v3695
      %vm3744 = vcmp.eq.f32.partialorder %v3640, %v3696
      %vm3745 = vcmp.eq.f32.partialorder %v3641, %v3697
      %vm3746 = vcmp.eq.f32.partialorder %v3642, %v3698
      %v3747 = vsel %vm3739, %v489, 1e+09
      %v3748 = vsel %vm3740, %v489, 1e+09
      %v3749 = vsel %vm3741, %v489, 1e+09
      %v3750 = vsel %vm3742, %v489, 1e+09
      %v3751 = vsel %vm3743, %v489, 1e+09
      %v3752 = vsel %vm3744, %v489, 1e+09
      %v3753 = vsel %vm3745, %v489, 1e+09
      %v3754 = vsel %vm3746, %v489, 1e+09
      %v3755 = vsel %vm531, %v3747, inf
      %3756 = vmin.xlane.f32.xlu0 %v3755
      %v3757 = vpop.xlane.xlu0 %3756
      %v3758 = vsel %vm531, %v3748, inf
      %3759 = vmin.xlane.f32.xlu0 %v3758
      %v3760 = vpop.xlane.xlu0 %3759
      %v3761 = vsel %vm531, %v3749, inf
      %3762 = vmin.xlane.f32.xlu0 %v3761
      %v3763 = vpop.xlane.xlu0 %3762
      %v3764 = vsel %vm531, %v3750, inf
      %3765 = vmin.xlane.f32.xlu0 %v3764
      %v3766 = vpop.xlane.xlu0 %3765
      %v3767 = vsel %vm531, %v3751, inf
      %3768 = vmin.xlane.f32.xlu0 %v3767
      %v3769 = vpop.xlane.xlu0 %3768
      %v3770 = vsel %vm531, %v3752, inf
      %3771 = vmin.xlane.f32.xlu0 %v3770
      %v3772 = vpop.xlane.xlu0 %3771
      %v3773 = vsel %vm531, %v3753, inf
      %3774 = vmin.xlane.f32.xlu0 %v3773
      %v3775 = vpop.xlane.xlu0 %3774
      %v3776 = vsel %vm531, %v3754, inf
      %3777 = vmin.xlane.f32.xlu0 %v3776
      %v3778 = vpop.xlane.xlu0 %3777
      %v3779 = vmin.f32 %v3717, %v3757
      %v3780 = vmin.f32 %v3720, %v3760
      %v3781 = vmin.f32 %v3723, %v3763
      %v3782 = vmin.f32 %v3726, %v3766
      %v3783 = vmin.f32 %v3729, %v3769
      %v3784 = vmin.f32 %v3732, %v3772
      %v3785 = vmin.f32 %v3735, %v3775
      %v3786 = vmin.f32 %v3738, %v3778
      %vm3787 = vcmask 130168
      %3788 = vst.msk [vmem:[#allocation2] sm:$0xff] %vm3787, %v3691
      %3789 = vst.msk [vmem:[#allocation2 + $0x8] sm:$0xff] %vm3787, %v3692
      %3790 = vst.msk [vmem:[#allocation2 + $0x10] sm:$0xff] %vm3787, %v3693
      %3791 = vst.msk [vmem:[#allocation2 + $0x18] sm:$0xff] %vm3787, %v3694
      %3792 = vst.msk [vmem:[#allocation2 + $0x20] sm:$0xff] %vm3787, %v3695
      %3793 = vst.msk [vmem:[#allocation2 + $0x28] sm:$0xff] %vm3787, %v3696
      %3794 = vst.msk [vmem:[#allocation2 + $0x30] sm:$0xff] %vm3787, %v3697
      %3795 = vst.msk [vmem:[#allocation2 + $0x38] sm:$0xff] %vm3787, %v3698
      %3796 = vst.msk [vmem:[#allocation3] sm:$0xff] %vm3787, %v3779
      %3797 = vst.msk [vmem:[#allocation3 + $0x8] sm:$0xff] %vm3787, %v3780
      %3798 = vst.msk [vmem:[#allocation3 + $0x10] sm:$0xff] %vm3787, %v3781
      %3799 = vst.msk [vmem:[#allocation3 + $0x18] sm:$0xff] %vm3787, %v3782
      %3800 = vst.msk [vmem:[#allocation3 + $0x20] sm:$0xff] %vm3787, %v3783
      %3801 = vst.msk [vmem:[#allocation3 + $0x28] sm:$0xff] %vm3787, %v3784
      %3802 = vst.msk [vmem:[#allocation3 + $0x30] sm:$0xff] %vm3787, %v3785
      %3803 = vst.msk [vmem:[#allocation3 + $0x38] sm:$0xff] %vm3787, %v3786
      // Predicated region
      $region37: #{tpu_custom_call.1} parent=31 // pred_check
        %p3804 = pneg %p278
      $region38: #{tpu_custom_call.1} parent=31 // pred_check_branch
        %3806 = sbr.rel (%p3804) target = $region40
      $region39: #{tpu_custom_call.1} parent=31 // pred_region
        %v3807 = vld [vmem:[#allocation3] sm:$0xff]
        %v3808 = vld [vmem:[#allocation3 + $0x8] sm:$0xff]
        %v3809 = vld [vmem:[#allocation3 + $0x10] sm:$0xff]
        %v3810 = vld [vmem:[#allocation3 + $0x18] sm:$0xff]
        %v3811 = vld [vmem:[#allocation3 + $0x20] sm:$0xff]
        %v3812 = vld [vmem:[#allocation3 + $0x28] sm:$0xff]
        %v3813 = vld [vmem:[#allocation3 + $0x30] sm:$0xff]
        %v3814 = vld [vmem:[#allocation3 + $0x38] sm:$0xff]
        %v3815 = vcvt.f32.s32.to.zero.pseudo %v3807
        %v3816 = vcvt.f32.s32.to.zero.pseudo %v3808
        %v3817 = vcvt.f32.s32.to.zero.pseudo %v3809
        %v3818 = vcvt.f32.s32.to.zero.pseudo %v3810
        %v3819 = vcvt.f32.s32.to.zero.pseudo %v3811
        %v3820 = vcvt.f32.s32.to.zero.pseudo %v3812
        %v3821 = vcvt.f32.s32.to.zero.pseudo %v3813
        %v3822 = vcvt.f32.s32.to.zero.pseudo %v3814
        %3823 = vst.msk [vmem:[%s276] sm:$0xff] %vm506, %v3815
        %3824 = vst.msk [vmem:[%s276 + $0x8] sm:$0xff] %vm506, %v3816
        %3825 = vst.msk [vmem:[%s276 + $0x10] sm:$0xff] %vm506, %v3817
        %3826 = vst.msk [vmem:[%s276 + $0x18] sm:$0xff] %vm506, %v3818
        %3827 = vst.msk [vmem:[%s276 + $0x20] sm:$0xff] %vm506, %v3819
        %3828 = vst.msk [vmem:[%s276 + $0x28] sm:$0xff] %vm506, %v3820
        %3829 = vst.msk [vmem:[%s276 + $0x30] sm:$0xff] %vm506, %v3821
        %3830 = vst.msk [vmem:[%s276 + $0x38] sm:$0xff] %vm506, %v3822
      $region40: #{tpu_custom_call.1} parent=31 // pred_fallthru
        _
      %s3831 = smul.u32 8, %s20
      %p3832 = scmp.lt.s32.totalorder %s19, 1
      %s3833 = scalar_select %p3832, %s19, 1
      %p3834 = scmp.lt.s32.totalorder %s3831, 7
      %s3835 = scalar_select %p3834, %s3831, 7
      %s3836 = smul.addr %s3833, 8
      %s3837 = sadd.s32 %s3835, %s3836
      %s3838 = smul.addr %s3837, 8
      %s3839 = scalar_lea.vmem %s3, %s3838
      // Predicated region
      $region41: #{tpu_custom_call.1} parent=31 // pred_check
        %p3840 = pneg %p137
      $region42: #{tpu_custom_call.1} parent=31 // pred_check_branch
        %3842 = sbr.rel (%p3840) target = $region44
      $region43: #{tpu_custom_call.1} parent=31 // pred_region
        %s3843 = smul.u32 8, %s20
      $region44: #{tpu_custom_call.1} parent=31 // pred_fallthru
        _
    $region32: #{tpu_custom_call.1} parent=5 // pred_fallthru
      _
    %p3844 = scmp.le.s32.totalorder 2, %s9
    // Predicated region
    $region45: #{tpu_custom_call.1} parent=5 // pred_check
      %p3845 = pneg %p3844
    $region46: #{tpu_custom_call.1} parent=5 // pred_check_branch
      %3847 = sbr.rel (%p3845) target = $region48
    $region47: #{tpu_custom_call.1} parent=5 // pred_region
      %s3848 = ssub.s32 %s9, 2
      // Predicated region
      $region49: #{tpu_custom_call.1} parent=47 // pred_check
        %p3849 = pneg %p143
      $region50: #{tpu_custom_call.1} parent=47 // pred_check_branch
        %3851 = sbr.rel (%p3849) target = $region52
      $region51: #{tpu_custom_call.1} parent=47 // pred_region
        %s3852 = smul.u32 8, %s23
        %p3853 = scmp.lt.s32.totalorder %s22, 1
        %s3854 = scalar_select %p3853, %s22, 1
        %p3855 = scmp.lt.s32.totalorder %s3852, 7
        %s3856 = scalar_select %p3855, %s3852, 7
        %s3857 = smul.addr %s3854, 8
        %s3858 = sadd.s32 %s3856, %s3857
        %s3859 = smul.addr %s3858, 8
        %s3860 = scalar_lea.vmem %s3, %s3859
      $region52: #{tpu_custom_call.1} parent=47 // pred_fallthru
        _
    $region48: #{tpu_custom_call.1} parent=5 // pred_fallthru
      _
  $region6: #{tpu_custom_call.1} parent=0 // loop_footer
    %s13 = sadd.s32 1, %s9
  $region7: #{tpu_custom_call.1} parent=0 // loop_footer_branch
    %8 = sbr.rel target = $region3
  $region8: #{tpu_custom_call.1} parent=0 // loop_exit
    _

</llo_original>
